<compile_context>
chip_gen: v5e
topology: v5e:2x2
jax: 0.10.0
libtpu: 0.0.40
codegen_flags: <defaults>
</compile_context>

<pallas_src>
import functools

import jax
import jax.numpy as jnp
from jax.experimental import pallas as pl
from jax.experimental.pallas import tpu as pltpu


def _swap_leading(x):
    """(A, B, D) -> (B, A, D), lane-layout aware when pltpu.einshape is available."""
    if hasattr(pltpu, "einshape"):
        return pltpu.einshape("abd->bad", x)
    return jnp.swapaxes(x, 0, 1)


def _cr_attention_kernel(q_ref, kv_ref, wq_ref, wkv_ref, wp_ref, bp_ref, o_ref,
                         *, num_heads, head_dim, scale):
    bt, tn, dim = q_ref.shape
    _, nk, _ = kv_ref.shape
    h, d = num_heads, head_dim
    c = h * d
    in_dtype = q_ref.dtype
    rq = bt * tn            # query rows in this block
    rk = bt * nk            # key/value rows in this block

    q2 = q_ref[...].reshape(rq, dim)
    kv2 = kv_ref[...].reshape(rk, dim)

    # Fused projections on the MXU (native-dtype operands, f32 accumulation).
    # The softmax scale is folded into Q once, right after its projection.
    qp = (jnp.dot(q2, wq_ref[...], preferred_element_type=jnp.float32)
          * scale).astype(in_dtype)                                      # (rq, C)
    kvp = jnp.dot(kv2, wkv_ref[...],
                  preferred_element_type=jnp.float32).astype(in_dtype)   # (rk, 2C)

    # Single up-front relayout to head-major instead of 2-3 lane slices per head:
    #   (rows, H, D) -> (H, rows, D) -> (H*bt, n, D); leading dim = (head, batch).
    # The (H, bt*n, D) -> (H*bt, n, D) reshape is contiguity-preserving.
    q_hm = _swap_leading(qp.reshape(rq, h, d)).reshape(h * bt, tn, d)
    kv_hm = _swap_leading(kvp.reshape(rk, 2 * h, d)).reshape(2 * h * bt, nk, d)
    k_hm = kv_hm[:h * bt]          # leading-dim (major) slices: free
    v_hm = kv_hm[h * bt:]

    # Batched attention over the (head, batch) leading dim; softmax stats in f32.
    s = jnp.einsum("gnd,gkd->gnk", q_hm, k_hm,
                   preferred_element_type=jnp.float32)                   # (H*bt, tn, NK)
    m = jnp.max(s, axis=-1, keepdims=True)
    e = jnp.exp(s - m)                                                   # <= 1, safe cast
    denom = jnp.sum(e, axis=-1, keepdims=True)

    # Un-normalized PV matmul first, then normalize the (tn, D) result rather than
    # the (tn, NK) probabilities (~NK/D fewer VALU multiplies / stores).
    o = jnp.einsum("gnk,gkd->gnd", e.astype(in_dtype), v_hm,
                   preferred_element_type=jnp.float32)                   # (H*bt, tn, D)
    o = o * pl.reciprocal(denom, approx=True)

    # Pack heads back along the lane dim and run ONE full-K (rows, C) @ (C, C)
    # output projection (instead of H small K=head_dim matmuls accumulated in f32).
    o_rows = _swap_leading(o.reshape(h, rq, d)).reshape(rq, c)
    out = jnp.dot(o_rows.astype(in_dtype), wp_ref[...],
                  preferred_element_type=jnp.float32)
    out = out + bp_ref[...].astype(jnp.float32)

    # TODO(synk): for out_dim < 128, fold tn into the lane dim here (and reshape in
    # the wrapper) so the final store is lane-dense instead of masked.
    o_ref[...] = out.reshape(bt, tn, c).astype(o_ref.dtype)


def _vmem_limit_bytes():
    """Per-generation VMEM limit: physical minus >=16 MiB headroom, capped at 100 MiB."""
    try:
        phys = pltpu.get_tpu_info().vmem_capacity_bytes
    except Exception:
        phys = 64 * 1024 * 1024       # be conservative: assume the smallest (v7x)
    return max(32 * 1024 * 1024, min(phys - 16 * 1024 * 1024, 100 * 1024 * 1024))


def _choose_tiles(B, N, NK, dim, C, H, itemsize, budget):
    """Pick (bt, tn): batch fold and query tile, sized against the VMEM budget."""

    def divisors(n):
        return [x for x in range(1, n + 1) if n % x == 0]

    def footprint(bt, tn):
        rq, rk = bt * tn, bt * NK
        fp = 2 * (rq * dim + rk * dim + rq * C) * itemsize      # double-buffered q/kv/out blocks
        fp += (dim * C + dim * 2 * C + C * C + C) * itemsize    # weights (single-buffered)
        fp += (rq * C + rk * 2 * C) * (4 + 2 * itemsize)        # f32 proj outputs + casts + head-major copies
        fp += 2 * H * bt * tn * NK * 4                          # f32 logits + exp
        fp += (2 * 4 + itemsize) * rq * C                       # PV result, proj result, packed heads
        return fp

    cands = [(bt, tn) for bt in divisors(B) for tn in divisors(N)]
    feasible = [cd for cd in cands if footprint(*cd) <= budget]

    def score(cd):
        bt, tn = cd
        rows = bt * tn
        steps = (B // bt) * (N // tn)
        return (min(rows, 256),        # MXU M occupancy (aim for ~256 rows / step)
                tn % 8 == 0 or tn == N,  # sublane-aligned (bt, tn, .) <-> (rows, .) merges
                steps >= 2,            # keep >=2 parallel grid steps (v7x has 2 TCs)
                tn,                    # bigger query tile -> fewer KV re-projections
                -rows)                 # ...but do not grow past the target needlessly

    if feasible:
        return max(feasible, key=score)
    return min(cands, key=lambda cd: footprint(*cd))


def prepare_cr_attention_params(wq, wk, wv, wp, bp):
    """One-time weight preprocessing (do this at module init, not per forward call)."""
    wkv = jnp.concatenate([wk, wv], axis=1)        # (dim, 2C): [K heads | V heads]
    return wq, wkv, wp, bp.reshape(1, -1)


def _weight_spec(shape, mode):
    if mode is None:
        return pl.BlockSpec(shape, lambda b, i: (0, 0))
    return pl.BlockSpec(shape, lambda b, i: (0, 0), pipeline_mode=mode)


def cr_attention_prepared(q, kv, wq, wkv, wp, bp2, *, num_heads, qk_scale=None):
    """Pallas CRAttention.forward(q, v) with pre-fused weights (see prepare_*)."""
    B, N, dim = q.shape
    _, NK, _ = kv.shape
    C = wq.shape[1]
    assert C % num_heads == 0, "out_dim must be divisible by num_heads"
    D = C // num_heads
    scale = float(qk_scale) if qk_scale is not None else float(D) ** -0.5

    itemsize = jnp.dtype(q.dtype).itemsize
    vmem_limit = _vmem_limit_bytes()
    bt, tn = _choose_tiles(B, N, NK, dim, C, num_heads, itemsize,
                           budget=int(vmem_limit * 0.8))

    kernel = functools.partial(_cr_attention_kernel, num_heads=num_heads,
                               head_dim=D, scale=scale)

    def run(weight_mode):
        grid_spec = pltpu.PrefetchScalarGridSpec(
            num_scalar_prefetch=0,
            grid=(B // bt, N // tn),
            in_specs=[
                pl.BlockSpec((bt, tn, dim), lambda b, i: (b, i, 0)),
                # Full-NK KV block per batch tile.
                # TODO(synk): stream NK flash-style (online softmax with pl.when
                # init/finalize) for very long NK on v7x, and cache the projected
                # K/V across N-tiles in VMEM scratch to avoid re-projection.
                pl.BlockSpec((bt, NK, dim), lambda b, i: (b, 0, 0)),
                _weight_spec((dim, C), weight_mode),
                _weight_spec((dim, 2 * C), weight_mode),
                _weight_spec((C, C), weight_mode),
                _weight_spec((1, C), weight_mode),
            ],
            out_specs=pl.BlockSpec((bt, tn, C), lambda b, i: (b, i, 0)),
        )
        return pl.pallas_call(
            kernel,
            out_shape=jax.ShapeDtypeStruct((B, N, C), q.dtype),
            grid_spec=grid_spec,
            compiler_params=pltpu.CompilerParams(
                dimension_semantics=("parallel", "parallel"),
                vmem_limit_bytes=vmem_limit),
        )(q, kv, wq, wkv, wp, bp2)

    try:
        # Weight blocks have constant index maps -> single-buffer them (frees VMEM,
        # e.g. ~8 MiB for a dim=C=1024 bf16 wkv) so the data tiles can grow.
        return run(pl.Buffered(1))
    except Exception:
        # Fallback for builds where pipeline_mode is not supported on pallas_call.
        return run(None)


def cr_attention(q, kv, wq, wk, wv, wp, bp, *, num_heads, qk_scale=None):
    """Convenience wrapper doing the (ideally init-time) weight prep per call."""
    params = prepare_cr_attention_params(wq, wk, wv, wp, bp)
    return cr_attention_prepared(q, kv, *params, num_heads=num_heads,
                                 qk_scale=qk_scale)


def cr_attention_ref(q, kv, wq, wk, wv, wp, bp, *, num_heads, qk_scale=None):
    """Pure-JAX reference mirroring the PyTorch forward."""
    B, N, dim = q.shape
    NK = kv.shape[1]
    C = wq.shape[1]
    D = C // num_heads
    scale = qk_scale if qk_scale is not None else D ** (-0.5)

    qf = q.astype(jnp.float32)
    kvf = kv.astype(jnp.float32)

    qp = (qf @ wq.astype(jnp.float32)).reshape(B, N, num_heads, D).transpose(0, 2, 1, 3)
    kp = (kvf @ wk.astype(jnp.float32)).reshape(B, NK, num_heads, D).transpose(0, 2, 1, 3)
    vp = (kvf @ wv.astype(jnp.float32)).reshape(B, NK, num_heads, D).transpose(0, 2, 1, 3)

    at = jnp.einsum("bhnd,bhkd->bhnk", qp, kp) * scale
    at = jax.nn.softmax(at, axis=-1)
    x = jnp.einsum("bhnk,bhkd->bhnd", at, vp).transpose(0, 2, 1, 3).reshape(B, N, C)
    x = x @ wp.astype(jnp.float32) + bp.astype(jnp.float32)
    return x.astype(q.dtype)


if __name__ == "__main__":
    # Small shapes consistent with the module.
    B, N, NK = 2, 8, 8
    dim, out_dim, num_heads = 32, 32, 4     # head_dim = 8

    key = jax.random.PRNGKey(0)
    k_q, k_kv, k_wq, k_wk, k_wv, k_wp, k_bp = jax.random.split(key, 7)

    q = jax.random.normal(k_q, (B, N, dim), dtype=jnp.float32)
    kv = jax.random.normal(k_kv, (B, NK, dim), dtype=jnp.float32)

    # Deterministic synthetic parameters (qkv_bias=False -> no bias on q/k/v maps).
    wq = jax.random.normal(k_wq, (dim, out_dim), dtype=jnp.float32) * 0.05
    wk = jax.random.normal(k_wk, (dim, out_dim), dtype=jnp.float32) * 0.05
    wv = jax.random.normal(k_wv, (dim, out_dim), dtype=jnp.float32) * 0.05
    wp = jax.random.normal(k_wp, (out_dim, out_dim), dtype=jnp.float32) * 0.05
    bp = jax.random.normal(k_bp, (out_dim,), dtype=jnp.float32) * 0.05

    # Weight prep is done once ("module init"), then the kernel is called.
    params = prepare_cr_attention_params(wq, wk, wv, wp, bp)
    out = cr_attention_prepared(q, kv, *params, num_heads=num_heads)
    out = jax.block_until_ready(out)

    ref = cr_attention_ref(q, kv, wq, wk, wv, wp, bp, num_heads=num_heads)
    assert out.shape == (B, N, out_dim)
    # approx reciprocal in the softmax introduces tiny drift vs. the f32 reference.
    assert jnp.allclose(out, ref, atol=5e-3, rtol=5e-3), "mismatch vs reference"

    print("KERNEL_OK")
</pallas_src>

<mosaic_0001>
module attributes {stable_mosaic.version = 11 : i64} {
  func.func @_cr_attention_kernel(%arg0: i32, %arg1: i32, %arg2: memref<2x8x32xf32, #tpu.memory_space<vmem>>, %arg3: memref<2x8x32xf32, #tpu.memory_space<vmem>>, %arg4: memref<32x32xf32, #tpu.memory_space<vmem>>, %arg5: memref<32x64xf32, #tpu.memory_space<vmem>>, %arg6: memref<32x32xf32, #tpu.memory_space<vmem>>, %arg7: memref<1x32xf32, #tpu.memory_space<vmem>>, %arg8: memref<2x8x32xf32, #tpu.memory_space<vmem>>) attributes {dimension_semantics = [#tpu.dimension_semantics<parallel>, #tpu.dimension_semantics<parallel>], iteration_bounds = array<i64: 1, 1>, scalar_prefetch = 0 : i64, scratch_operands = 0 : i64, tpu.core_type = #tpu.core_type<tc>, window_params = [{transform_indices = @transform_0, window_bounds = array<i64: 2, 8, 32>}, {transform_indices = @transform_1, window_bounds = array<i64: 2, 8, 32>}, {pipeline_mode = #tpu.pipeline_mode<synchronous>, transform_indices = @transform_2, window_bounds = array<i64: 32, 32>}, {pipeline_mode = #tpu.pipeline_mode<synchronous>, transform_indices = @transform_3, window_bounds = array<i64: 32, 64>}, {pipeline_mode = #tpu.pipeline_mode<synchronous>, transform_indices = @transform_4, window_bounds = array<i64: 32, 32>}, {pipeline_mode = #tpu.pipeline_mode<synchronous>, transform_indices = @transform_5, window_bounds = array<i64: 1, 32>}, {transform_indices = @transform_6, window_bounds = array<i64: 2, 8, 32>}]} {
    %c0 = arith.constant 0 : index
    %c0_0 = arith.constant 0 : index
    %c0_1 = arith.constant 0 : index
    %0 = vector.load %arg2[%c0, %c0_0, %c0_1] : memref<2x8x32xf32, #tpu.memory_space<vmem>>, vector<2x8x32xf32>
    %1 = vector.shape_cast %0 : vector<2x8x32xf32> to vector<16x32xf32>
    %c0_2 = arith.constant 0 : index
    %c0_3 = arith.constant 0 : index
    %c0_4 = arith.constant 0 : index
    %2 = vector.load %arg3[%c0_2, %c0_3, %c0_4] : memref<2x8x32xf32, #tpu.memory_space<vmem>>, vector<2x8x32xf32>
    %3 = vector.shape_cast %2 : vector<2x8x32xf32> to vector<16x32xf32>
    %c0_5 = arith.constant 0 : index
    %c0_6 = arith.constant 0 : index
    %4 = vector.load %arg4[%c0_5, %c0_6] : memref<32x32xf32, #tpu.memory_space<vmem>>, vector<32x32xf32>
    %cst = arith.constant dense<0.000000e+00> : vector<16x32xf32>
    %5 = tpu.matmul %1, %4, %cst {dimension_numbers = #tpu.dot_dimension_numbers<[1], [0], [0], [1], [0, 0, 1, 1], [], []>} : vector<16x32xf32>, vector<32x32xf32>, vector<16x32xf32> -> vector<16x32xf32>
    %cst_7 = arith.constant 0.353553385 : f32
    %6 = vector.broadcast %cst_7 : f32 to vector<16x32xf32>
    %7 = arith.mulf %5, %6 : vector<16x32xf32>
    %c0_8 = arith.constant 0 : index
    %c0_9 = arith.constant 0 : index
    %8 = vector.load %arg5[%c0_8, %c0_9] : memref<32x64xf32, #tpu.memory_space<vmem>>, vector<32x64xf32>
    %cst_10 = arith.constant dense<0.000000e+00> : vector<16x64xf32>
    %9 = tpu.matmul %3, %8, %cst_10 {dimension_numbers = #tpu.dot_dimension_numbers<[1], [0], [0], [1], [0, 0, 1, 1], [], []>} : vector<16x32xf32>, vector<32x64xf32>, vector<16x64xf32> -> vector<16x64xf32>
    %10 = vector.shape_cast %7 : vector<16x32xf32> to vector<16x4x8xf32>
    %11 = tpu.transpose %10, [1, 0, 2] : vector<16x4x8xf32> -> vector<4x16x8xf32>
    %12 = vector.shape_cast %11 : vector<4x16x8xf32> to vector<8x8x8xf32>
    %13 = vector.shape_cast %9 : vector<16x64xf32> to vector<16x8x8xf32>
    %14 = tpu.transpose %13, [1, 0, 2] : vector<16x8x8xf32> -> vector<8x16x8xf32>
    %15 = vector.shape_cast %14 : vector<8x16x8xf32> to vector<16x8x8xf32>
    %16 = vector.extract_strided_slice %15 {offsets = [0, 0, 0], sizes = [8, 8, 8], strides = [1, 1, 1]} : vector<16x8x8xf32> to vector<8x8x8xf32>
    %17 = vector.extract_strided_slice %15 {offsets = [8, 0, 0], sizes = [8, 8, 8], strides = [1, 1, 1]} : vector<16x8x8xf32> to vector<8x8x8xf32>
    "tpu.trace_start"() <{level = 10 : i32, message = "gnd,gkd->gnk"}> : () -> ()
    %cst_11 = arith.constant dense<0.000000e+00> : vector<8x8x8xf32>
    %18 = tpu.matmul %12, %16, %cst_11 {dimension_numbers = #tpu.dot_dimension_numbers<[2], [2], [1], [1], [0, 0, 0, 1, 1, 1], [0], [0]>} : vector<8x8x8xf32>, vector<8x8x8xf32>, vector<8x8x8xf32> -> vector<8x8x8xf32>
    "tpu.trace_stop"() : () -> ()
    %cst_12 = arith.constant dense<0xFF800000> : vector<8x8xf32>
    %19 = vector.multi_reduction <maximumf>, %18, %cst_12 [2] : vector<8x8x8xf32> to vector<8x8xf32>
    %20 = vector.shape_cast %19 : vector<8x8xf32> to vector<8x8x1xf32>
    %21 = vector.broadcast %20 : vector<8x8x1xf32> to vector<8x8x8xf32>
    %22 = arith.subf %18, %21 : vector<8x8x8xf32>
    %23 = math.exp %22 : vector<8x8x8xf32>
    %cst_13 = arith.constant dense<0.000000e+00> : vector<8x8xf32>
    %24 = vector.multi_reduction <add>, %23, %cst_13 [2] : vector<8x8x8xf32> to vector<8x8xf32>
    %25 = vector.shape_cast %24 : vector<8x8xf32> to vector<8x8x1xf32>
    "tpu.trace_start"() <{level = 10 : i32, message = "gnk,gkd->gnd"}> : () -> ()
    %cst_14 = arith.constant dense<0.000000e+00> : vector<8x8x8xf32>
    %26 = tpu.matmul %23, %17, %cst_14 {dimension_numbers = #tpu.dot_dimension_numbers<[2], [1], [1], [2], [0, 0, 0, 1, 1, 2], [0], [0]>} : vector<8x8x8xf32>, vector<8x8x8xf32>, vector<8x8x8xf32> -> vector<8x8x8xf32>
    "tpu.trace_stop"() : () -> ()
    %27 = tpu.reciprocal %25 {approx = true} : vector<8x8x1xf32> -> vector<8x8x1xf32>
    %28 = vector.broadcast %27 : vector<8x8x1xf32> to vector<8x8x8xf32>
    %29 = arith.mulf %26, %28 : vector<8x8x8xf32>
    %30 = vector.shape_cast %29 : vector<8x8x8xf32> to vector<4x16x8xf32>
    %31 = tpu.transpose %30, [1, 0, 2] : vector<4x16x8xf32> -> vector<16x4x8xf32>
    %32 = vector.shape_cast %31 : vector<16x4x8xf32> to vector<16x32xf32>
    %c0_15 = arith.constant 0 : index
    %c0_16 = arith.constant 0 : index
    %33 = vector.load %arg6[%c0_15, %c0_16] : memref<32x32xf32, #tpu.memory_space<vmem>>, vector<32x32xf32>
    %cst_17 = arith.constant dense<0.000000e+00> : vector<16x32xf32>
    %34 = tpu.matmul %32, %33, %cst_17 {dimension_numbers = #tpu.dot_dimension_numbers<[1], [0], [0], [1], [0, 0, 1, 1], [], []>} : vector<16x32xf32>, vector<32x32xf32>, vector<16x32xf32> -> vector<16x32xf32>
    %c0_18 = arith.constant 0 : index
    %c0_19 = arith.constant 0 : index
    %35 = vector.load %arg7[%c0_18, %c0_19] : memref<1x32xf32, #tpu.memory_space<vmem>>, vector<1x32xf32>
    %36 = vector.broadcast %35 : vector<1x32xf32> to vector<16x32xf32>
    %37 = arith.addf %34, %36 : vector<16x32xf32>
    %38 = vector.shape_cast %37 : vector<16x32xf32> to vector<2x8x32xf32>
    %c0_20 = arith.constant 0 : index
    %c0_21 = arith.constant 0 : index
    %c0_22 = arith.constant 0 : index
    %39 = vector.load %arg8[%c0_20, %c0_21, %c0_22] : memref<2x8x32xf32, #tpu.memory_space<vmem>>, vector<2x8x32xf32>
    tpu.vector_store %arg8[%c0_20, %c0_21, %c0_22], %38 {strides = array<i32>} : memref<2x8x32xf32, #tpu.memory_space<vmem>>, vector<2x8x32xf32>,
    return
  }
  func.func @transform_0(%arg0: i32, %arg1: i32) -> (i32, i32, i32) {
    %c0_i32 = arith.constant 0 : i32
    %c0_i32_0 = arith.constant 0 : i32
    return %arg0, %arg1, %c0_i32 : i32, i32, i32
  }
  func.func @transform_1(%arg0: i32, %arg1: i32) -> (i32, i32, i32) {
    %c0_i32 = arith.constant 0 : i32
    %c0_i32_0 = arith.constant 0 : i32
    %c0_i32_1 = arith.constant 0 : i32
    return %arg0, %c0_i32, %c0_i32_0 : i32, i32, i32
  }
  func.func @transform_2(%arg0: i32, %arg1: i32) -> (i32, i32) {
    %c0_i32 = arith.constant 0 : i32
    %c0_i32_0 = arith.constant 0 : i32
    %c0_i32_1 = arith.constant 0 : i32
    return %c0_i32, %c0_i32_0 : i32, i32
  }
  func.func @transform_3(%arg0: i32, %arg1: i32) -> (i32, i32) {
    %c0_i32 = arith.constant 0 : i32
    %c0_i32_0 = arith.constant 0 : i32
    %c0_i32_1 = arith.constant 0 : i32
    return %c0_i32, %c0_i32_0 : i32, i32
  }
  func.func @transform_4(%arg0: i32, %arg1: i32) -> (i32, i32) {
    %c0_i32 = arith.constant 0 : i32
    %c0_i32_0 = arith.constant 0 : i32
    %c0_i32_1 = arith.constant 0 : i32
    return %c0_i32, %c0_i32_0 : i32, i32
  }
  func.func @transform_5(%arg0: i32, %arg1: i32) -> (i32, i32) {
    %c0_i32 = arith.constant 0 : i32
    %c0_i32_0 = arith.constant 0 : i32
    %c0_i32_1 = arith.constant 0 : i32
    return %c0_i32, %c0_i32_0 : i32, i32
  }
  func.func @transform_6(%arg0: i32, %arg1: i32) -> (i32, i32, i32) {
    %c0_i32 = arith.constant 0 : i32
    %c0_i32_0 = arith.constant 0 : i32
    return %arg0, %arg1, %c0_i32 : i32, i32, i32
  }
}

module attributes {stable_mosaic.version = 11 : i64} {
  func.func @_cr_attention_kernel(%arg0: i32, %arg1: i32, %arg2: memref<2x8x32xf32, #tpu.memory_space<vmem>>, %arg3: memref<2x8x32xf32, #tpu.memory_space<vmem>>, %arg4: memref<32x32xf32, #tpu.memory_space<vmem>>, %arg5: memref<32x64xf32, #tpu.memory_space<vmem>>, %arg6: memref<32x32xf32, #tpu.memory_space<vmem>>, %arg7: memref<1x32xf32, #tpu.memory_space<vmem>>, %arg8: memref<2x8x32xf32, #tpu.memory_space<vmem>>) attributes {dimension_semantics = [#tpu.dimension_semantics<parallel>, #tpu.dimension_semantics<parallel>], iteration_bounds = array<i64: 1, 1>, scalar_prefetch = 0 : i64, scratch_operands = 0 : i64, tpu.core_type = #tpu.core_type<tc>, window_params = [{transform_indices = @transform_0, window_bounds = array<i64: 2, 8, 32>}, {transform_indices = @transform_1, window_bounds = array<i64: 2, 8, 32>}, {pipeline_mode = #tpu.pipeline_mode<synchronous>, transform_indices = @transform_2, window_bounds = array<i64: 32, 32>}, {pipeline_mode = #tpu.pipeline_mode<synchronous>, transform_indices = @transform_3, window_bounds = array<i64: 32, 64>}, {pipeline_mode = #tpu.pipeline_mode<synchronous>, transform_indices = @transform_4, window_bounds = array<i64: 32, 32>}, {pipeline_mode = #tpu.pipeline_mode<synchronous>, transform_indices = @transform_5, window_bounds = array<i64: 1, 32>}, {transform_indices = @transform_6, window_bounds = array<i64: 2, 8, 32>}]} {
    %c0 = arith.constant 0 : index
    %c0_0 = arith.constant 0 : index
    %c0_1 = arith.constant 0 : index
    %0 = vector.load %arg2[%c0, %c0_0, %c0_1] : memref<2x8x32xf32, #tpu.memory_space<vmem>>, vector<2x8x32xf32>
    %1 = vector.shape_cast %0 : vector<2x8x32xf32> to vector<16x32xf32>
    %c0_2 = arith.constant 0 : index
    %c0_3 = arith.constant 0 : index
    %c0_4 = arith.constant 0 : index
    %2 = vector.load %arg3[%c0_2, %c0_3, %c0_4] : memref<2x8x32xf32, #tpu.memory_space<vmem>>, vector<2x8x32xf32>
    %3 = vector.shape_cast %2 : vector<2x8x32xf32> to vector<16x32xf32>
    %c0_5 = arith.constant 0 : index
    %c0_6 = arith.constant 0 : index
    %4 = vector.load %arg4[%c0_5, %c0_6] : memref<32x32xf32, #tpu.memory_space<vmem>>, vector<32x32xf32>
    %cst = arith.constant dense<0.000000e+00> : vector<16x32xf32>
    %5 = tpu.matmul %1, %4, %cst {dimension_numbers = #tpu.dot_dimension_numbers<[1], [0], [0], [1], [0, 0, 1, 1], [], []>} : vector<16x32xf32>, vector<32x32xf32>, vector<16x32xf32> -> vector<16x32xf32>
    %cst_7 = arith.constant 0.353553385 : f32
    %6 = vector.broadcast %cst_7 : f32 to vector<16x32xf32>
    %7 = arith.mulf %5, %6 : vector<16x32xf32>
    %c0_8 = arith.constant 0 : index
    %c0_9 = arith.constant 0 : index
    %8 = vector.load %arg5[%c0_8, %c0_9] : memref<32x64xf32, #tpu.memory_space<vmem>>, vector<32x64xf32>
    %cst_10 = arith.constant dense<0.000000e+00> : vector<16x64xf32>
    %9 = tpu.matmul %3, %8, %cst_10 {dimension_numbers = #tpu.dot_dimension_numbers<[1], [0], [0], [1], [0, 0, 1, 1], [], []>} : vector<16x32xf32>, vector<32x64xf32>, vector<16x64xf32> -> vector<16x64xf32>
    %10 = vector.shape_cast %7 : vector<16x32xf32> to vector<16x4x8xf32>
    %11 = tpu.transpose %10, [1, 0, 2] : vector<16x4x8xf32> -> vector<4x16x8xf32>
    %12 = vector.shape_cast %11 : vector<4x16x8xf32> to vector<8x8x8xf32>
    %13 = vector.shape_cast %9 : vector<16x64xf32> to vector<16x8x8xf32>
    %14 = tpu.transpose %13, [1, 0, 2] : vector<16x8x8xf32> -> vector<8x16x8xf32>
    %15 = vector.shape_cast %14 : vector<8x16x8xf32> to vector<16x8x8xf32>
    %16 = vector.extract_strided_slice %15 {offsets = [0, 0, 0], sizes = [8, 8, 8], strides = [1, 1, 1]} : vector<16x8x8xf32> to vector<8x8x8xf32>
    %17 = vector.extract_strided_slice %15 {offsets = [8, 0, 0], sizes = [8, 8, 8], strides = [1, 1, 1]} : vector<16x8x8xf32> to vector<8x8x8xf32>
    "tpu.trace_start"() <{level = 10 : i32, message = "gnd,gkd->gnk"}> : () -> ()
    %cst_11 = arith.constant dense<0.000000e+00> : vector<8x8x8xf32>
    %18 = tpu.matmul %12, %16, %cst_11 {dimension_numbers = #tpu.dot_dimension_numbers<[2], [2], [1], [1], [0, 0, 0, 1, 1, 1], [0], [0]>} : vector<8x8x8xf32>, vector<8x8x8xf32>, vector<8x8x8xf32> -> vector<8x8x8xf32>
    "tpu.trace_stop"() : () -> ()
    %cst_12 = arith.constant dense<0xFF800000> : vector<8x8xf32>
    %19 = vector.multi_reduction <maximumf>, %18, %cst_12 [2] : vector<8x8x8xf32> to vector<8x8xf32>
    %20 = vector.shape_cast %19 : vector<8x8xf32> to vector<8x8x1xf32>
    %21 = vector.broadcast %20 : vector<8x8x1xf32> to vector<8x8x8xf32>
    %22 = arith.subf %18, %21 : vector<8x8x8xf32>
    %23 = math.exp %22 : vector<8x8x8xf32>
    %cst_13 = arith.constant dense<0.000000e+00> : vector<8x8xf32>
    %24 = vector.multi_reduction <add>, %23, %cst_13 [2] : vector<8x8x8xf32> to vector<8x8xf32>
    %25 = vector.shape_cast %24 : vector<8x8xf32> to vector<8x8x1xf32>
    "tpu.trace_start"() <{level = 10 : i32, message = "gnk,gkd->gnd"}> : () -> ()
    %cst_14 = arith.constant dense<0.000000e+00> : vector<8x8x8xf32>
    %26 = tpu.matmul %23, %17, %cst_14 {dimension_numbers = #tpu.dot_dimension_numbers<[2], [1], [1], [2], [0, 0, 0, 1, 1, 2], [0], [0]>} : vector<8x8x8xf32>, vector<8x8x8xf32>, vector<8x8x8xf32> -> vector<8x8x8xf32>
    "tpu.trace_stop"() : () -> ()
    %27 = tpu.reciprocal %25 {approx = true} : vector<8x8x1xf32> -> vector<8x8x1xf32>
    %28 = vector.broadcast %27 : vector<8x8x1xf32> to vector<8x8x8xf32>
    %29 = arith.mulf %26, %28 : vector<8x8x8xf32>
    %30 = vector.shape_cast %29 : vector<8x8x8xf32> to vector<4x16x8xf32>
    %31 = tpu.transpose %30, [1, 0, 2] : vector<4x16x8xf32> -> vector<16x4x8xf32>
    %32 = vector.shape_cast %31 : vector<16x4x8xf32> to vector<16x32xf32>
    %c0_15 = arith.constant 0 : index
    %c0_16 = arith.constant 0 : index
    %33 = vector.load %arg6[%c0_15, %c0_16] : memref<32x32xf32, #tpu.memory_space<vmem>>, vector<32x32xf32>
    %cst_17 = arith.constant dense<0.000000e+00> : vector<16x32xf32>
    %34 = tpu.matmul %32, %33, %cst_17 {dimension_numbers = #tpu.dot_dimension_numbers<[1], [0], [0], [1], [0, 0, 1, 1], [], []>} : vector<16x32xf32>, vector<32x32xf32>, vector<16x32xf32> -> vector<16x32xf32>
    %c0_18 = arith.constant 0 : index
    %c0_19 = arith.constant 0 : index
    %35 = vector.load %arg7[%c0_18, %c0_19] : memref<1x32xf32, #tpu.memory_space<vmem>>, vector<1x32xf32>
    %36 = vector.broadcast %35 : vector<1x32xf32> to vector<16x32xf32>
    %37 = arith.addf %34, %36 : vector<16x32xf32>
    %38 = vector.shape_cast %37 : vector<16x32xf32> to vector<2x8x32xf32>
    %c0_20 = arith.constant 0 : index
    %c0_21 = arith.constant 0 : index
    %c0_22 = arith.constant 0 : index
    %39 = vector.load %arg8[%c0_20, %c0_21, %c0_22] : memref<2x8x32xf32, #tpu.memory_space<vmem>>, vector<2x8x32xf32>
    tpu.vector_store %arg8[%c0_20, %c0_21, %c0_22], %38 {strides = array<i32>} : memref<2x8x32xf32, #tpu.memory_space<vmem>>, vector<2x8x32xf32>,
    return
  }
  func.func @transform_0(%arg0: i32, %arg1: i32) -> (i32, i32, i32) {
    %c0_i32 = arith.constant 0 : i32
    %c0_i32_0 = arith.constant 0 : i32
    return %arg0, %arg1, %c0_i32 : i32, i32, i32
  }
  func.func @transform_1(%arg0: i32, %arg1: i32) -> (i32, i32, i32) {
    %c0_i32 = arith.constant 0 : i32
    %c0_i32_0 = arith.constant 0 : i32
    %c0_i32_1 = arith.constant 0 : i32
    return %arg0, %c0_i32, %c0_i32_0 : i32, i32, i32
  }
  func.func @transform_2(%arg0: i32, %arg1: i32) -> (i32, i32) {
    %c0_i32 = arith.constant 0 : i32
    %c0_i32_0 = arith.constant 0 : i32
    %c0_i32_1 = arith.constant 0 : i32
    return %c0_i32, %c0_i32_0 : i32, i32
  }
  func.func @transform_3(%arg0: i32, %arg1: i32) -> (i32, i32) {
    %c0_i32 = arith.constant 0 : i32
    %c0_i32_0 = arith.constant 0 : i32
    %c0_i32_1 = arith.constant 0 : i32
    return %c0_i32, %c0_i32_0 : i32, i32
  }
  func.func @transform_4(%arg0: i32, %arg1: i32) -> (i32, i32) {
    %c0_i32 = arith.constant 0 : i32
    %c0_i32_0 = arith.constant 0 : i32
    %c0_i32_1 = arith.constant 0 : i32
    return %c0_i32, %c0_i32_0 : i32, i32
  }
  func.func @transform_5(%arg0: i32, %arg1: i32) -> (i32, i32) {
    %c0_i32 = arith.constant 0 : i32
    %c0_i32_0 = arith.constant 0 : i32
    %c0_i32_1 = arith.constant 0 : i32
    return %c0_i32, %c0_i32_0 : i32, i32
  }
  func.func @transform_6(%arg0: i32, %arg1: i32) -> (i32, i32, i32) {
    %c0_i32 = arith.constant 0 : i32
    %c0_i32_0 = arith.constant 0 : i32
    return %arg0, %arg1, %c0_i32 : i32, i32, i32
  }
}

</mosaic_0001>

<llo_original>
// kernel: tpu_custom_call.1
$region0: #{tpu_custom_call.1}
  #allocation0 [shape = 'u32[]', space=smem, size = 0x4, offset = 0x4, fixed_abs, tag = 'smem constant byte address 0x4 - core index']
  #allocation1 [shape = 'u32[72,128]{1,0:T(1,128)}', space=vmem, size = 0x9000, scoped, tag = 'internal scratch']
  %s0 = inlined_call_operand.hbm [shape: f32[2,8,32], index: 0, kind: input, shape index: {}]
  %s1 = inlined_call_operand.hbm [shape: f32[2,8,32], index: 1, kind: input, shape index: {}]
  %s2 = inlined_call_operand.hbm [shape: f32[32,32], index: 2, kind: input, shape index: {}]
  %s3 = inlined_call_operand.hbm [shape: f32[32,64], index: 3, kind: input, shape index: {}]
  %s4 = inlined_call_operand.hbm [shape: f32[32,32], index: 4, kind: input, shape index: {}]
  %s5 = inlined_call_operand.vmem [shape: f32[1,32], index: 5, kind: input, shape index: {}]
  %s6 = inlined_call_operand.hbm [shape: f32[2,8,32], index: 6, kind: output, shape index: {}]
  %s7 = sld [smem:[#allocation0]]
  $region54: #{tpu_custom_call.1} parent=0
    _
  %s9 = ssub.s32 1, %s7
  %s10 = scalar_select 0, %s9, %s7
  $region1: #{tpu_custom_call.1} parent=0
    #allocation2 [shape = 'u8[8192]{0}', space=vmem, size = 0x2000, scoped, tag = 'input window, operand 0, single buffered']
    #allocation3 [shape = 's32[1]{0}', space=sflag, size = 0x4, scoped, tag = 'scoped memory for tpu_custom_call.1']
    #allocation4 [shape = 's32[1]{0}', space=sflag, size = 0x4, scoped, tag = 'scoped memory for tpu_custom_call.1']
    #allocation5 [shape = 'u8[8192]{0}', space=vmem, size = 0x2000, scoped, tag = 'input window, operand 1, single buffered']
    #allocation6 [shape = 's32[1]{0}', space=sflag, size = 0x4, scoped, tag = 'scoped memory for tpu_custom_call.1']
    #allocation7 [shape = 'u8[16384]{0}', space=vmem, size = 0x4000, scoped, tag = 'input window, operand 2, single buffered']
    #allocation8 [shape = 'u8[16384]{0}', space=vmem, size = 0x4000, scoped, tag = 'input window, operand 3, single buffered']
    #allocation9 [shape = 's32[1]{0}', space=sflag, size = 0x4, scoped, tag = 'scoped memory for tpu_custom_call.1']
    #allocation10 [shape = 'u8[16384]{0}', space=vmem, size = 0x4000, scoped, tag = 'input window, operand 4, single buffered']
    #allocation11 [shape = 'u8[8192]{0}', space=vmem, size = 0x2000, scoped, tag = 'output window, operand 0, single buffered']
    %11 = vsyncpa [#allocation3], 0
    %12 = vsyncpa [#allocation6], 0
    %13 = vsyncpa [#allocation9], 0
    %14 = vsyncpa [#allocation4], 0
    // Predicated region
    $region2: #{tpu_custom_call.1} parent=1 // pred_check
      _
    $region3: #{tpu_custom_call.1} parent=1 // pred_check_branch
      %16 = sbr.rel (0) target = $region5
    $region4: #{tpu_custom_call.1} parent=1 // pred_region
      %18 = vsyncadd [#allocation3], 0
      %s19 = sshll.u32 %s0, 4
      %s20 = int_to_ptr.hbm [resolvable:$true] %s19
      %s21 = sshll.u32 [#allocation2], 4
      %s22 = int_to_ptr.vmem [resolvable:$true] %s21
      %27 = dma.hbm_to_vmem [thread:$0]  %s20, 256, %s22, [#allocation3], 128, 128, 8
    $region5: #{tpu_custom_call.1} parent=1 // pred_fallthru
      _
    // Predicated region
    $region6: #{tpu_custom_call.1} parent=1 // pred_check
      _
    $region7: #{tpu_custom_call.1} parent=1 // pred_check_branch
      %29 = sbr.rel (0) target = $region9
    $region8: #{tpu_custom_call.1} parent=1 // pred_region
      %31 = vsyncadd [#allocation6], 0
      %s32 = sshll.u32 %s1, 4
      %s33 = int_to_ptr.hbm [resolvable:$true] %s32
      %s34 = sshll.u32 [#allocation5], 4
      %s35 = int_to_ptr.vmem [resolvable:$true] %s34
      %40 = dma.hbm_to_vmem [thread:$0]  %s33, 256, %s35, [#allocation6], 128, 128, 8
    $region9: #{tpu_custom_call.1} parent=1 // pred_fallthru
      _
    // Predicated region
    $region10: #{tpu_custom_call.1} parent=1 // pred_check
      _
    $region11: #{tpu_custom_call.1} parent=1 // pred_check_branch
      %42 = sbr.rel (0) target = $region13
    $region12: #{tpu_custom_call.1} parent=1 // pred_region
      %44 = vsyncadd [#allocation6], 0
      %s45 = sshll.u32 %s2, 4
      %s46 = int_to_ptr.hbm [resolvable:$true] %s45
      %s47 = sshll.u32 [#allocation7], 4
      %s48 = int_to_ptr.vmem [resolvable:$true] %s47
      %53 = dma.hbm_to_vmem [thread:$0]  %s46, 512, %s48, [#allocation6], 128, 128, 8
    $region13: #{tpu_custom_call.1} parent=1 // pred_fallthru
      _
    // Predicated region
    $region14: #{tpu_custom_call.1} parent=1 // pred_check
      _
    $region15: #{tpu_custom_call.1} parent=1 // pred_check_branch
      %55 = sbr.rel (0) target = $region17
    $region16: #{tpu_custom_call.1} parent=1 // pred_region
      %57 = vsyncadd [#allocation9], 0
      %s58 = sshll.u32 %s3, 4
      %s59 = int_to_ptr.hbm [resolvable:$true] %s58
      %s60 = sshll.u32 [#allocation8], 4
      %s61 = int_to_ptr.vmem [resolvable:$true] %s60
      %66 = dma.hbm_to_vmem [thread:$0]  %s59, 512, %s61, [#allocation9], 128, 128, 8
    $region17: #{tpu_custom_call.1} parent=1 // pred_fallthru
      _
    // Predicated region
    $region18: #{tpu_custom_call.1} parent=1 // pred_check
      _
    $region19: #{tpu_custom_call.1} parent=1 // pred_check_branch
      %68 = sbr.rel (0) target = $region21
    $region20: #{tpu_custom_call.1} parent=1 // pred_region
      %70 = vsyncadd [#allocation9], 0
      %s71 = sshll.u32 %s4, 4
      %s72 = int_to_ptr.hbm [resolvable:$true] %s71
      %s73 = sshll.u32 [#allocation10], 4
      %s74 = int_to_ptr.vmem [resolvable:$true] %s73
      %79 = dma.hbm_to_vmem [thread:$0]  %s72, 512, %s74, [#allocation9], 128, 128, 8
    $region21: #{tpu_custom_call.1} parent=1 // pred_fallthru
      _
    // Predicated region
    $region22: #{tpu_custom_call.1} parent=1 // pred_check
      _
    $region23: #{tpu_custom_call.1} parent=1 // pred_check_branch
      %81 = sbr.rel (0) target = $region25
    $region24: #{tpu_custom_call.1} parent=1 // pred_region
      _
    $region25: #{tpu_custom_call.1} parent=1 // pred_fallthru
      _
    // Predicated region
    $region26: #{tpu_custom_call.1} parent=1 // pred_check
      _
    $region27: #{tpu_custom_call.1} parent=1 // pred_check_branch
      %83 = sbr.rel (0) target = $region29
    $region28: #{tpu_custom_call.1} parent=1 // pred_region
      %85 = dma.done [#allocation3], 256
    $region29: #{tpu_custom_call.1} parent=1 // pred_fallthru
      _
    // Predicated region
    $region30: #{tpu_custom_call.1} parent=1 // pred_check
      _
    $region31: #{tpu_custom_call.1} parent=1 // pred_check_branch
      %87 = sbr.rel (0) target = $region33
    $region32: #{tpu_custom_call.1} parent=1 // pred_region
      %89 = dma.done [#allocation6], 256
    $region33: #{tpu_custom_call.1} parent=1 // pred_fallthru
      _
    // Predicated region
    $region34: #{tpu_custom_call.1} parent=1 // pred_check
      _
    $region35: #{tpu_custom_call.1} parent=1 // pred_check_branch
      %91 = sbr.rel (0) target = $region37
    $region36: #{tpu_custom_call.1} parent=1 // pred_region
      %93 = dma.done [#allocation6], 512
    $region37: #{tpu_custom_call.1} parent=1 // pred_fallthru
      _
    // Predicated region
    $region38: #{tpu_custom_call.1} parent=1 // pred_check
      _
    $region39: #{tpu_custom_call.1} parent=1 // pred_check_branch
      %95 = sbr.rel (0) target = $region41
    $region40: #{tpu_custom_call.1} parent=1 // pred_region
      %97 = dma.done [#allocation9], 512
    $region41: #{tpu_custom_call.1} parent=1 // pred_fallthru
      _
    // Predicated region
    $region42: #{tpu_custom_call.1} parent=1 // pred_check
      _
    $region43: #{tpu_custom_call.1} parent=1 // pred_check_branch
      %99 = sbr.rel (0) target = $region45
    $region44: #{tpu_custom_call.1} parent=1 // pred_region
      %101 = dma.done [#allocation9], 512
    $region45: #{tpu_custom_call.1} parent=1 // pred_fallthru
      _
    %v102 = vld [vmem:[#allocation2] sm:$0xff]
    %v103 = vld [vmem:[#allocation2 + $0x8] sm:$0xff]
    %v104 = vld [vmem:[#allocation5] sm:$0xff]
    %v105 = vld [vmem:[#allocation5 + $0x8] sm:$0xff]
    %v106 = vld [vmem:[#allocation7] sm:$0xff]
    %v107 = vld [vmem:[#allocation7 + $0x8] sm:$0xff]
    %v108 = vld [vmem:[#allocation7 + $0x10] sm:$0xff]
    %v109 = vld [vmem:[#allocation7 + $0x18] sm:$0xff]
    %vm110 = vcmask 261120
    %v112 = vsel %vm110, %v102, 0
    %v115 = vsel %vm110, %v103, 0
    %117 = vmatpush.msra.mxu0 0.0
    %118 = vmatpush.msra.mxu0 0.0
    %119 = vmatpush.msra.mxu0 0.0
    %120 = vmatpush.msra.mxu0 0.0
    %121 = vmatpush.msra.mxu0 0.0
    %122 = vmatpush.msra.mxu0 0.0
    %123 = vmatpush.msra.mxu0 0.0
    %124 = vmatpush.msra.mxu0 0.0
    %125 = vmatpush.msra.mxu0 0.0
    %126 = vmatpush.msra.mxu0 0.0
    %127 = vmatpush.msra.mxu0 0.0
    %128 = vmatpush.msra.mxu0 0.0
    %129 = vmatpush.msra.mxu0 %v109
    %130 = vmatpush.msra.mxu0 %v108
    %131 = vmatpush.msra.mxu0 %v107
    %132 = vmatpush.msra.mxu0 %v106
    %133 = vmatmul.f32.gmra.mxu0 %v112
    %v134 = vpop.f32.mrf.mxu0
    %v135 = vadd.f32 0.0, %v134
    %136 = vmatmul.f32.gmra.mxu0 %v115
    %v137 = vpop.f32.mrf.mxu0
    %v138 = vadd.f32 0.0, %v137
    %139 = vdwg.mxu0
    %v140 = vmul.f32 %v135, 0.35355338
    %v141 = vmul.f32 %v138, 0.35355338
    %v142 = vld [vmem:[#allocation8] sm:$0xff]
    %v143 = vld [vmem:[#allocation8 + $0x8] sm:$0xff]
    %v144 = vld [vmem:[#allocation8 + $0x10] sm:$0xff]
    %v145 = vld [vmem:[#allocation8 + $0x18] sm:$0xff]
    %v147 = vsel %vm110, %v104, 0
    %v150 = vsel %vm110, %v105, 0
    %152 = vmatpush.msra.mxu0 0.0
    %153 = vmatpush.msra.mxu0 0.0
    %154 = vmatpush.msra.mxu0 0.0
    %155 = vmatpush.msra.mxu0 0.0
    %156 = vmatpush.msra.mxu0 0.0
    %157 = vmatpush.msra.mxu0 0.0
    %158 = vmatpush.msra.mxu0 0.0
    %159 = vmatpush.msra.mxu0 0.0
    %160 = vmatpush.msra.mxu0 0.0
    %161 = vmatpush.msra.mxu0 0.0
    %162 = vmatpush.msra.mxu0 0.0
    %163 = vmatpush.msra.mxu0 0.0
    %164 = vmatpush.msra.mxu0 %v145
    %165 = vmatpush.msra.mxu0 %v144
    %166 = vmatpush.msra.mxu0 %v143
    %167 = vmatpush.msra.mxu0 %v142
    %168 = vmatmul.f32.gmra.mxu0 %v147
    %v169 = vpop.f32.mrf.mxu0
    %v170 = vadd.f32 0.0, %v169
    %171 = vmatmul.f32.gmra.mxu0 %v150
    %v172 = vpop.f32.mrf.mxu0
    %v173 = vadd.f32 0.0, %v172
    %174 = vdwg.mxu0
    %177 = vrot.lane.b32.xlu0 %v140, 120
    %v178 = vpop.permute.xlu0 %177
    %179 = vrot.lane.b32.xlu0 %v141, 120
    %v180 = vpop.permute.xlu0 %179
    %183 = vrot.lane.b32.xlu0 %v140, 112
    %v184 = vpop.permute.xlu0 %183
    %185 = vrot.lane.b32.xlu0 %v141, 112
    %v186 = vpop.permute.xlu0 %185
    %189 = vrot.lane.b32.xlu0 %v140, 104
    %v190 = vpop.permute.xlu0 %189
    %191 = vrot.lane.b32.xlu0 %v141, 104
    %v192 = vpop.permute.xlu0 %191
    %v195 = vrot.slane %v184, 4
    %vm196 = vcmask 1047556
    %v197 = vsel %vm196, %v195, %v140
    %v198 = vrot.slane %v140, 4
    %v199 = vsel %vm196, %v184, %v198
    %v201 = vunpack.c.l.s4 1983009808
    %v202 = vunpack.c.0.s8 %v201
    %v203 = vperm.slane %v197, %v202
    %v205 = vunpack.c.l.s4 1983009808
    %v206 = vunpack.c.0.s8 %v205
    %v207 = vperm.slane %v199, %v206
    %v208 = vrot.slane %v190, 4
    %v209 = vsel %vm196, %v208, %v178
    %v210 = vrot.slane %v178, 4
    %v211 = vsel %vm196, %v190, %v210
    %v213 = vunpack.c.l.s4 1983009808
    %v214 = vunpack.c.0.s8 %v213
    %v215 = vperm.slane %v209, %v214
    %v217 = vunpack.c.l.s4 1983009808
    %v218 = vunpack.c.0.s8 %v217
    %v219 = vperm.slane %v211, %v218
    %v220 = vrot.slane %v215, 4
    %v221 = vsel %vm196, %v220, %v203
    %v222 = vrot.slane %v203, 4
    %v223 = vsel %vm196, %v215, %v222
    %v225 = vunpack.c.l.s4 1934713408
    %v226 = vunpack.c.0.s8 %v225
    %v227 = vperm.slane %v221, %v226
    %v229 = vunpack.c.l.s4 1934713408
    %v230 = vunpack.c.0.s8 %v229
    %v231 = vperm.slane %v223, %v230
    %v232 = vrot.slane %v219, 4
    %v233 = vsel %vm196, %v232, %v207
    %v234 = vrot.slane %v207, 4
    %v235 = vsel %vm196, %v219, %v234
    %v237 = vunpack.c.l.s4 1934713408
    %v238 = vunpack.c.0.s8 %v237
    %v239 = vperm.slane %v233, %v238
    %v241 = vunpack.c.l.s4 1934713408
    %v242 = vunpack.c.0.s8 %v241
    %v243 = vperm.slane %v235, %v242
    %v244 = vrot.slane %v227, 4
    %v245 = vsel %vm196, 0.0, %v244
    %v246 = vrot.slane %v231, 4
    %v247 = vsel %vm196, 0.0, %v246
    %v248 = vrot.slane %v239, 4
    %v249 = vsel %vm196, 0.0, %v248
    %v250 = vrot.slane %v243, 4
    %v251 = vsel %vm196, 0.0, %v250
    %v252 = vrot.slane %v186, 4
    %v253 = vsel %vm196, %v252, %v141
    %v254 = vrot.slane %v141, 4
    %v255 = vsel %vm196, %v186, %v254
    %v257 = vunpack.c.l.s4 1983009808
    %v258 = vunpack.c.0.s8 %v257
    %v259 = vperm.slane %v253, %v258
    %v261 = vunpack.c.l.s4 1983009808
    %v262 = vunpack.c.0.s8 %v261
    %v263 = vperm.slane %v255, %v262
    %v264 = vrot.slane %v192, 4
    %v265 = vsel %vm196, %v264, %v180
    %v266 = vrot.slane %v180, 4
    %v267 = vsel %vm196, %v192, %v266
    %v269 = vunpack.c.l.s4 1983009808
    %v270 = vunpack.c.0.s8 %v269
    %v271 = vperm.slane %v265, %v270
    %v273 = vunpack.c.l.s4 1983009808
    %v274 = vunpack.c.0.s8 %v273
    %v275 = vperm.slane %v267, %v274
    %v276 = vrot.slane %v271, 4
    %v277 = vsel %vm196, %v276, %v259
    %v278 = vrot.slane %v259, 4
    %v279 = vsel %vm196, %v271, %v278
    %v281 = vunpack.c.l.s4 1934713408
    %v282 = vunpack.c.0.s8 %v281
    %v283 = vperm.slane %v277, %v282
    %v285 = vunpack.c.l.s4 1934713408
    %v286 = vunpack.c.0.s8 %v285
    %v287 = vperm.slane %v279, %v286
    %v288 = vrot.slane %v275, 4
    %v289 = vsel %vm196, %v288, %v263
    %v290 = vrot.slane %v263, 4
    %v291 = vsel %vm196, %v275, %v290
    %v293 = vunpack.c.l.s4 1934713408
    %v294 = vunpack.c.0.s8 %v293
    %v295 = vperm.slane %v289, %v294
    %v297 = vunpack.c.l.s4 1934713408
    %v298 = vunpack.c.0.s8 %v297
    %v299 = vperm.slane %v291, %v298
    %v300 = vrot.slane %v283, 4
    %v301 = vsel %vm196, 0.0, %v300
    %v302 = vrot.slane %v287, 4
    %v303 = vsel %vm196, 0.0, %v302
    %v304 = vrot.slane %v295, 4
    %v305 = vsel %vm196, 0.0, %v304
    %v306 = vrot.slane %v299, 4
    %v307 = vsel %vm196, 0.0, %v306
    %v308 = vsel %vm196, %v246, %v227
    %v310 = vunpack.c.l.s4 1983009808
    %v311 = vunpack.c.0.s8 %v310
    %v312 = vperm.slane %v308, %v311
    %v313 = vrot.slane %v247, 4
    %v314 = vsel %vm196, %v313, %v245
    %v316 = vunpack.c.l.s4 1983009808
    %v317 = vunpack.c.0.s8 %v316
    %v318 = vperm.slane %v314, %v317
    %v319 = vsel %vm196, %v250, %v239
    %v321 = vunpack.c.l.s4 1983009808
    %v322 = vunpack.c.0.s8 %v321
    %v323 = vperm.slane %v319, %v322
    %v324 = vrot.slane %v251, 4
    %v325 = vsel %vm196, %v324, %v249
    %v327 = vunpack.c.l.s4 1983009808
    %v328 = vunpack.c.0.s8 %v327
    %v329 = vperm.slane %v325, %v328
    %v330 = vrot.slane %v318, 4
    %v331 = vsel %vm196, %v330, %v312
    %v332 = vrot.slane %v312, 4
    %v333 = vsel %vm196, %v318, %v332
    %v335 = vunpack.c.l.s4 1934713408
    %v336 = vunpack.c.0.s8 %v335
    %v337 = vperm.slane %v331, %v336
    %v339 = vunpack.c.l.s4 1934713408
    %v340 = vunpack.c.0.s8 %v339
    %v341 = vperm.slane %v333, %v340
    %v342 = vrot.slane %v329, 4
    %v343 = vsel %vm196, %v342, %v323
    %v344 = vrot.slane %v323, 4
    %v345 = vsel %vm196, %v329, %v344
    %v347 = vunpack.c.l.s4 1934713408
    %v348 = vunpack.c.0.s8 %v347
    %v349 = vperm.slane %v343, %v348
    %v351 = vunpack.c.l.s4 1934713408
    %v352 = vunpack.c.0.s8 %v351
    %v353 = vperm.slane %v345, %v352
    %v354 = vrot.slane %v349, 4
    %v355 = vsel %vm196, %v354, %v337
    %v356 = vrot.slane %v337, 4
    %v357 = vsel %vm196, %v349, %v356
    %v358 = vrot.slane %v353, 4
    %v359 = vsel %vm196, %v358, %v341
    %v360 = vrot.slane %v341, 4
    %v361 = vsel %vm196, %v353, %v360
    %v362 = vsel %vm196, %v302, %v283
    %v364 = vunpack.c.l.s4 1983009808
    %v365 = vunpack.c.0.s8 %v364
    %v366 = vperm.slane %v362, %v365
    %v367 = vrot.slane %v303, 4
    %v368 = vsel %vm196, %v367, %v301
    %v370 = vunpack.c.l.s4 1983009808
    %v371 = vunpack.c.0.s8 %v370
    %v372 = vperm.slane %v368, %v371
    %v373 = vsel %vm196, %v306, %v295
    %v375 = vunpack.c.l.s4 1983009808
    %v376 = vunpack.c.0.s8 %v375
    %v377 = vperm.slane %v373, %v376
    %v378 = vrot.slane %v307, 4
    %v379 = vsel %vm196, %v378, %v305
    %v381 = vunpack.c.l.s4 1983009808
    %v382 = vunpack.c.0.s8 %v381
    %v383 = vperm.slane %v379, %v382
    %v384 = vrot.slane %v372, 4
    %v385 = vsel %vm196, %v384, %v366
    %v386 = vrot.slane %v366, 4
    %v387 = vsel %vm196, %v372, %v386
    %v389 = vunpack.c.l.s4 1934713408
    %v390 = vunpack.c.0.s8 %v389
    %v391 = vperm.slane %v385, %v390
    %v393 = vunpack.c.l.s4 1934713408
    %v394 = vunpack.c.0.s8 %v393
    %v395 = vperm.slane %v387, %v394
    %v396 = vrot.slane %v383, 4
    %v397 = vsel %vm196, %v396, %v377
    %v398 = vrot.slane %v377, 4
    %v399 = vsel %vm196, %v383, %v398
    %v401 = vunpack.c.l.s4 1934713408
    %v402 = vunpack.c.0.s8 %v401
    %v403 = vperm.slane %v397, %v402
    %v405 = vunpack.c.l.s4 1934713408
    %v406 = vunpack.c.0.s8 %v405
    %v407 = vperm.slane %v399, %v406
    %v408 = vrot.slane %v403, 4
    %v409 = vsel %vm196, %v408, %v391
    %v410 = vrot.slane %v391, 4
    %v411 = vsel %vm196, %v403, %v410
    %v412 = vrot.slane %v407, 4
    %v413 = vsel %vm196, %v412, %v395
    %v414 = vrot.slane %v395, 4
    %v415 = vsel %vm196, %v407, %v414
    %418 = vrot.lane.b32.xlu0 %v170, 120
    %v419 = vpop.permute.xlu0 %418
    %420 = vrot.lane.b32.xlu0 %v173, 120
    %v421 = vpop.permute.xlu0 %420
    %424 = vrot.lane.b32.xlu0 %v170, 112
    %v425 = vpop.permute.xlu0 %424
    %426 = vrot.lane.b32.xlu0 %v173, 112
    %v427 = vpop.permute.xlu0 %426
    %430 = vrot.lane.b32.xlu0 %v170, 104
    %v431 = vpop.permute.xlu0 %430
    %432 = vrot.lane.b32.xlu0 %v173, 104
    %v433 = vpop.permute.xlu0 %432
    %436 = vrot.lane.b32.xlu0 %v170, 96
    %v437 = vpop.permute.xlu0 %436
    %438 = vrot.lane.b32.xlu0 %v173, 96
    %v439 = vpop.permute.xlu0 %438
    %442 = vrot.lane.b32.xlu0 %v170, 88
    %v443 = vpop.permute.xlu0 %442
    %444 = vrot.lane.b32.xlu0 %v173, 88
    %v445 = vpop.permute.xlu0 %444
    %448 = vrot.lane.b32.xlu0 %v170, 80
    %v449 = vpop.permute.xlu0 %448
    %450 = vrot.lane.b32.xlu0 %v173, 80
    %v451 = vpop.permute.xlu0 %450
    %454 = vrot.lane.b32.xlu0 %v170, 72
    %v455 = vpop.permute.xlu0 %454
    %456 = vrot.lane.b32.xlu0 %v173, 72
    %v457 = vpop.permute.xlu0 %456
    %v460 = vrot.slane %v425, 4
    %v461 = vsel %vm196, %v460, %v170
    %v462 = vrot.slane %v170, 4
    %v463 = vsel %vm196, %v425, %v462
    %v465 = vunpack.c.l.s4 1983009808
    %v466 = vunpack.c.0.s8 %v465
    %v467 = vperm.slane %v461, %v466
    %v469 = vunpack.c.l.s4 1983009808
    %v470 = vunpack.c.0.s8 %v469
    %v471 = vperm.slane %v463, %v470
    %v472 = vrot.slane %v431, 4
    %v473 = vsel %vm196, %v472, %v419
    %v474 = vrot.slane %v419, 4
    %v475 = vsel %vm196, %v431, %v474
    %v477 = vunpack.c.l.s4 1983009808
    %v478 = vunpack.c.0.s8 %v477
    %v479 = vperm.slane %v473, %v478
    %v481 = vunpack.c.l.s4 1983009808
    %v482 = vunpack.c.0.s8 %v481
    %v483 = vperm.slane %v475, %v482
    %v484 = vrot.slane %v449, 4
    %v485 = vsel %vm196, %v484, %v437
    %v486 = vrot.slane %v437, 4
    %v487 = vsel %vm196, %v449, %v486
    %v489 = vunpack.c.l.s4 1983009808
    %v490 = vunpack.c.0.s8 %v489
    %v491 = vperm.slane %v485, %v490
    %v493 = vunpack.c.l.s4 1983009808
    %v494 = vunpack.c.0.s8 %v493
    %v495 = vperm.slane %v487, %v494
    %v496 = vrot.slane %v455, 4
    %v497 = vsel %vm196, %v496, %v443
    %v498 = vrot.slane %v443, 4
    %v499 = vsel %vm196, %v455, %v498
    %v501 = vunpack.c.l.s4 1983009808
    %v502 = vunpack.c.0.s8 %v501
    %v503 = vperm.slane %v497, %v502
    %v505 = vunpack.c.l.s4 1983009808
    %v506 = vunpack.c.0.s8 %v505
    %v507 = vperm.slane %v499, %v506
    %v508 = vrot.slane %v479, 4
    %v509 = vsel %vm196, %v508, %v467
    %v510 = vrot.slane %v467, 4
    %v511 = vsel %vm196, %v479, %v510
    %v513 = vunpack.c.l.s4 1934713408
    %v514 = vunpack.c.0.s8 %v513
    %v515 = vperm.slane %v509, %v514
    %v517 = vunpack.c.l.s4 1934713408
    %v518 = vunpack.c.0.s8 %v517
    %v519 = vperm.slane %v511, %v518
    %v520 = vrot.slane %v483, 4
    %v521 = vsel %vm196, %v520, %v471
    %v522 = vrot.slane %v471, 4
    %v523 = vsel %vm196, %v483, %v522
    %v525 = vunpack.c.l.s4 1934713408
    %v526 = vunpack.c.0.s8 %v525
    %v527 = vperm.slane %v521, %v526
    %v529 = vunpack.c.l.s4 1934713408
    %v530 = vunpack.c.0.s8 %v529
    %v531 = vperm.slane %v523, %v530
    %v532 = vrot.slane %v503, 4
    %v533 = vsel %vm196, %v532, %v491
    %v534 = vrot.slane %v491, 4
    %v535 = vsel %vm196, %v503, %v534
    %v537 = vunpack.c.l.s4 1934713408
    %v538 = vunpack.c.0.s8 %v537
    %v539 = vperm.slane %v533, %v538
    %v541 = vunpack.c.l.s4 1934713408
    %v542 = vunpack.c.0.s8 %v541
    %v543 = vperm.slane %v535, %v542
    %v544 = vrot.slane %v507, 4
    %v545 = vsel %vm196, %v544, %v495
    %v546 = vrot.slane %v495, 4
    %v547 = vsel %vm196, %v507, %v546
    %v549 = vunpack.c.l.s4 1934713408
    %v550 = vunpack.c.0.s8 %v549
    %v551 = vperm.slane %v545, %v550
    %v553 = vunpack.c.l.s4 1934713408
    %v554 = vunpack.c.0.s8 %v553
    %v555 = vperm.slane %v547, %v554
    %v556 = vrot.slane %v539, 4
    %v557 = vsel %vm196, %v556, %v515
    %v558 = vrot.slane %v515, 4
    %v559 = vsel %vm196, %v539, %v558
    %v560 = vrot.slane %v543, 4
    %v561 = vsel %vm196, %v560, %v519
    %v562 = vrot.slane %v519, 4
    %v563 = vsel %vm196, %v543, %v562
    %v564 = vrot.slane %v551, 4
    %v565 = vsel %vm196, %v564, %v527
    %v566 = vrot.slane %v527, 4
    %v567 = vsel %vm196, %v551, %v566
    %v568 = vrot.slane %v555, 4
    %v569 = vsel %vm196, %v568, %v531
    %v570 = vrot.slane %v531, 4
    %v571 = vsel %vm196, %v555, %v570
    %v572 = vrot.slane %v427, 4
    %v573 = vsel %vm196, %v572, %v173
    %v574 = vrot.slane %v173, 4
    %v575 = vsel %vm196, %v427, %v574
    %v577 = vunpack.c.l.s4 1983009808
    %v578 = vunpack.c.0.s8 %v577
    %v579 = vperm.slane %v573, %v578
    %v581 = vunpack.c.l.s4 1983009808
    %v582 = vunpack.c.0.s8 %v581
    %v583 = vperm.slane %v575, %v582
    %v584 = vrot.slane %v433, 4
    %v585 = vsel %vm196, %v584, %v421
    %v586 = vrot.slane %v421, 4
    %v587 = vsel %vm196, %v433, %v586
    %v589 = vunpack.c.l.s4 1983009808
    %v590 = vunpack.c.0.s8 %v589
    %v591 = vperm.slane %v585, %v590
    %v593 = vunpack.c.l.s4 1983009808
    %v594 = vunpack.c.0.s8 %v593
    %v595 = vperm.slane %v587, %v594
    %v596 = vrot.slane %v451, 4
    %v597 = vsel %vm196, %v596, %v439
    %v598 = vrot.slane %v439, 4
    %v599 = vsel %vm196, %v451, %v598
    %v601 = vunpack.c.l.s4 1983009808
    %v602 = vunpack.c.0.s8 %v601
    %v603 = vperm.slane %v597, %v602
    %v605 = vunpack.c.l.s4 1983009808
    %v606 = vunpack.c.0.s8 %v605
    %v607 = vperm.slane %v599, %v606
    %v608 = vrot.slane %v457, 4
    %v609 = vsel %vm196, %v608, %v445
    %v610 = vrot.slane %v445, 4
    %v611 = vsel %vm196, %v457, %v610
    %v613 = vunpack.c.l.s4 1983009808
    %v614 = vunpack.c.0.s8 %v613
    %v615 = vperm.slane %v609, %v614
    %v617 = vunpack.c.l.s4 1983009808
    %v618 = vunpack.c.0.s8 %v617
    %v619 = vperm.slane %v611, %v618
    %v620 = vrot.slane %v591, 4
    %v621 = vsel %vm196, %v620, %v579
    %v622 = vrot.slane %v579, 4
    %v623 = vsel %vm196, %v591, %v622
    %v625 = vunpack.c.l.s4 1934713408
    %v626 = vunpack.c.0.s8 %v625
    %v627 = vperm.slane %v621, %v626
    %v629 = vunpack.c.l.s4 1934713408
    %v630 = vunpack.c.0.s8 %v629
    %v631 = vperm.slane %v623, %v630
    %v632 = vrot.slane %v595, 4
    %v633 = vsel %vm196, %v632, %v583
    %v634 = vrot.slane %v583, 4
    %v635 = vsel %vm196, %v595, %v634
    %v637 = vunpack.c.l.s4 1934713408
    %v638 = vunpack.c.0.s8 %v637
    %v639 = vperm.slane %v633, %v638
    %v641 = vunpack.c.l.s4 1934713408
    %v642 = vunpack.c.0.s8 %v641
    %v643 = vperm.slane %v635, %v642
    %v644 = vrot.slane %v615, 4
    %v645 = vsel %vm196, %v644, %v603
    %v646 = vrot.slane %v603, 4
    %v647 = vsel %vm196, %v615, %v646
    %v649 = vunpack.c.l.s4 1934713408
    %v650 = vunpack.c.0.s8 %v649
    %v651 = vperm.slane %v645, %v650
    %v653 = vunpack.c.l.s4 1934713408
    %v654 = vunpack.c.0.s8 %v653
    %v655 = vperm.slane %v647, %v654
    %v656 = vrot.slane %v619, 4
    %v657 = vsel %vm196, %v656, %v607
    %v658 = vrot.slane %v607, 4
    %v659 = vsel %vm196, %v619, %v658
    %v661 = vunpack.c.l.s4 1934713408
    %v662 = vunpack.c.0.s8 %v661
    %v663 = vperm.slane %v657, %v662
    %v665 = vunpack.c.l.s4 1934713408
    %v666 = vunpack.c.0.s8 %v665
    %v667 = vperm.slane %v659, %v666
    %v668 = vrot.slane %v651, 4
    %v669 = vsel %vm196, %v668, %v627
    %v670 = vrot.slane %v627, 4
    %v671 = vsel %vm196, %v651, %v670
    %v672 = vrot.slane %v655, 4
    %v673 = vsel %vm196, %v672, %v631
    %v674 = vrot.slane %v631, 4
    %v675 = vsel %vm196, %v655, %v674
    %v676 = vrot.slane %v663, 4
    %v677 = vsel %vm196, %v676, %v639
    %v678 = vrot.slane %v639, 4
    %v679 = vsel %vm196, %v663, %v678
    %v680 = vrot.slane %v667, 4
    %v681 = vsel %vm196, %v680, %v643
    %v682 = vrot.slane %v643, 4
    %v683 = vsel %vm196, %v667, %v682
    %v684 = vrot.slane %v561, 4
    %v685 = vsel %vm196, %v684, %v557
    %v686 = vrot.slane %v557, 4
    %v687 = vsel %vm196, %v561, %v686
    %v689 = vunpack.c.l.s4 1983009808
    %v690 = vunpack.c.0.s8 %v689
    %v691 = vperm.slane %v685, %v690
    %v693 = vunpack.c.l.s4 1983009808
    %v694 = vunpack.c.0.s8 %v693
    %v695 = vperm.slane %v687, %v694
    %v696 = vrot.slane %v563, 4
    %v697 = vsel %vm196, %v696, %v559
    %v698 = vrot.slane %v559, 4
    %v699 = vsel %vm196, %v563, %v698
    %v701 = vunpack.c.l.s4 1983009808
    %v702 = vunpack.c.0.s8 %v701
    %v703 = vperm.slane %v697, %v702
    %v705 = vunpack.c.l.s4 1983009808
    %v706 = vunpack.c.0.s8 %v705
    %v707 = vperm.slane %v699, %v706
    %v708 = vrot.slane %v569, 4
    %v709 = vsel %vm196, %v708, %v565
    %v710 = vrot.slane %v565, 4
    %v711 = vsel %vm196, %v569, %v710
    %v713 = vunpack.c.l.s4 1983009808
    %v714 = vunpack.c.0.s8 %v713
    %v715 = vperm.slane %v709, %v714
    %v717 = vunpack.c.l.s4 1983009808
    %v718 = vunpack.c.0.s8 %v717
    %v719 = vperm.slane %v711, %v718
    %v720 = vrot.slane %v571, 4
    %v721 = vsel %vm196, %v720, %v567
    %v722 = vrot.slane %v567, 4
    %v723 = vsel %vm196, %v571, %v722
    %v725 = vunpack.c.l.s4 1983009808
    %v726 = vunpack.c.0.s8 %v725
    %v727 = vperm.slane %v721, %v726
    %v729 = vunpack.c.l.s4 1983009808
    %v730 = vunpack.c.0.s8 %v729
    %v731 = vperm.slane %v723, %v730
    %v732 = vrot.slane %v703, 4
    %v733 = vsel %vm196, %v732, %v691
    %v734 = vrot.slane %v691, 4
    %v735 = vsel %vm196, %v703, %v734
    %v737 = vunpack.c.l.s4 1934713408
    %v738 = vunpack.c.0.s8 %v737
    %v739 = vperm.slane %v733, %v738
    %v741 = vunpack.c.l.s4 1934713408
    %v742 = vunpack.c.0.s8 %v741
    %v743 = vperm.slane %v735, %v742
    %v744 = vrot.slane %v707, 4
    %v745 = vsel %vm196, %v744, %v695
    %v746 = vrot.slane %v695, 4
    %v747 = vsel %vm196, %v707, %v746
    %v749 = vunpack.c.l.s4 1934713408
    %v750 = vunpack.c.0.s8 %v749
    %v751 = vperm.slane %v745, %v750
    %v753 = vunpack.c.l.s4 1934713408
    %v754 = vunpack.c.0.s8 %v753
    %v755 = vperm.slane %v747, %v754
    %v756 = vrot.slane %v727, 4
    %v757 = vsel %vm196, %v756, %v715
    %v758 = vrot.slane %v715, 4
    %v759 = vsel %vm196, %v727, %v758
    %v761 = vunpack.c.l.s4 1934713408
    %v762 = vunpack.c.0.s8 %v761
    %v763 = vperm.slane %v757, %v762
    %v765 = vunpack.c.l.s4 1934713408
    %v766 = vunpack.c.0.s8 %v765
    %v767 = vperm.slane %v759, %v766
    %v768 = vrot.slane %v731, 4
    %v769 = vsel %vm196, %v768, %v719
    %v770 = vrot.slane %v719, 4
    %v771 = vsel %vm196, %v731, %v770
    %v773 = vunpack.c.l.s4 1934713408
    %v774 = vunpack.c.0.s8 %v773
    %v775 = vperm.slane %v769, %v774
    %v777 = vunpack.c.l.s4 1934713408
    %v778 = vunpack.c.0.s8 %v777
    %v779 = vperm.slane %v771, %v778
    %v780 = vrot.slane %v763, 4
    %v781 = vsel %vm196, %v780, %v739
    %v782 = vrot.slane %v739, 4
    %v783 = vsel %vm196, %v763, %v782
    %v784 = vrot.slane %v767, 4
    %v785 = vsel %vm196, %v784, %v743
    %v786 = vrot.slane %v743, 4
    %v787 = vsel %vm196, %v767, %v786
    %v788 = vrot.slane %v775, 4
    %v789 = vsel %vm196, %v788, %v751
    %v790 = vrot.slane %v751, 4
    %v791 = vsel %vm196, %v775, %v790
    %v792 = vrot.slane %v779, 4
    %v793 = vsel %vm196, %v792, %v755
    %v794 = vrot.slane %v755, 4
    %v795 = vsel %vm196, %v779, %v794
    %v796 = vrot.slane %v673, 4
    %v797 = vsel %vm196, %v796, %v669
    %v798 = vrot.slane %v669, 4
    %v799 = vsel %vm196, %v673, %v798
    %v801 = vunpack.c.l.s4 1983009808
    %v802 = vunpack.c.0.s8 %v801
    %v803 = vperm.slane %v797, %v802
    %v805 = vunpack.c.l.s4 1983009808
    %v806 = vunpack.c.0.s8 %v805
    %v807 = vperm.slane %v799, %v806
    %v808 = vrot.slane %v675, 4
    %v809 = vsel %vm196, %v808, %v671
    %v810 = vrot.slane %v671, 4
    %v811 = vsel %vm196, %v675, %v810
    %v813 = vunpack.c.l.s4 1983009808
    %v814 = vunpack.c.0.s8 %v813
    %v815 = vperm.slane %v809, %v814
    %v817 = vunpack.c.l.s4 1983009808
    %v818 = vunpack.c.0.s8 %v817
    %v819 = vperm.slane %v811, %v818
    %v820 = vrot.slane %v681, 4
    %v821 = vsel %vm196, %v820, %v677
    %v822 = vrot.slane %v677, 4
    %v823 = vsel %vm196, %v681, %v822
    %v825 = vunpack.c.l.s4 1983009808
    %v826 = vunpack.c.0.s8 %v825
    %v827 = vperm.slane %v821, %v826
    %v829 = vunpack.c.l.s4 1983009808
    %v830 = vunpack.c.0.s8 %v829
    %v831 = vperm.slane %v823, %v830
    %v832 = vrot.slane %v683, 4
    %v833 = vsel %vm196, %v832, %v679
    %v834 = vrot.slane %v679, 4
    %v835 = vsel %vm196, %v683, %v834
    %v837 = vunpack.c.l.s4 1983009808
    %v838 = vunpack.c.0.s8 %v837
    %v839 = vperm.slane %v833, %v838
    %v841 = vunpack.c.l.s4 1983009808
    %v842 = vunpack.c.0.s8 %v841
    %v843 = vperm.slane %v835, %v842
    %v844 = vrot.slane %v815, 4
    %v845 = vsel %vm196, %v844, %v803
    %v846 = vrot.slane %v803, 4
    %v847 = vsel %vm196, %v815, %v846
    %v849 = vunpack.c.l.s4 1934713408
    %v850 = vunpack.c.0.s8 %v849
    %v851 = vperm.slane %v845, %v850
    %v853 = vunpack.c.l.s4 1934713408
    %v854 = vunpack.c.0.s8 %v853
    %v855 = vperm.slane %v847, %v854
    %v856 = vrot.slane %v819, 4
    %v857 = vsel %vm196, %v856, %v807
    %v858 = vrot.slane %v807, 4
    %v859 = vsel %vm196, %v819, %v858
    %v861 = vunpack.c.l.s4 1934713408
    %v862 = vunpack.c.0.s8 %v861
    %v863 = vperm.slane %v857, %v862
    %v865 = vunpack.c.l.s4 1934713408
    %v866 = vunpack.c.0.s8 %v865
    %v867 = vperm.slane %v859, %v866
    %v868 = vrot.slane %v839, 4
    %v869 = vsel %vm196, %v868, %v827
    %v870 = vrot.slane %v827, 4
    %v871 = vsel %vm196, %v839, %v870
    %v873 = vunpack.c.l.s4 1934713408
    %v874 = vunpack.c.0.s8 %v873
    %v875 = vperm.slane %v869, %v874
    %v877 = vunpack.c.l.s4 1934713408
    %v878 = vunpack.c.0.s8 %v877
    %v879 = vperm.slane %v871, %v878
    %v880 = vrot.slane %v843, 4
    %v881 = vsel %vm196, %v880, %v831
    %v882 = vrot.slane %v831, 4
    %v883 = vsel %vm196, %v843, %v882
    %v885 = vunpack.c.l.s4 1934713408
    %v886 = vunpack.c.0.s8 %v885
    %v887 = vperm.slane %v881, %v886
    %v889 = vunpack.c.l.s4 1934713408
    %v890 = vunpack.c.0.s8 %v889
    %v891 = vperm.slane %v883, %v890
    %v892 = vrot.slane %v875, 4
    %v893 = vsel %vm196, %v892, %v851
    %v894 = vrot.slane %v851, 4
    %v895 = vsel %vm196, %v875, %v894
    %v896 = vrot.slane %v879, 4
    %v897 = vsel %vm196, %v896, %v855
    %v898 = vrot.slane %v855, 4
    %v899 = vsel %vm196, %v879, %v898
    %v900 = vrot.slane %v887, 4
    %v901 = vsel %vm196, %v900, %v863
    %v902 = vrot.slane %v863, 4
    %v903 = vsel %vm196, %v887, %v902
    %v904 = vrot.slane %v891, 4
    %v905 = vsel %vm196, %v904, %v867
    %v906 = vrot.slane %v867, 4
    %v907 = vsel %vm196, %v891, %v906
    %vm908 = vcmask 64512
    %v910 = vsel %vm908, %v355, 0
    %v913 = vsel %vm908, %v781, 0
    %915 = vmatpush.xpose.msra.mxu0 0.0
    %916 = vmatpush.xpose.msra.mxu0 0.0
    %917 = vmatpush.xpose.msra.mxu0 0.0
    %918 = vmatpush.xpose.msra.mxu0 0.0
    %919 = vmatpush.xpose.msra.mxu0 0.0
    %920 = vmatpush.xpose.msra.mxu0 0.0
    %921 = vmatpush.xpose.msra.mxu0 0.0
    %922 = vmatpush.xpose.msra.mxu0 0.0
    %923 = vmatpush.xpose.msra.mxu0 0.0
    %924 = vmatpush.xpose.msra.mxu0 0.0
    %925 = vmatpush.xpose.msra.mxu0 0.0
    %926 = vmatpush.xpose.msra.mxu0 0.0
    %927 = vmatpush.xpose.msra.mxu0 0.0
    %928 = vmatpush.xpose.msra.mxu0 0.0
    %929 = vmatpush.xpose.msra.mxu0 0.0
    %930 = vmatpush.xpose.msra.mxu0 %v913
    %931 = vmatmul.f32.gmra.mxu0 %v910
    %v932 = vpop.f32.mrf.mxu0
    %v933 = vadd.f32 0.0, %v932
    %934 = vdwg.mxu0
    %v936 = vsel %vm908, %v409, 0
    %v939 = vsel %vm908, %v893, 0
    %941 = vmatpush.xpose.msra.mxu0 0.0
    %942 = vmatpush.xpose.msra.mxu0 0.0
    %943 = vmatpush.xpose.msra.mxu0 0.0
    %944 = vmatpush.xpose.msra.mxu0 0.0
    %945 = vmatpush.xpose.msra.mxu0 0.0
    %946 = vmatpush.xpose.msra.mxu0 0.0
    %947 = vmatpush.xpose.msra.mxu0 0.0
    %948 = vmatpush.xpose.msra.mxu0 0.0
    %949 = vmatpush.xpose.msra.mxu0 0.0
    %950 = vmatpush.xpose.msra.mxu0 0.0
    %951 = vmatpush.xpose.msra.mxu0 0.0
    %952 = vmatpush.xpose.msra.mxu0 0.0
    %953 = vmatpush.xpose.msra.mxu0 0.0
    %954 = vmatpush.xpose.msra.mxu0 0.0
    %955 = vmatpush.xpose.msra.mxu0 0.0
    %956 = vmatpush.xpose.msra.mxu0 %v939
    %957 = vmatmul.f32.gmra.mxu0 %v936
    %v958 = vpop.f32.mrf.mxu0
    %v959 = vadd.f32 0.0, %v958
    %960 = vdwg.mxu0
    %v962 = vsel %vm908, %v357, 0
    %v965 = vsel %vm908, %v783, 0
    %967 = vmatpush.xpose.msra.mxu0 0.0
    %968 = vmatpush.xpose.msra.mxu0 0.0
    %969 = vmatpush.xpose.msra.mxu0 0.0
    %970 = vmatpush.xpose.msra.mxu0 0.0
    %971 = vmatpush.xpose.msra.mxu0 0.0
    %972 = vmatpush.xpose.msra.mxu0 0.0
    %973 = vmatpush.xpose.msra.mxu0 0.0
    %974 = vmatpush.xpose.msra.mxu0 0.0
    %975 = vmatpush.xpose.msra.mxu0 0.0
    %976 = vmatpush.xpose.msra.mxu0 0.0
    %977 = vmatpush.xpose.msra.mxu0 0.0
    %978 = vmatpush.xpose.msra.mxu0 0.0
    %979 = vmatpush.xpose.msra.mxu0 0.0
    %980 = vmatpush.xpose.msra.mxu0 0.0
    %981 = vmatpush.xpose.msra.mxu0 0.0
    %982 = vmatpush.xpose.msra.mxu0 %v965
    %983 = vmatmul.f32.gmra.mxu0 %v962
    %v984 = vpop.f32.mrf.mxu0
    %v985 = vadd.f32 0.0, %v984
    %986 = vdwg.mxu0
    %v988 = vsel %vm908, %v411, 0
    %v991 = vsel %vm908, %v895, 0
    %993 = vmatpush.xpose.msra.mxu0 0.0
    %994 = vmatpush.xpose.msra.mxu0 0.0
    %995 = vmatpush.xpose.msra.mxu0 0.0
    %996 = vmatpush.xpose.msra.mxu0 0.0
    %997 = vmatpush.xpose.msra.mxu0 0.0
    %998 = vmatpush.xpose.msra.mxu0 0.0
    %999 = vmatpush.xpose.msra.mxu0 0.0
    %1000 = vmatpush.xpose.msra.mxu0 0.0
    %1001 = vmatpush.xpose.msra.mxu0 0.0
    %1002 = vmatpush.xpose.msra.mxu0 0.0
    %1003 = vmatpush.xpose.msra.mxu0 0.0
    %1004 = vmatpush.xpose.msra.mxu0 0.0
    %1005 = vmatpush.xpose.msra.mxu0 0.0
    %1006 = vmatpush.xpose.msra.mxu0 0.0
    %1007 = vmatpush.xpose.msra.mxu0 0.0
    %1008 = vmatpush.xpose.msra.mxu0 %v991
    %1009 = vmatmul.f32.gmra.mxu0 %v988
    %v1010 = vpop.f32.mrf.mxu0
    %v1011 = vadd.f32 0.0, %v1010
    %1012 = vdwg.mxu0
    %v1014 = vsel %vm908, %v359, 0
    %v1017 = vsel %vm908, %v785, 0
    %1019 = vmatpush.xpose.msra.mxu0 0.0
    %1020 = vmatpush.xpose.msra.mxu0 0.0
    %1021 = vmatpush.xpose.msra.mxu0 0.0
    %1022 = vmatpush.xpose.msra.mxu0 0.0
    %1023 = vmatpush.xpose.msra.mxu0 0.0
    %1024 = vmatpush.xpose.msra.mxu0 0.0
    %1025 = vmatpush.xpose.msra.mxu0 0.0
    %1026 = vmatpush.xpose.msra.mxu0 0.0
    %1027 = vmatpush.xpose.msra.mxu0 0.0
    %1028 = vmatpush.xpose.msra.mxu0 0.0
    %1029 = vmatpush.xpose.msra.mxu0 0.0
    %1030 = vmatpush.xpose.msra.mxu0 0.0
    %1031 = vmatpush.xpose.msra.mxu0 0.0
    %1032 = vmatpush.xpose.msra.mxu0 0.0
    %1033 = vmatpush.xpose.msra.mxu0 0.0
    %1034 = vmatpush.xpose.msra.mxu0 %v1017
    %1035 = vmatmul.f32.gmra.mxu0 %v1014
    %v1036 = vpop.f32.mrf.mxu0
    %v1037 = vadd.f32 0.0, %v1036
    %1038 = vdwg.mxu0
    %v1040 = vsel %vm908, %v413, 0
    %v1043 = vsel %vm908, %v897, 0
    %1045 = vmatpush.xpose.msra.mxu0 0.0
    %1046 = vmatpush.xpose.msra.mxu0 0.0
    %1047 = vmatpush.xpose.msra.mxu0 0.0
    %1048 = vmatpush.xpose.msra.mxu0 0.0
    %1049 = vmatpush.xpose.msra.mxu0 0.0
    %1050 = vmatpush.xpose.msra.mxu0 0.0
    %1051 = vmatpush.xpose.msra.mxu0 0.0
    %1052 = vmatpush.xpose.msra.mxu0 0.0
    %1053 = vmatpush.xpose.msra.mxu0 0.0
    %1054 = vmatpush.xpose.msra.mxu0 0.0
    %1055 = vmatpush.xpose.msra.mxu0 0.0
    %1056 = vmatpush.xpose.msra.mxu0 0.0
    %1057 = vmatpush.xpose.msra.mxu0 0.0
    %1058 = vmatpush.xpose.msra.mxu0 0.0
    %1059 = vmatpush.xpose.msra.mxu0 0.0
    %1060 = vmatpush.xpose.msra.mxu0 %v1043
    %1061 = vmatmul.f32.gmra.mxu0 %v1040
    %v1062 = vpop.f32.mrf.mxu0
    %v1063 = vadd.f32 0.0, %v1062
    %1064 = vdwg.mxu0
    %v1066 = vsel %vm908, %v361, 0
    %v1069 = vsel %vm908, %v787, 0
    %1071 = vmatpush.xpose.msra.mxu0 0.0
    %1072 = vmatpush.xpose.msra.mxu0 0.0
    %1073 = vmatpush.xpose.msra.mxu0 0.0
    %1074 = vmatpush.xpose.msra.mxu0 0.0
    %1075 = vmatpush.xpose.msra.mxu0 0.0
    %1076 = vmatpush.xpose.msra.mxu0 0.0
    %1077 = vmatpush.xpose.msra.mxu0 0.0
    %1078 = vmatpush.xpose.msra.mxu0 0.0
    %1079 = vmatpush.xpose.msra.mxu0 0.0
    %1080 = vmatpush.xpose.msra.mxu0 0.0
    %1081 = vmatpush.xpose.msra.mxu0 0.0
    %1082 = vmatpush.xpose.msra.mxu0 0.0
    %1083 = vmatpush.xpose.msra.mxu0 0.0
    %1084 = vmatpush.xpose.msra.mxu0 0.0
    %1085 = vmatpush.xpose.msra.mxu0 0.0
    %1086 = vmatpush.xpose.msra.mxu0 %v1069
    %1087 = vmatmul.f32.gmra.mxu0 %v1066
    %v1088 = vpop.f32.mrf.mxu0
    %v1089 = vadd.f32 0.0, %v1088
    %1090 = vdwg.mxu0
    %v1092 = vsel %vm908, %v415, 0
    %v1095 = vsel %vm908, %v899, 0
    %1097 = vmatpush.xpose.msra.mxu0 0.0
    %1098 = vmatpush.xpose.msra.mxu0 0.0
    %1099 = vmatpush.xpose.msra.mxu0 0.0
    %1100 = vmatpush.xpose.msra.mxu0 0.0
    %1101 = vmatpush.xpose.msra.mxu0 0.0
    %1102 = vmatpush.xpose.msra.mxu0 0.0
    %1103 = vmatpush.xpose.msra.mxu0 0.0
    %1104 = vmatpush.xpose.msra.mxu0 0.0
    %1105 = vmatpush.xpose.msra.mxu0 0.0
    %1106 = vmatpush.xpose.msra.mxu0 0.0
    %1107 = vmatpush.xpose.msra.mxu0 0.0
    %1108 = vmatpush.xpose.msra.mxu0 0.0
    %1109 = vmatpush.xpose.msra.mxu0 0.0
    %1110 = vmatpush.xpose.msra.mxu0 0.0
    %1111 = vmatpush.xpose.msra.mxu0 0.0
    %1112 = vmatpush.xpose.msra.mxu0 %v1095
    %1113 = vmatmul.f32.gmra.mxu0 %v1092
    %v1114 = vpop.f32.mrf.mxu0
    %v1115 = vadd.f32 0.0, %v1114
    %1116 = vdwg.mxu0
    %v1117 = vsel %vm908, %v933, -inf
    %1118 = vmax.xlane.f32.xlu0 %v1117
    %v1119 = vpop.xlane.xlu0 %1118
    %v1120 = vsel %vm908, %v959, -inf
    %1121 = vmax.xlane.f32.xlu0 %v1120
    %v1122 = vpop.xlane.xlu0 %1121
    %v1123 = vsel %vm908, %v985, -inf
    %1124 = vmax.xlane.f32.xlu0 %v1123
    %v1125 = vpop.xlane.xlu0 %1124
    %v1126 = vsel %vm908, %v1011, -inf
    %1127 = vmax.xlane.f32.xlu0 %v1126
    %v1128 = vpop.xlane.xlu0 %1127
    %v1129 = vsel %vm908, %v1037, -inf
    %1130 = vmax.xlane.f32.xlu0 %v1129
    %v1131 = vpop.xlane.xlu0 %1130
    %v1132 = vsel %vm908, %v1063, -inf
    %1133 = vmax.xlane.f32.xlu0 %v1132
    %v1134 = vpop.xlane.xlu0 %1133
    %v1135 = vsel %vm908, %v1089, -inf
    %1136 = vmax.xlane.f32.xlu0 %v1135
    %v1137 = vpop.xlane.xlu0 %1136
    %v1138 = vsel %vm908, %v1115, -inf
    %1139 = vmax.xlane.f32.xlu0 %v1138
    %v1140 = vpop.xlane.xlu0 %1139
    %v1141 = vsub.f32 %v933, %v1119
    %v1142 = vsub.f32 %v959, %v1122
    %v1143 = vsub.f32 %v985, %v1125
    %v1144 = vsub.f32 %v1011, %v1128
    %v1145 = vsub.f32 %v1037, %v1131
    %v1146 = vsub.f32 %v1063, %v1134
    %v1147 = vsub.f32 %v1089, %v1137
    %v1148 = vsub.f32 %v1115, %v1140
    %v1149 = vmul.f32 %v1141, 1.442695
    %v1150 = vpow.pop %v1149
    %v1151 = vmul.f32 %v1142, 1.442695
    %v1152 = vpow.pop %v1151
    %v1153 = vmul.f32 %v1143, 1.442695
    %v1154 = vpow.pop %v1153
    %v1155 = vmul.f32 %v1144, 1.442695
    %v1156 = vpow.pop %v1155
    %v1157 = vmul.f32 %v1145, 1.442695
    %v1158 = vpow.pop %v1157
    %v1159 = vmul.f32 %v1146, 1.442695
    %v1160 = vpow.pop %v1159
    %v1161 = vmul.f32 %v1147, 1.442695
    %v1162 = vpow.pop %v1161
    %v1163 = vmul.f32 %v1148, 1.442695
    %v1164 = vpow.pop %v1163
    %v1165 = vsel %vm908, %v1150, 0.0
    %1166 = vadd.xlane.f32.xlu0 %v1165
    %v1167 = vpop.xlane.xlu0 %1166
    %v1168 = vsel %vm908, %v1152, 0.0
    %1169 = vadd.xlane.f32.xlu0 %v1168
    %v1170 = vpop.xlane.xlu0 %1169
    %v1171 = vsel %vm908, %v1154, 0.0
    %1172 = vadd.xlane.f32.xlu0 %v1171
    %v1173 = vpop.xlane.xlu0 %1172
    %v1174 = vsel %vm908, %v1156, 0.0
    %1175 = vadd.xlane.f32.xlu0 %v1174
    %v1176 = vpop.xlane.xlu0 %1175
    %v1177 = vsel %vm908, %v1158, 0.0
    %1178 = vadd.xlane.f32.xlu0 %v1177
    %v1179 = vpop.xlane.xlu0 %1178
    %v1180 = vsel %vm908, %v1160, 0.0
    %1181 = vadd.xlane.f32.xlu0 %v1180
    %v1182 = vpop.xlane.xlu0 %1181
    %v1183 = vsel %vm908, %v1162, 0.0
    %1184 = vadd.xlane.f32.xlu0 %v1183
    %v1185 = vpop.xlane.xlu0 %1184
    %v1186 = vsel %vm908, %v1164, 0.0
    %1187 = vadd.xlane.f32.xlu0 %v1186
    %v1188 = vpop.xlane.xlu0 %1187
    %v1190 = vsel %vm908, %v1150, 0
    %1192 = vmatpush.msra.mxu0 0.0
    %1193 = vmatpush.msra.mxu0 0.0
    %1194 = vmatpush.msra.mxu0 0.0
    %1195 = vmatpush.msra.mxu0 0.0
    %1196 = vmatpush.msra.mxu0 0.0
    %1197 = vmatpush.msra.mxu0 0.0
    %1198 = vmatpush.msra.mxu0 0.0
    %1199 = vmatpush.msra.mxu0 0.0
    %1200 = vmatpush.msra.mxu0 0.0
    %1201 = vmatpush.msra.mxu0 0.0
    %1202 = vmatpush.msra.mxu0 0.0
    %1203 = vmatpush.msra.mxu0 0.0
    %1204 = vmatpush.msra.mxu0 0.0
    %1205 = vmatpush.msra.mxu0 0.0
    %1206 = vmatpush.msra.mxu0 0.0
    %1207 = vmatpush.msra.mxu0 %v789
    %1208 = vmatmul.f32.gmra.mxu0 %v1190
    %v1209 = vpop.f32.mrf.mxu0
    %v1210 = vadd.f32 0.0, %v1209
    %1211 = vdwg.mxu0
    %v1213 = vsel %vm908, %v1152, 0
    %1215 = vmatpush.msra.mxu0 0.0
    %1216 = vmatpush.msra.mxu0 0.0
    %1217 = vmatpush.msra.mxu0 0.0
    %1218 = vmatpush.msra.mxu0 0.0
    %1219 = vmatpush.msra.mxu0 0.0
    %1220 = vmatpush.msra.mxu0 0.0
    %1221 = vmatpush.msra.mxu0 0.0
    %1222 = vmatpush.msra.mxu0 0.0
    %1223 = vmatpush.msra.mxu0 0.0
    %1224 = vmatpush.msra.mxu0 0.0
    %1225 = vmatpush.msra.mxu0 0.0
    %1226 = vmatpush.msra.mxu0 0.0
    %1227 = vmatpush.msra.mxu0 0.0
    %1228 = vmatpush.msra.mxu0 0.0
    %1229 = vmatpush.msra.mxu0 0.0
    %1230 = vmatpush.msra.mxu0 %v901
    %1231 = vmatmul.f32.gmra.mxu0 %v1213
    %v1232 = vpop.f32.mrf.mxu0
    %v1233 = vadd.f32 0.0, %v1232
    %1234 = vdwg.mxu0
    %v1236 = vsel %vm908, %v1154, 0
    %1238 = vmatpush.msra.mxu0 0.0
    %1239 = vmatpush.msra.mxu0 0.0
    %1240 = vmatpush.msra.mxu0 0.0
    %1241 = vmatpush.msra.mxu0 0.0
    %1242 = vmatpush.msra.mxu0 0.0
    %1243 = vmatpush.msra.mxu0 0.0
    %1244 = vmatpush.msra.mxu0 0.0
    %1245 = vmatpush.msra.mxu0 0.0
    %1246 = vmatpush.msra.mxu0 0.0
    %1247 = vmatpush.msra.mxu0 0.0
    %1248 = vmatpush.msra.mxu0 0.0
    %1249 = vmatpush.msra.mxu0 0.0
    %1250 = vmatpush.msra.mxu0 0.0
    %1251 = vmatpush.msra.mxu0 0.0
    %1252 = vmatpush.msra.mxu0 0.0
    %1253 = vmatpush.msra.mxu0 %v791
    %1254 = vmatmul.f32.gmra.mxu0 %v1236
    %v1255 = vpop.f32.mrf.mxu0
    %v1256 = vadd.f32 0.0, %v1255
    %1257 = vdwg.mxu0
    %v1259 = vsel %vm908, %v1156, 0
    %1261 = vmatpush.msra.mxu0 0.0
    %1262 = vmatpush.msra.mxu0 0.0
    %1263 = vmatpush.msra.mxu0 0.0
    %1264 = vmatpush.msra.mxu0 0.0
    %1265 = vmatpush.msra.mxu0 0.0
    %1266 = vmatpush.msra.mxu0 0.0
    %1267 = vmatpush.msra.mxu0 0.0
    %1268 = vmatpush.msra.mxu0 0.0
    %1269 = vmatpush.msra.mxu0 0.0
    %1270 = vmatpush.msra.mxu0 0.0
    %1271 = vmatpush.msra.mxu0 0.0
    %1272 = vmatpush.msra.mxu0 0.0
    %1273 = vmatpush.msra.mxu0 0.0
    %1274 = vmatpush.msra.mxu0 0.0
    %1275 = vmatpush.msra.mxu0 0.0
    %1276 = vmatpush.msra.mxu0 %v903
    %1277 = vmatmul.f32.gmra.mxu0 %v1259
    %v1278 = vpop.f32.mrf.mxu0
    %v1279 = vadd.f32 0.0, %v1278
    %1280 = vdwg.mxu0
    %v1282 = vsel %vm908, %v1158, 0
    %1284 = vmatpush.msra.mxu0 0.0
    %1285 = vmatpush.msra.mxu0 0.0
    %1286 = vmatpush.msra.mxu0 0.0
    %1287 = vmatpush.msra.mxu0 0.0
    %1288 = vmatpush.msra.mxu0 0.0
    %1289 = vmatpush.msra.mxu0 0.0
    %1290 = vmatpush.msra.mxu0 0.0
    %1291 = vmatpush.msra.mxu0 0.0
    %1292 = vmatpush.msra.mxu0 0.0
    %1293 = vmatpush.msra.mxu0 0.0
    %1294 = vmatpush.msra.mxu0 0.0
    %1295 = vmatpush.msra.mxu0 0.0
    %1296 = vmatpush.msra.mxu0 0.0
    %1297 = vmatpush.msra.mxu0 0.0
    %1298 = vmatpush.msra.mxu0 0.0
    %1299 = vmatpush.msra.mxu0 %v793
    %1300 = vmatmul.f32.gmra.mxu0 %v1282
    %v1301 = vpop.f32.mrf.mxu0
    %v1302 = vadd.f32 0.0, %v1301
    %1303 = vdwg.mxu0
    %v1305 = vsel %vm908, %v1160, 0
    %1307 = vmatpush.msra.mxu0 0.0
    %1308 = vmatpush.msra.mxu0 0.0
    %1309 = vmatpush.msra.mxu0 0.0
    %1310 = vmatpush.msra.mxu0 0.0
    %1311 = vmatpush.msra.mxu0 0.0
    %1312 = vmatpush.msra.mxu0 0.0
    %1313 = vmatpush.msra.mxu0 0.0
    %1314 = vmatpush.msra.mxu0 0.0
    %1315 = vmatpush.msra.mxu0 0.0
    %1316 = vmatpush.msra.mxu0 0.0
    %1317 = vmatpush.msra.mxu0 0.0
    %1318 = vmatpush.msra.mxu0 0.0
    %1319 = vmatpush.msra.mxu0 0.0
    %1320 = vmatpush.msra.mxu0 0.0
    %1321 = vmatpush.msra.mxu0 0.0
    %1322 = vmatpush.msra.mxu0 %v905
    %1323 = vmatmul.f32.gmra.mxu0 %v1305
    %v1324 = vpop.f32.mrf.mxu0
    %v1325 = vadd.f32 0.0, %v1324
    %1326 = vdwg.mxu0
    %v1328 = vsel %vm908, %v1162, 0
    %1330 = vmatpush.msra.mxu0 0.0
    %1331 = vmatpush.msra.mxu0 0.0
    %1332 = vmatpush.msra.mxu0 0.0
    %1333 = vmatpush.msra.mxu0 0.0
    %1334 = vmatpush.msra.mxu0 0.0
    %1335 = vmatpush.msra.mxu0 0.0
    %1336 = vmatpush.msra.mxu0 0.0
    %1337 = vmatpush.msra.mxu0 0.0
    %1338 = vmatpush.msra.mxu0 0.0
    %1339 = vmatpush.msra.mxu0 0.0
    %1340 = vmatpush.msra.mxu0 0.0
    %1341 = vmatpush.msra.mxu0 0.0
    %1342 = vmatpush.msra.mxu0 0.0
    %1343 = vmatpush.msra.mxu0 0.0
    %1344 = vmatpush.msra.mxu0 0.0
    %1345 = vmatpush.msra.mxu0 %v795
    %1346 = vmatmul.f32.gmra.mxu0 %v1328
    %v1347 = vpop.f32.mrf.mxu0
    %v1348 = vadd.f32 0.0, %v1347
    %1349 = vdwg.mxu0
    %v1351 = vsel %vm908, %v1164, 0
    %1353 = vmatpush.msra.mxu0 0.0
    %1354 = vmatpush.msra.mxu0 0.0
    %1355 = vmatpush.msra.mxu0 0.0
    %1356 = vmatpush.msra.mxu0 0.0
    %1357 = vmatpush.msra.mxu0 0.0
    %1358 = vmatpush.msra.mxu0 0.0
    %1359 = vmatpush.msra.mxu0 0.0
    %1360 = vmatpush.msra.mxu0 0.0
    %1361 = vmatpush.msra.mxu0 0.0
    %1362 = vmatpush.msra.mxu0 0.0
    %1363 = vmatpush.msra.mxu0 0.0
    %1364 = vmatpush.msra.mxu0 0.0
    %1365 = vmatpush.msra.mxu0 0.0
    %1366 = vmatpush.msra.mxu0 0.0
    %1367 = vmatpush.msra.mxu0 0.0
    %1368 = vmatpush.msra.mxu0 %v907
    %1369 = vmatmul.f32.gmra.mxu0 %v1351
    %v1370 = vpop.f32.mrf.mxu0
    %v1371 = vadd.f32 0.0, %v1370
    %1372 = vdwg.mxu0
    %v1373 = vrcp.pop %v1167
    %v1374 = vrcp.pop %v1170
    %v1375 = vrcp.pop %v1173
    %v1376 = vrcp.pop %v1176
    %v1377 = vrcp.pop %v1179
    %v1378 = vrcp.pop %v1182
    %v1379 = vrcp.pop %v1185
    %v1380 = vrcp.pop %v1188
    %v1381 = vmul.f32 %v1210, %v1373
    %v1382 = vmul.f32 %v1233, %v1374
    %v1383 = vmul.f32 %v1256, %v1375
    %v1384 = vmul.f32 %v1279, %v1376
    %v1385 = vmul.f32 %v1302, %v1377
    %v1386 = vmul.f32 %v1325, %v1378
    %v1387 = vmul.f32 %v1348, %v1379
    %v1388 = vmul.f32 %v1371, %v1380
    %v1389 = vrot.slane %v1385, 4
    %v1390 = vsel %vm196, %v1389, %v1381
    %v1391 = vrot.slane %v1381, 4
    %v1392 = vsel %vm196, %v1385, %v1391
    %v1394 = vunpack.c.l.s4 1983009808
    %v1395 = vunpack.c.0.s8 %v1394
    %v1396 = vperm.slane %v1390, %v1395
    %v1398 = vunpack.c.l.s4 1983009808
    %v1399 = vunpack.c.0.s8 %v1398
    %v1400 = vperm.slane %v1392, %v1399
    %v1401 = vrot.slane %v1387, 4
    %v1402 = vsel %vm196, %v1401, %v1383
    %v1403 = vrot.slane %v1383, 4
    %v1404 = vsel %vm196, %v1387, %v1403
    %v1406 = vunpack.c.l.s4 1983009808
    %v1407 = vunpack.c.0.s8 %v1406
    %v1408 = vperm.slane %v1402, %v1407
    %v1410 = vunpack.c.l.s4 1983009808
    %v1411 = vunpack.c.0.s8 %v1410
    %v1412 = vperm.slane %v1404, %v1411
    %v1413 = vrot.slane %v1408, 4
    %v1414 = vsel %vm196, %v1413, %v1396
    %v1415 = vrot.slane %v1396, 4
    %v1416 = vsel %vm196, %v1408, %v1415
    %v1418 = vunpack.c.l.s4 1934713408
    %v1419 = vunpack.c.0.s8 %v1418
    %v1420 = vperm.slane %v1414, %v1419
    %v1422 = vunpack.c.l.s4 1934713408
    %v1423 = vunpack.c.0.s8 %v1422
    %v1424 = vperm.slane %v1416, %v1423
    %v1425 = vrot.slane %v1412, 4
    %v1426 = vsel %vm196, %v1425, %v1400
    %v1427 = vrot.slane %v1400, 4
    %v1428 = vsel %vm196, %v1412, %v1427
    %v1430 = vunpack.c.l.s4 1934713408
    %v1431 = vunpack.c.0.s8 %v1430
    %v1432 = vperm.slane %v1426, %v1431
    %v1434 = vunpack.c.l.s4 1934713408
    %v1435 = vunpack.c.0.s8 %v1434
    %v1436 = vperm.slane %v1428, %v1435
    %v1437 = vrot.slane %v1420, 4
    %v1438 = vsel %vm196, 0.0, %v1437
    %v1439 = vrot.slane %v1424, 4
    %v1440 = vsel %vm196, 0.0, %v1439
    %v1441 = vrot.slane %v1432, 4
    %v1442 = vsel %vm196, 0.0, %v1441
    %v1443 = vrot.slane %v1436, 4
    %v1444 = vsel %vm196, 0.0, %v1443
    %v1445 = vrot.slane %v1386, 4
    %v1446 = vsel %vm196, %v1445, %v1382
    %v1447 = vrot.slane %v1382, 4
    %v1448 = vsel %vm196, %v1386, %v1447
    %v1450 = vunpack.c.l.s4 1983009808
    %v1451 = vunpack.c.0.s8 %v1450
    %v1452 = vperm.slane %v1446, %v1451
    %v1454 = vunpack.c.l.s4 1983009808
    %v1455 = vunpack.c.0.s8 %v1454
    %v1456 = vperm.slane %v1448, %v1455
    %v1457 = vrot.slane %v1388, 4
    %v1458 = vsel %vm196, %v1457, %v1384
    %v1459 = vrot.slane %v1384, 4
    %v1460 = vsel %vm196, %v1388, %v1459
    %v1462 = vunpack.c.l.s4 1983009808
    %v1463 = vunpack.c.0.s8 %v1462
    %v1464 = vperm.slane %v1458, %v1463
    %v1466 = vunpack.c.l.s4 1983009808
    %v1467 = vunpack.c.0.s8 %v1466
    %v1468 = vperm.slane %v1460, %v1467
    %v1469 = vrot.slane %v1464, 4
    %v1470 = vsel %vm196, %v1469, %v1452
    %v1471 = vrot.slane %v1452, 4
    %v1472 = vsel %vm196, %v1464, %v1471
    %v1474 = vunpack.c.l.s4 1934713408
    %v1475 = vunpack.c.0.s8 %v1474
    %v1476 = vperm.slane %v1470, %v1475
    %v1478 = vunpack.c.l.s4 1934713408
    %v1479 = vunpack.c.0.s8 %v1478
    %v1480 = vperm.slane %v1472, %v1479
    %v1481 = vrot.slane %v1468, 4
    %v1482 = vsel %vm196, %v1481, %v1456
    %v1483 = vrot.slane %v1456, 4
    %v1484 = vsel %vm196, %v1468, %v1483
    %v1486 = vunpack.c.l.s4 1934713408
    %v1487 = vunpack.c.0.s8 %v1486
    %v1488 = vperm.slane %v1482, %v1487
    %v1490 = vunpack.c.l.s4 1934713408
    %v1491 = vunpack.c.0.s8 %v1490
    %v1492 = vperm.slane %v1484, %v1491
    %v1493 = vrot.slane %v1476, 4
    %v1494 = vsel %vm196, 0.0, %v1493
    %v1495 = vrot.slane %v1480, 4
    %v1496 = vsel %vm196, 0.0, %v1495
    %v1497 = vrot.slane %v1488, 4
    %v1498 = vsel %vm196, 0.0, %v1497
    %v1499 = vrot.slane %v1492, 4
    %v1500 = vsel %vm196, 0.0, %v1499
    %v1501 = vsel %vm196, %v1439, %v1420
    %v1503 = vunpack.c.l.s4 1983009808
    %v1504 = vunpack.c.0.s8 %v1503
    %v1505 = vperm.slane %v1501, %v1504
    %v1506 = vrot.slane %v1440, 4
    %v1507 = vsel %vm196, %v1506, %v1438
    %v1509 = vunpack.c.l.s4 1983009808
    %v1510 = vunpack.c.0.s8 %v1509
    %v1511 = vperm.slane %v1507, %v1510
    %v1512 = vsel %vm196, %v1443, %v1432
    %v1514 = vunpack.c.l.s4 1983009808
    %v1515 = vunpack.c.0.s8 %v1514
    %v1516 = vperm.slane %v1512, %v1515
    %v1517 = vrot.slane %v1444, 4
    %v1518 = vsel %vm196, %v1517, %v1442
    %v1520 = vunpack.c.l.s4 1983009808
    %v1521 = vunpack.c.0.s8 %v1520
    %v1522 = vperm.slane %v1518, %v1521
    %v1523 = vrot.slane %v1511, 4
    %v1524 = vsel %vm196, %v1523, %v1505
    %v1525 = vrot.slane %v1505, 4
    %v1526 = vsel %vm196, %v1511, %v1525
    %v1528 = vunpack.c.l.s4 1934713408
    %v1529 = vunpack.c.0.s8 %v1528
    %v1530 = vperm.slane %v1524, %v1529
    %v1532 = vunpack.c.l.s4 1934713408
    %v1533 = vunpack.c.0.s8 %v1532
    %v1534 = vperm.slane %v1526, %v1533
    %v1535 = vrot.slane %v1522, 4
    %v1536 = vsel %vm196, %v1535, %v1516
    %v1537 = vrot.slane %v1516, 4
    %v1538 = vsel %vm196, %v1522, %v1537
    %v1540 = vunpack.c.l.s4 1934713408
    %v1541 = vunpack.c.0.s8 %v1540
    %v1542 = vperm.slane %v1536, %v1541
    %v1544 = vunpack.c.l.s4 1934713408
    %v1545 = vunpack.c.0.s8 %v1544
    %v1546 = vperm.slane %v1538, %v1545
    %v1547 = vrot.slane %v1542, 4
    %v1548 = vsel %vm196, %v1547, %v1530
    %v1549 = vrot.slane %v1530, 4
    %v1550 = vsel %vm196, %v1542, %v1549
    %v1551 = vrot.slane %v1546, 4
    %v1552 = vsel %vm196, %v1551, %v1534
    %v1553 = vrot.slane %v1534, 4
    %v1554 = vsel %vm196, %v1546, %v1553
    %v1555 = vsel %vm196, %v1495, %v1476
    %v1557 = vunpack.c.l.s4 1983009808
    %v1558 = vunpack.c.0.s8 %v1557
    %v1559 = vperm.slane %v1555, %v1558
    %v1560 = vrot.slane %v1496, 4
    %v1561 = vsel %vm196, %v1560, %v1494
    %v1563 = vunpack.c.l.s4 1983009808
    %v1564 = vunpack.c.0.s8 %v1563
    %v1565 = vperm.slane %v1561, %v1564
    %v1566 = vsel %vm196, %v1499, %v1488
    %v1568 = vunpack.c.l.s4 1983009808
    %v1569 = vunpack.c.0.s8 %v1568
    %v1570 = vperm.slane %v1566, %v1569
    %v1571 = vrot.slane %v1500, 4
    %v1572 = vsel %vm196, %v1571, %v1498
    %v1574 = vunpack.c.l.s4 1983009808
    %v1575 = vunpack.c.0.s8 %v1574
    %v1576 = vperm.slane %v1572, %v1575
    %v1577 = vrot.slane %v1565, 4
    %v1578 = vsel %vm196, %v1577, %v1559
    %v1579 = vrot.slane %v1559, 4
    %v1580 = vsel %vm196, %v1565, %v1579
    %v1582 = vunpack.c.l.s4 1934713408
    %v1583 = vunpack.c.0.s8 %v1582
    %v1584 = vperm.slane %v1578, %v1583
    %v1586 = vunpack.c.l.s4 1934713408
    %v1587 = vunpack.c.0.s8 %v1586
    %v1588 = vperm.slane %v1580, %v1587
    %v1589 = vrot.slane %v1576, 4
    %v1590 = vsel %vm196, %v1589, %v1570
    %v1591 = vrot.slane %v1570, 4
    %v1592 = vsel %vm196, %v1576, %v1591
    %v1594 = vunpack.c.l.s4 1934713408
    %v1595 = vunpack.c.0.s8 %v1594
    %v1596 = vperm.slane %v1590, %v1595
    %v1598 = vunpack.c.l.s4 1934713408
    %v1599 = vunpack.c.0.s8 %v1598
    %v1600 = vperm.slane %v1592, %v1599
    %v1601 = vrot.slane %v1596, 4
    %v1602 = vsel %vm196, %v1601, %v1584
    %v1603 = vrot.slane %v1584, 4
    %v1604 = vsel %vm196, %v1596, %v1603
    %v1605 = vrot.slane %v1600, 4
    %v1606 = vsel %vm196, %v1605, %v1588
    %v1607 = vrot.slane %v1588, 4
    %v1608 = vsel %vm196, %v1600, %v1607
    %1611 = vrot.lane.b32.xlu0 %v1550, 8
    %v1612 = vpop.permute.xlu0 %1611
    %1613 = vrot.lane.b32.xlu0 %v1604, 8
    %v1614 = vpop.permute.xlu0 %1613
    %1619 = vrot.lane.b32.xlu0 %v1552, 16
    %v1620 = vpop.permute.xlu0 %1619
    %1621 = vrot.lane.b32.xlu0 %v1606, 16
    %v1622 = vpop.permute.xlu0 %1621
    %1627 = vrot.lane.b32.xlu0 %v1554, 24
    %v1628 = vpop.permute.xlu0 %1627
    %1629 = vrot.lane.b32.xlu0 %v1608, 24
    %v1630 = vpop.permute.xlu0 %1629
    %v1633 = vsel %vm908, %v1548, %v1612
    %v1634 = vsel %vm908, %v1602, %v1614
    %vm1635 = vcmask 130048
    %v1636 = vsel %vm1635, %v1633, %v1620
    %v1637 = vsel %vm1635, %v1634, %v1622
    %vm1638 = vcmask 195584
    %v1639 = vsel %vm1638, %v1636, %v1628
    %v1640 = vsel %vm1638, %v1637, %v1630
    %v1641 = vld [vmem:[#allocation10] sm:$0xff]
    %v1642 = vld [vmem:[#allocation10 + $0x8] sm:$0xff]
    %v1643 = vld [vmem:[#allocation10 + $0x10] sm:$0xff]
    %v1644 = vld [vmem:[#allocation10 + $0x18] sm:$0xff]
    %v1645 = vld [vmem:[%s5] sm:$0x1]
    %v1647 = vperm.slane %v1645, 0
    %v1650 = vsel %vm110, %v1639, 0
    %v1653 = vsel %vm110, %v1640, 0
    %1655 = vmatpush.msra.mxu0 0.0
    %1656 = vmatpush.msra.mxu0 0.0
    %1657 = vmatpush.msra.mxu0 0.0
    %1658 = vmatpush.msra.mxu0 0.0
    %1659 = vmatpush.msra.mxu0 0.0
    %1660 = vmatpush.msra.mxu0 0.0
    %1661 = vmatpush.msra.mxu0 0.0
    %1662 = vmatpush.msra.mxu0 0.0
    %1663 = vmatpush.msra.mxu0 0.0
    %1664 = vmatpush.msra.mxu0 0.0
    %1665 = vmatpush.msra.mxu0 0.0
    %1666 = vmatpush.msra.mxu0 0.0
    %1667 = vmatpush.msra.mxu0 %v1644
    %1668 = vmatpush.msra.mxu0 %v1643
    %1669 = vmatpush.msra.mxu0 %v1642
    %1670 = vmatpush.msra.mxu0 %v1641
    %1671 = vmatmul.f32.gmra.mxu0 %v1650
    %v1672 = vpop.f32.mrf.mxu0
    %v1673 = vadd.f32 %v1647, %v1672
    %1674 = vmatmul.f32.gmra.mxu0 %v1653
    %v1675 = vpop.f32.mrf.mxu0
    %v1676 = vadd.f32 %v1647, %v1675
    %1677 = vdwg.mxu0
    %1678 = vst.msk [vmem:[#allocation11] sm:$0xff] %vm110, %v1673
    %1679 = vst.msk [vmem:[#allocation11 + $0x8] sm:$0xff] %vm110, %v1676
    // Predicated region
    $region46: #{tpu_custom_call.1} parent=1 // pred_check
      _
    $region47: #{tpu_custom_call.1} parent=1 // pred_check_branch
      %1681 = sbr.rel (0) target = $region49
    $region48: #{tpu_custom_call.1} parent=1 // pred_region
      %1683 = vsyncadd [#allocation4], 0
      %s1684 = sshll.u32 [#allocation11], 4
      %s1685 = int_to_ptr.vmem [resolvable:$true] %s1684
      %s1686 = sshll.u32 %s6, 4
      %s1687 = int_to_ptr.hbm [resolvable:$true] %s1686
      %1692 = dma.vmem_to_hbm [thread:$0]  %s1685, 256, %s1687, [#allocation4], 128, 128, 8
    $region49: #{tpu_custom_call.1} parent=1 // pred_fallthru
      _
    // Predicated region
    $region50: #{tpu_custom_call.1} parent=1 // pred_check
      _
    $region51: #{tpu_custom_call.1} parent=1 // pred_check_branch
      %1694 = sbr.rel (0) target = $region53
    $region52: #{tpu_custom_call.1} parent=1 // pred_region
      %1696 = dma.done [#allocation4], 256
    $region53: #{tpu_custom_call.1} parent=1 // pred_fallthru
      _
    %1697 = vsyncpa [#allocation3], 1
    %1698 = vsyncpa [#allocation6], 1
    %1699 = vsyncpa [#allocation9], 1
    %1700 = vsyncpa [#allocation4], 1

// kernel: tpu_custom_call.1
$region0: #{tpu_custom_call.1}
  #allocation0 [shape = 'u32[]', space=smem, size = 0x4, offset = 0x4, fixed_abs, tag = 'smem constant byte address 0x4 - core index']
  #allocation1 [shape = 'u32[72,128]{1,0:T(1,128)}', space=vmem, size = 0x9000, scoped, tag = 'internal scratch']
  %s0 = inlined_call_operand.hbm [shape: f32[2,8,32], index: 0, kind: input, shape index: {}]
  %s1 = inlined_call_operand.hbm [shape: f32[2,8,32], index: 1, kind: input, shape index: {}]
  %s2 = inlined_call_operand.hbm [shape: f32[32,32], index: 2, kind: input, shape index: {}]
  %s3 = inlined_call_operand.hbm [shape: f32[32,64], index: 3, kind: input, shape index: {}]
  %s4 = inlined_call_operand.hbm [shape: f32[32,32], index: 4, kind: input, shape index: {}]
  %s5 = inlined_call_operand.vmem [shape: f32[1,32], index: 5, kind: input, shape index: {}]
  %s6 = inlined_call_operand.hbm [shape: f32[2,8,32], index: 6, kind: output, shape index: {}]
  %s7 = sld [smem:[#allocation0]]
  $region54: #{tpu_custom_call.1} parent=0
    _
  %s9 = ssub.s32 1, %s7
  %s10 = scalar_select 0, %s9, %s7
  $region1: #{tpu_custom_call.1} parent=0
    #allocation2 [shape = 'u8[8192]{0}', space=vmem, size = 0x2000, scoped, tag = 'input window, operand 0, single buffered']
    #allocation3 [shape = 's32[1]{0}', space=sflag, size = 0x4, scoped, tag = 'scoped memory for tpu_custom_call.1']
    #allocation4 [shape = 's32[1]{0}', space=sflag, size = 0x4, scoped, tag = 'scoped memory for tpu_custom_call.1']
    #allocation5 [shape = 'u8[8192]{0}', space=vmem, size = 0x2000, scoped, tag = 'input window, operand 1, single buffered']
    #allocation6 [shape = 's32[1]{0}', space=sflag, size = 0x4, scoped, tag = 'scoped memory for tpu_custom_call.1']
    #allocation7 [shape = 'u8[16384]{0}', space=vmem, size = 0x4000, scoped, tag = 'input window, operand 2, single buffered']
    #allocation8 [shape = 'u8[16384]{0}', space=vmem, size = 0x4000, scoped, tag = 'input window, operand 3, single buffered']
    #allocation9 [shape = 's32[1]{0}', space=sflag, size = 0x4, scoped, tag = 'scoped memory for tpu_custom_call.1']
    #allocation10 [shape = 'u8[16384]{0}', space=vmem, size = 0x4000, scoped, tag = 'input window, operand 4, single buffered']
    #allocation11 [shape = 'u8[8192]{0}', space=vmem, size = 0x2000, scoped, tag = 'output window, operand 0, single buffered']
    %11 = vsyncpa [#allocation3], 0
    %12 = vsyncpa [#allocation6], 0
    %13 = vsyncpa [#allocation9], 0
    %14 = vsyncpa [#allocation4], 0
    // Predicated region
    $region2: #{tpu_custom_call.1} parent=1 // pred_check
      _
    $region3: #{tpu_custom_call.1} parent=1 // pred_check_branch
      %16 = sbr.rel (0) target = $region5
    $region4: #{tpu_custom_call.1} parent=1 // pred_region
      %18 = vsyncadd [#allocation3], 0
      %s19 = sshll.u32 %s0, 4
      %s20 = int_to_ptr.hbm [resolvable:$true] %s19
      %s21 = sshll.u32 [#allocation2], 4
      %s22 = int_to_ptr.vmem [resolvable:$true] %s21
      %27 = dma.hbm_to_vmem [thread:$0]  %s20, 256, %s22, [#allocation3], 128, 128, 8
    $region5: #{tpu_custom_call.1} parent=1 // pred_fallthru
      _
    // Predicated region
    $region6: #{tpu_custom_call.1} parent=1 // pred_check
      _
    $region7: #{tpu_custom_call.1} parent=1 // pred_check_branch
      %29 = sbr.rel (0) target = $region9
    $region8: #{tpu_custom_call.1} parent=1 // pred_region
      %31 = vsyncadd [#allocation6], 0
      %s32 = sshll.u32 %s1, 4
      %s33 = int_to_ptr.hbm [resolvable:$true] %s32
      %s34 = sshll.u32 [#allocation5], 4
      %s35 = int_to_ptr.vmem [resolvable:$true] %s34
      %40 = dma.hbm_to_vmem [thread:$0]  %s33, 256, %s35, [#allocation6], 128, 128, 8
    $region9: #{tpu_custom_call.1} parent=1 // pred_fallthru
      _
    // Predicated region
    $region10: #{tpu_custom_call.1} parent=1 // pred_check
      _
    $region11: #{tpu_custom_call.1} parent=1 // pred_check_branch
      %42 = sbr.rel (0) target = $region13
    $region12: #{tpu_custom_call.1} parent=1 // pred_region
      %44 = vsyncadd [#allocation6], 0
      %s45 = sshll.u32 %s2, 4
      %s46 = int_to_ptr.hbm [resolvable:$true] %s45
      %s47 = sshll.u32 [#allocation7], 4
      %s48 = int_to_ptr.vmem [resolvable:$true] %s47
      %53 = dma.hbm_to_vmem [thread:$0]  %s46, 512, %s48, [#allocation6], 128, 128, 8
    $region13: #{tpu_custom_call.1} parent=1 // pred_fallthru
      _
    // Predicated region
    $region14: #{tpu_custom_call.1} parent=1 // pred_check
      _
    $region15: #{tpu_custom_call.1} parent=1 // pred_check_branch
      %55 = sbr.rel (0) target = $region17
    $region16: #{tpu_custom_call.1} parent=1 // pred_region
      %57 = vsyncadd [#allocation9], 0
      %s58 = sshll.u32 %s3, 4
      %s59 = int_to_ptr.hbm [resolvable:$true] %s58
      %s60 = sshll.u32 [#allocation8], 4
      %s61 = int_to_ptr.vmem [resolvable:$true] %s60
      %66 = dma.hbm_to_vmem [thread:$0]  %s59, 512, %s61, [#allocation9], 128, 128, 8
    $region17: #{tpu_custom_call.1} parent=1 // pred_fallthru
      _
    // Predicated region
    $region18: #{tpu_custom_call.1} parent=1 // pred_check
      _
    $region19: #{tpu_custom_call.1} parent=1 // pred_check_branch
      %68 = sbr.rel (0) target = $region21
    $region20: #{tpu_custom_call.1} parent=1 // pred_region
      %70 = vsyncadd [#allocation9], 0
      %s71 = sshll.u32 %s4, 4
      %s72 = int_to_ptr.hbm [resolvable:$true] %s71
      %s73 = sshll.u32 [#allocation10], 4
      %s74 = int_to_ptr.vmem [resolvable:$true] %s73
      %79 = dma.hbm_to_vmem [thread:$0]  %s72, 512, %s74, [#allocation9], 128, 128, 8
    $region21: #{tpu_custom_call.1} parent=1 // pred_fallthru
      _
    // Predicated region
    $region22: #{tpu_custom_call.1} parent=1 // pred_check
      _
    $region23: #{tpu_custom_call.1} parent=1 // pred_check_branch
      %81 = sbr.rel (0) target = $region25
    $region24: #{tpu_custom_call.1} parent=1 // pred_region
      _
    $region25: #{tpu_custom_call.1} parent=1 // pred_fallthru
      _
    // Predicated region
    $region26: #{tpu_custom_call.1} parent=1 // pred_check
      _
    $region27: #{tpu_custom_call.1} parent=1 // pred_check_branch
      %83 = sbr.rel (0) target = $region29
    $region28: #{tpu_custom_call.1} parent=1 // pred_region
      %85 = dma.done [#allocation3], 256
    $region29: #{tpu_custom_call.1} parent=1 // pred_fallthru
      _
    // Predicated region
    $region30: #{tpu_custom_call.1} parent=1 // pred_check
      _
    $region31: #{tpu_custom_call.1} parent=1 // pred_check_branch
      %87 = sbr.rel (0) target = $region33
    $region32: #{tpu_custom_call.1} parent=1 // pred_region
      %89 = dma.done [#allocation6], 256
    $region33: #{tpu_custom_call.1} parent=1 // pred_fallthru
      _
    // Predicated region
    $region34: #{tpu_custom_call.1} parent=1 // pred_check
      _
    $region35: #{tpu_custom_call.1} parent=1 // pred_check_branch
      %91 = sbr.rel (0) target = $region37
    $region36: #{tpu_custom_call.1} parent=1 // pred_region
      %93 = dma.done [#allocation6], 512
    $region37: #{tpu_custom_call.1} parent=1 // pred_fallthru
      _
    // Predicated region
    $region38: #{tpu_custom_call.1} parent=1 // pred_check
      _
    $region39: #{tpu_custom_call.1} parent=1 // pred_check_branch
      %95 = sbr.rel (0) target = $region41
    $region40: #{tpu_custom_call.1} parent=1 // pred_region
      %97 = dma.done [#allocation9], 512
    $region41: #{tpu_custom_call.1} parent=1 // pred_fallthru
      _
    // Predicated region
    $region42: #{tpu_custom_call.1} parent=1 // pred_check
      _
    $region43: #{tpu_custom_call.1} parent=1 // pred_check_branch
      %99 = sbr.rel (0) target = $region45
    $region44: #{tpu_custom_call.1} parent=1 // pred_region
      %101 = dma.done [#allocation9], 512
    $region45: #{tpu_custom_call.1} parent=1 // pred_fallthru
      _
    %v102 = vld [vmem:[#allocation2] sm:$0xff]
    %v103 = vld [vmem:[#allocation2 + $0x8] sm:$0xff]
    %v104 = vld [vmem:[#allocation5] sm:$0xff]
    %v105 = vld [vmem:[#allocation5 + $0x8] sm:$0xff]
    %v106 = vld [vmem:[#allocation7] sm:$0xff]
    %v107 = vld [vmem:[#allocation7 + $0x8] sm:$0xff]
    %v108 = vld [vmem:[#allocation7 + $0x10] sm:$0xff]
    %v109 = vld [vmem:[#allocation7 + $0x18] sm:$0xff]
    %vm110 = vcmask 261120
    %v112 = vsel %vm110, %v102, 0
    %v115 = vsel %vm110, %v103, 0
    %117 = vmatpush.msra.mxu0 0.0
    %118 = vmatpush.msra.mxu0 0.0
    %119 = vmatpush.msra.mxu0 0.0
    %120 = vmatpush.msra.mxu0 0.0
    %121 = vmatpush.msra.mxu0 0.0
    %122 = vmatpush.msra.mxu0 0.0
    %123 = vmatpush.msra.mxu0 0.0
    %124 = vmatpush.msra.mxu0 0.0
    %125 = vmatpush.msra.mxu0 0.0
    %126 = vmatpush.msra.mxu0 0.0
    %127 = vmatpush.msra.mxu0 0.0
    %128 = vmatpush.msra.mxu0 0.0
    %129 = vmatpush.msra.mxu0 %v109
    %130 = vmatpush.msra.mxu0 %v108
    %131 = vmatpush.msra.mxu0 %v107
    %132 = vmatpush.msra.mxu0 %v106
    %133 = vmatmul.f32.gmra.mxu0 %v112
    %v134 = vpop.f32.mrf.mxu0
    %v135 = vadd.f32 0.0, %v134
    %136 = vmatmul.f32.gmra.mxu0 %v115
    %v137 = vpop.f32.mrf.mxu0
    %v138 = vadd.f32 0.0, %v137
    %139 = vdwg.mxu0
    %v140 = vmul.f32 %v135, 0.35355338
    %v141 = vmul.f32 %v138, 0.35355338
    %v142 = vld [vmem:[#allocation8] sm:$0xff]
    %v143 = vld [vmem:[#allocation8 + $0x8] sm:$0xff]
    %v144 = vld [vmem:[#allocation8 + $0x10] sm:$0xff]
    %v145 = vld [vmem:[#allocation8 + $0x18] sm:$0xff]
    %v147 = vsel %vm110, %v104, 0
    %v150 = vsel %vm110, %v105, 0
    %152 = vmatpush.msra.mxu0 0.0
    %153 = vmatpush.msra.mxu0 0.0
    %154 = vmatpush.msra.mxu0 0.0
    %155 = vmatpush.msra.mxu0 0.0
    %156 = vmatpush.msra.mxu0 0.0
    %157 = vmatpush.msra.mxu0 0.0
    %158 = vmatpush.msra.mxu0 0.0
    %159 = vmatpush.msra.mxu0 0.0
    %160 = vmatpush.msra.mxu0 0.0
    %161 = vmatpush.msra.mxu0 0.0
    %162 = vmatpush.msra.mxu0 0.0
    %163 = vmatpush.msra.mxu0 0.0
    %164 = vmatpush.msra.mxu0 %v145
    %165 = vmatpush.msra.mxu0 %v144
    %166 = vmatpush.msra.mxu0 %v143
    %167 = vmatpush.msra.mxu0 %v142
    %168 = vmatmul.f32.gmra.mxu0 %v147
    %v169 = vpop.f32.mrf.mxu0
    %v170 = vadd.f32 0.0, %v169
    %171 = vmatmul.f32.gmra.mxu0 %v150
    %v172 = vpop.f32.mrf.mxu0
    %v173 = vadd.f32 0.0, %v172
    %174 = vdwg.mxu0
    %177 = vrot.lane.b32.xlu0 %v140, 120
    %v178 = vpop.permute.xlu0 %177
    %179 = vrot.lane.b32.xlu0 %v141, 120
    %v180 = vpop.permute.xlu0 %179
    %183 = vrot.lane.b32.xlu0 %v140, 112
    %v184 = vpop.permute.xlu0 %183
    %185 = vrot.lane.b32.xlu0 %v141, 112
    %v186 = vpop.permute.xlu0 %185
    %189 = vrot.lane.b32.xlu0 %v140, 104
    %v190 = vpop.permute.xlu0 %189
    %191 = vrot.lane.b32.xlu0 %v141, 104
    %v192 = vpop.permute.xlu0 %191
    %v195 = vrot.slane %v184, 4
    %vm196 = vcmask 1047556
    %v197 = vsel %vm196, %v195, %v140
    %v198 = vrot.slane %v140, 4
    %v199 = vsel %vm196, %v184, %v198
    %v201 = vunpack.c.l.s4 1983009808
    %v202 = vunpack.c.0.s8 %v201
    %v203 = vperm.slane %v197, %v202
    %v205 = vunpack.c.l.s4 1983009808
    %v206 = vunpack.c.0.s8 %v205
    %v207 = vperm.slane %v199, %v206
    %v208 = vrot.slane %v190, 4
    %v209 = vsel %vm196, %v208, %v178
    %v210 = vrot.slane %v178, 4
    %v211 = vsel %vm196, %v190, %v210
    %v213 = vunpack.c.l.s4 1983009808
    %v214 = vunpack.c.0.s8 %v213
    %v215 = vperm.slane %v209, %v214
    %v217 = vunpack.c.l.s4 1983009808
    %v218 = vunpack.c.0.s8 %v217
    %v219 = vperm.slane %v211, %v218
    %v220 = vrot.slane %v215, 4
    %v221 = vsel %vm196, %v220, %v203
    %v222 = vrot.slane %v203, 4
    %v223 = vsel %vm196, %v215, %v222
    %v225 = vunpack.c.l.s4 1934713408
    %v226 = vunpack.c.0.s8 %v225
    %v227 = vperm.slane %v221, %v226
    %v229 = vunpack.c.l.s4 1934713408
    %v230 = vunpack.c.0.s8 %v229
    %v231 = vperm.slane %v223, %v230
    %v232 = vrot.slane %v219, 4
    %v233 = vsel %vm196, %v232, %v207
    %v234 = vrot.slane %v207, 4
    %v235 = vsel %vm196, %v219, %v234
    %v237 = vunpack.c.l.s4 1934713408
    %v238 = vunpack.c.0.s8 %v237
    %v239 = vperm.slane %v233, %v238
    %v241 = vunpack.c.l.s4 1934713408
    %v242 = vunpack.c.0.s8 %v241
    %v243 = vperm.slane %v235, %v242
    %v244 = vrot.slane %v227, 4
    %v245 = vsel %vm196, 0.0, %v244
    %v246 = vrot.slane %v231, 4
    %v247 = vsel %vm196, 0.0, %v246
    %v248 = vrot.slane %v239, 4
    %v249 = vsel %vm196, 0.0, %v248
    %v250 = vrot.slane %v243, 4
    %v251 = vsel %vm196, 0.0, %v250
    %v252 = vrot.slane %v186, 4
    %v253 = vsel %vm196, %v252, %v141
    %v254 = vrot.slane %v141, 4
    %v255 = vsel %vm196, %v186, %v254
    %v257 = vunpack.c.l.s4 1983009808
    %v258 = vunpack.c.0.s8 %v257
    %v259 = vperm.slane %v253, %v258
    %v261 = vunpack.c.l.s4 1983009808
    %v262 = vunpack.c.0.s8 %v261
    %v263 = vperm.slane %v255, %v262
    %v264 = vrot.slane %v192, 4
    %v265 = vsel %vm196, %v264, %v180
    %v266 = vrot.slane %v180, 4
    %v267 = vsel %vm196, %v192, %v266
    %v269 = vunpack.c.l.s4 1983009808
    %v270 = vunpack.c.0.s8 %v269
    %v271 = vperm.slane %v265, %v270
    %v273 = vunpack.c.l.s4 1983009808
    %v274 = vunpack.c.0.s8 %v273
    %v275 = vperm.slane %v267, %v274
    %v276 = vrot.slane %v271, 4
    %v277 = vsel %vm196, %v276, %v259
    %v278 = vrot.slane %v259, 4
    %v279 = vsel %vm196, %v271, %v278
    %v281 = vunpack.c.l.s4 1934713408
    %v282 = vunpack.c.0.s8 %v281
    %v283 = vperm.slane %v277, %v282
    %v285 = vunpack.c.l.s4 1934713408
    %v286 = vunpack.c.0.s8 %v285
    %v287 = vperm.slane %v279, %v286
    %v288 = vrot.slane %v275, 4
    %v289 = vsel %vm196, %v288, %v263
    %v290 = vrot.slane %v263, 4
    %v291 = vsel %vm196, %v275, %v290
    %v293 = vunpack.c.l.s4 1934713408
    %v294 = vunpack.c.0.s8 %v293
    %v295 = vperm.slane %v289, %v294
    %v297 = vunpack.c.l.s4 1934713408
    %v298 = vunpack.c.0.s8 %v297
    %v299 = vperm.slane %v291, %v298
    %v300 = vrot.slane %v283, 4
    %v301 = vsel %vm196, 0.0, %v300
    %v302 = vrot.slane %v287, 4
    %v303 = vsel %vm196, 0.0, %v302
    %v304 = vrot.slane %v295, 4
    %v305 = vsel %vm196, 0.0, %v304
    %v306 = vrot.slane %v299, 4
    %v307 = vsel %vm196, 0.0, %v306
    %v308 = vsel %vm196, %v246, %v227
    %v310 = vunpack.c.l.s4 1983009808
    %v311 = vunpack.c.0.s8 %v310
    %v312 = vperm.slane %v308, %v311
    %v313 = vrot.slane %v247, 4
    %v314 = vsel %vm196, %v313, %v245
    %v316 = vunpack.c.l.s4 1983009808
    %v317 = vunpack.c.0.s8 %v316
    %v318 = vperm.slane %v314, %v317
    %v319 = vsel %vm196, %v250, %v239
    %v321 = vunpack.c.l.s4 1983009808
    %v322 = vunpack.c.0.s8 %v321
    %v323 = vperm.slane %v319, %v322
    %v324 = vrot.slane %v251, 4
    %v325 = vsel %vm196, %v324, %v249
    %v327 = vunpack.c.l.s4 1983009808
    %v328 = vunpack.c.0.s8 %v327
    %v329 = vperm.slane %v325, %v328
    %v330 = vrot.slane %v318, 4
    %v331 = vsel %vm196, %v330, %v312
    %v332 = vrot.slane %v312, 4
    %v333 = vsel %vm196, %v318, %v332
    %v335 = vunpack.c.l.s4 1934713408
    %v336 = vunpack.c.0.s8 %v335
    %v337 = vperm.slane %v331, %v336
    %v339 = vunpack.c.l.s4 1934713408
    %v340 = vunpack.c.0.s8 %v339
    %v341 = vperm.slane %v333, %v340
    %v342 = vrot.slane %v329, 4
    %v343 = vsel %vm196, %v342, %v323
    %v344 = vrot.slane %v323, 4
    %v345 = vsel %vm196, %v329, %v344
    %v347 = vunpack.c.l.s4 1934713408
    %v348 = vunpack.c.0.s8 %v347
    %v349 = vperm.slane %v343, %v348
    %v351 = vunpack.c.l.s4 1934713408
    %v352 = vunpack.c.0.s8 %v351
    %v353 = vperm.slane %v345, %v352
    %v354 = vrot.slane %v349, 4
    %v355 = vsel %vm196, %v354, %v337
    %v356 = vrot.slane %v337, 4
    %v357 = vsel %vm196, %v349, %v356
    %v358 = vrot.slane %v353, 4
    %v359 = vsel %vm196, %v358, %v341
    %v360 = vrot.slane %v341, 4
    %v361 = vsel %vm196, %v353, %v360
    %v362 = vsel %vm196, %v302, %v283
    %v364 = vunpack.c.l.s4 1983009808
    %v365 = vunpack.c.0.s8 %v364
    %v366 = vperm.slane %v362, %v365
    %v367 = vrot.slane %v303, 4
    %v368 = vsel %vm196, %v367, %v301
    %v370 = vunpack.c.l.s4 1983009808
    %v371 = vunpack.c.0.s8 %v370
    %v372 = vperm.slane %v368, %v371
    %v373 = vsel %vm196, %v306, %v295
    %v375 = vunpack.c.l.s4 1983009808
    %v376 = vunpack.c.0.s8 %v375
    %v377 = vperm.slane %v373, %v376
    %v378 = vrot.slane %v307, 4
    %v379 = vsel %vm196, %v378, %v305
    %v381 = vunpack.c.l.s4 1983009808
    %v382 = vunpack.c.0.s8 %v381
    %v383 = vperm.slane %v379, %v382
    %v384 = vrot.slane %v372, 4
    %v385 = vsel %vm196, %v384, %v366
    %v386 = vrot.slane %v366, 4
    %v387 = vsel %vm196, %v372, %v386
    %v389 = vunpack.c.l.s4 1934713408
    %v390 = vunpack.c.0.s8 %v389
    %v391 = vperm.slane %v385, %v390
    %v393 = vunpack.c.l.s4 1934713408
    %v394 = vunpack.c.0.s8 %v393
    %v395 = vperm.slane %v387, %v394
    %v396 = vrot.slane %v383, 4
    %v397 = vsel %vm196, %v396, %v377
    %v398 = vrot.slane %v377, 4
    %v399 = vsel %vm196, %v383, %v398
    %v401 = vunpack.c.l.s4 1934713408
    %v402 = vunpack.c.0.s8 %v401
    %v403 = vperm.slane %v397, %v402
    %v405 = vunpack.c.l.s4 1934713408
    %v406 = vunpack.c.0.s8 %v405
    %v407 = vperm.slane %v399, %v406
    %v408 = vrot.slane %v403, 4
    %v409 = vsel %vm196, %v408, %v391
    %v410 = vrot.slane %v391, 4
    %v411 = vsel %vm196, %v403, %v410
    %v412 = vrot.slane %v407, 4
    %v413 = vsel %vm196, %v412, %v395
    %v414 = vrot.slane %v395, 4
    %v415 = vsel %vm196, %v407, %v414
    %418 = vrot.lane.b32.xlu0 %v170, 120
    %v419 = vpop.permute.xlu0 %418
    %420 = vrot.lane.b32.xlu0 %v173, 120
    %v421 = vpop.permute.xlu0 %420
    %424 = vrot.lane.b32.xlu0 %v170, 112
    %v425 = vpop.permute.xlu0 %424
    %426 = vrot.lane.b32.xlu0 %v173, 112
    %v427 = vpop.permute.xlu0 %426
    %430 = vrot.lane.b32.xlu0 %v170, 104
    %v431 = vpop.permute.xlu0 %430
    %432 = vrot.lane.b32.xlu0 %v173, 104
    %v433 = vpop.permute.xlu0 %432
    %436 = vrot.lane.b32.xlu0 %v170, 96
    %v437 = vpop.permute.xlu0 %436
    %438 = vrot.lane.b32.xlu0 %v173, 96
    %v439 = vpop.permute.xlu0 %438
    %442 = vrot.lane.b32.xlu0 %v170, 88
    %v443 = vpop.permute.xlu0 %442
    %444 = vrot.lane.b32.xlu0 %v173, 88
    %v445 = vpop.permute.xlu0 %444
    %448 = vrot.lane.b32.xlu0 %v170, 80
    %v449 = vpop.permute.xlu0 %448
    %450 = vrot.lane.b32.xlu0 %v173, 80
    %v451 = vpop.permute.xlu0 %450
    %454 = vrot.lane.b32.xlu0 %v170, 72
    %v455 = vpop.permute.xlu0 %454
    %456 = vrot.lane.b32.xlu0 %v173, 72
    %v457 = vpop.permute.xlu0 %456
    %v460 = vrot.slane %v425, 4
    %v461 = vsel %vm196, %v460, %v170
    %v462 = vrot.slane %v170, 4
    %v463 = vsel %vm196, %v425, %v462
    %v465 = vunpack.c.l.s4 1983009808
    %v466 = vunpack.c.0.s8 %v465
    %v467 = vperm.slane %v461, %v466
    %v469 = vunpack.c.l.s4 1983009808
    %v470 = vunpack.c.0.s8 %v469
    %v471 = vperm.slane %v463, %v470
    %v472 = vrot.slane %v431, 4
    %v473 = vsel %vm196, %v472, %v419
    %v474 = vrot.slane %v419, 4
    %v475 = vsel %vm196, %v431, %v474
    %v477 = vunpack.c.l.s4 1983009808
    %v478 = vunpack.c.0.s8 %v477
    %v479 = vperm.slane %v473, %v478
    %v481 = vunpack.c.l.s4 1983009808
    %v482 = vunpack.c.0.s8 %v481
    %v483 = vperm.slane %v475, %v482
    %v484 = vrot.slane %v449, 4
    %v485 = vsel %vm196, %v484, %v437
    %v486 = vrot.slane %v437, 4
    %v487 = vsel %vm196, %v449, %v486
    %v489 = vunpack.c.l.s4 1983009808
    %v490 = vunpack.c.0.s8 %v489
    %v491 = vperm.slane %v485, %v490
    %v493 = vunpack.c.l.s4 1983009808
    %v494 = vunpack.c.0.s8 %v493
    %v495 = vperm.slane %v487, %v494
    %v496 = vrot.slane %v455, 4
    %v497 = vsel %vm196, %v496, %v443
    %v498 = vrot.slane %v443, 4
    %v499 = vsel %vm196, %v455, %v498
    %v501 = vunpack.c.l.s4 1983009808
    %v502 = vunpack.c.0.s8 %v501
    %v503 = vperm.slane %v497, %v502
    %v505 = vunpack.c.l.s4 1983009808
    %v506 = vunpack.c.0.s8 %v505
    %v507 = vperm.slane %v499, %v506
    %v508 = vrot.slane %v479, 4
    %v509 = vsel %vm196, %v508, %v467
    %v510 = vrot.slane %v467, 4
    %v511 = vsel %vm196, %v479, %v510
    %v513 = vunpack.c.l.s4 1934713408
    %v514 = vunpack.c.0.s8 %v513
    %v515 = vperm.slane %v509, %v514
    %v517 = vunpack.c.l.s4 1934713408
    %v518 = vunpack.c.0.s8 %v517
    %v519 = vperm.slane %v511, %v518
    %v520 = vrot.slane %v483, 4
    %v521 = vsel %vm196, %v520, %v471
    %v522 = vrot.slane %v471, 4
    %v523 = vsel %vm196, %v483, %v522
    %v525 = vunpack.c.l.s4 1934713408
    %v526 = vunpack.c.0.s8 %v525
    %v527 = vperm.slane %v521, %v526
    %v529 = vunpack.c.l.s4 1934713408
    %v530 = vunpack.c.0.s8 %v529
    %v531 = vperm.slane %v523, %v530
    %v532 = vrot.slane %v503, 4
    %v533 = vsel %vm196, %v532, %v491
    %v534 = vrot.slane %v491, 4
    %v535 = vsel %vm196, %v503, %v534
    %v537 = vunpack.c.l.s4 1934713408
    %v538 = vunpack.c.0.s8 %v537
    %v539 = vperm.slane %v533, %v538
    %v541 = vunpack.c.l.s4 1934713408
    %v542 = vunpack.c.0.s8 %v541
    %v543 = vperm.slane %v535, %v542
    %v544 = vrot.slane %v507, 4
    %v545 = vsel %vm196, %v544, %v495
    %v546 = vrot.slane %v495, 4
    %v547 = vsel %vm196, %v507, %v546
    %v549 = vunpack.c.l.s4 1934713408
    %v550 = vunpack.c.0.s8 %v549
    %v551 = vperm.slane %v545, %v550
    %v553 = vunpack.c.l.s4 1934713408
    %v554 = vunpack.c.0.s8 %v553
    %v555 = vperm.slane %v547, %v554
    %v556 = vrot.slane %v539, 4
    %v557 = vsel %vm196, %v556, %v515
    %v558 = vrot.slane %v515, 4
    %v559 = vsel %vm196, %v539, %v558
    %v560 = vrot.slane %v543, 4
    %v561 = vsel %vm196, %v560, %v519
    %v562 = vrot.slane %v519, 4
    %v563 = vsel %vm196, %v543, %v562
    %v564 = vrot.slane %v551, 4
    %v565 = vsel %vm196, %v564, %v527
    %v566 = vrot.slane %v527, 4
    %v567 = vsel %vm196, %v551, %v566
    %v568 = vrot.slane %v555, 4
    %v569 = vsel %vm196, %v568, %v531
    %v570 = vrot.slane %v531, 4
    %v571 = vsel %vm196, %v555, %v570
    %v572 = vrot.slane %v427, 4
    %v573 = vsel %vm196, %v572, %v173
    %v574 = vrot.slane %v173, 4
    %v575 = vsel %vm196, %v427, %v574
    %v577 = vunpack.c.l.s4 1983009808
    %v578 = vunpack.c.0.s8 %v577
    %v579 = vperm.slane %v573, %v578
    %v581 = vunpack.c.l.s4 1983009808
    %v582 = vunpack.c.0.s8 %v581
    %v583 = vperm.slane %v575, %v582
    %v584 = vrot.slane %v433, 4
    %v585 = vsel %vm196, %v584, %v421
    %v586 = vrot.slane %v421, 4
    %v587 = vsel %vm196, %v433, %v586
    %v589 = vunpack.c.l.s4 1983009808
    %v590 = vunpack.c.0.s8 %v589
    %v591 = vperm.slane %v585, %v590
    %v593 = vunpack.c.l.s4 1983009808
    %v594 = vunpack.c.0.s8 %v593
    %v595 = vperm.slane %v587, %v594
    %v596 = vrot.slane %v451, 4
    %v597 = vsel %vm196, %v596, %v439
    %v598 = vrot.slane %v439, 4
    %v599 = vsel %vm196, %v451, %v598
    %v601 = vunpack.c.l.s4 1983009808
    %v602 = vunpack.c.0.s8 %v601
    %v603 = vperm.slane %v597, %v602
    %v605 = vunpack.c.l.s4 1983009808
    %v606 = vunpack.c.0.s8 %v605
    %v607 = vperm.slane %v599, %v606
    %v608 = vrot.slane %v457, 4
    %v609 = vsel %vm196, %v608, %v445
    %v610 = vrot.slane %v445, 4
    %v611 = vsel %vm196, %v457, %v610
    %v613 = vunpack.c.l.s4 1983009808
    %v614 = vunpack.c.0.s8 %v613
    %v615 = vperm.slane %v609, %v614
    %v617 = vunpack.c.l.s4 1983009808
    %v618 = vunpack.c.0.s8 %v617
    %v619 = vperm.slane %v611, %v618
    %v620 = vrot.slane %v591, 4
    %v621 = vsel %vm196, %v620, %v579
    %v622 = vrot.slane %v579, 4
    %v623 = vsel %vm196, %v591, %v622
    %v625 = vunpack.c.l.s4 1934713408
    %v626 = vunpack.c.0.s8 %v625
    %v627 = vperm.slane %v621, %v626
    %v629 = vunpack.c.l.s4 1934713408
    %v630 = vunpack.c.0.s8 %v629
    %v631 = vperm.slane %v623, %v630
    %v632 = vrot.slane %v595, 4
    %v633 = vsel %vm196, %v632, %v583
    %v634 = vrot.slane %v583, 4
    %v635 = vsel %vm196, %v595, %v634
    %v637 = vunpack.c.l.s4 1934713408
    %v638 = vunpack.c.0.s8 %v637
    %v639 = vperm.slane %v633, %v638
    %v641 = vunpack.c.l.s4 1934713408
    %v642 = vunpack.c.0.s8 %v641
    %v643 = vperm.slane %v635, %v642
    %v644 = vrot.slane %v615, 4
    %v645 = vsel %vm196, %v644, %v603
    %v646 = vrot.slane %v603, 4
    %v647 = vsel %vm196, %v615, %v646
    %v649 = vunpack.c.l.s4 1934713408
    %v650 = vunpack.c.0.s8 %v649
    %v651 = vperm.slane %v645, %v650
    %v653 = vunpack.c.l.s4 1934713408
    %v654 = vunpack.c.0.s8 %v653
    %v655 = vperm.slane %v647, %v654
    %v656 = vrot.slane %v619, 4
    %v657 = vsel %vm196, %v656, %v607
    %v658 = vrot.slane %v607, 4
    %v659 = vsel %vm196, %v619, %v658
    %v661 = vunpack.c.l.s4 1934713408
    %v662 = vunpack.c.0.s8 %v661
    %v663 = vperm.slane %v657, %v662
    %v665 = vunpack.c.l.s4 1934713408
    %v666 = vunpack.c.0.s8 %v665
    %v667 = vperm.slane %v659, %v666
    %v668 = vrot.slane %v651, 4
    %v669 = vsel %vm196, %v668, %v627
    %v670 = vrot.slane %v627, 4
    %v671 = vsel %vm196, %v651, %v670
    %v672 = vrot.slane %v655, 4
    %v673 = vsel %vm196, %v672, %v631
    %v674 = vrot.slane %v631, 4
    %v675 = vsel %vm196, %v655, %v674
    %v676 = vrot.slane %v663, 4
    %v677 = vsel %vm196, %v676, %v639
    %v678 = vrot.slane %v639, 4
    %v679 = vsel %vm196, %v663, %v678
    %v680 = vrot.slane %v667, 4
    %v681 = vsel %vm196, %v680, %v643
    %v682 = vrot.slane %v643, 4
    %v683 = vsel %vm196, %v667, %v682
    %v684 = vrot.slane %v561, 4
    %v685 = vsel %vm196, %v684, %v557
    %v686 = vrot.slane %v557, 4
    %v687 = vsel %vm196, %v561, %v686
    %v689 = vunpack.c.l.s4 1983009808
    %v690 = vunpack.c.0.s8 %v689
    %v691 = vperm.slane %v685, %v690
    %v693 = vunpack.c.l.s4 1983009808
    %v694 = vunpack.c.0.s8 %v693
    %v695 = vperm.slane %v687, %v694
    %v696 = vrot.slane %v563, 4
    %v697 = vsel %vm196, %v696, %v559
    %v698 = vrot.slane %v559, 4
    %v699 = vsel %vm196, %v563, %v698
    %v701 = vunpack.c.l.s4 1983009808
    %v702 = vunpack.c.0.s8 %v701
    %v703 = vperm.slane %v697, %v702
    %v705 = vunpack.c.l.s4 1983009808
    %v706 = vunpack.c.0.s8 %v705
    %v707 = vperm.slane %v699, %v706
    %v708 = vrot.slane %v569, 4
    %v709 = vsel %vm196, %v708, %v565
    %v710 = vrot.slane %v565, 4
    %v711 = vsel %vm196, %v569, %v710
    %v713 = vunpack.c.l.s4 1983009808
    %v714 = vunpack.c.0.s8 %v713
    %v715 = vperm.slane %v709, %v714
    %v717 = vunpack.c.l.s4 1983009808
    %v718 = vunpack.c.0.s8 %v717
    %v719 = vperm.slane %v711, %v718
    %v720 = vrot.slane %v571, 4
    %v721 = vsel %vm196, %v720, %v567
    %v722 = vrot.slane %v567, 4
    %v723 = vsel %vm196, %v571, %v722
    %v725 = vunpack.c.l.s4 1983009808
    %v726 = vunpack.c.0.s8 %v725
    %v727 = vperm.slane %v721, %v726
    %v729 = vunpack.c.l.s4 1983009808
    %v730 = vunpack.c.0.s8 %v729
    %v731 = vperm.slane %v723, %v730
    %v732 = vrot.slane %v703, 4
    %v733 = vsel %vm196, %v732, %v691
    %v734 = vrot.slane %v691, 4
    %v735 = vsel %vm196, %v703, %v734
    %v737 = vunpack.c.l.s4 1934713408
    %v738 = vunpack.c.0.s8 %v737
    %v739 = vperm.slane %v733, %v738
    %v741 = vunpack.c.l.s4 1934713408
    %v742 = vunpack.c.0.s8 %v741
    %v743 = vperm.slane %v735, %v742
    %v744 = vrot.slane %v707, 4
    %v745 = vsel %vm196, %v744, %v695
    %v746 = vrot.slane %v695, 4
    %v747 = vsel %vm196, %v707, %v746
    %v749 = vunpack.c.l.s4 1934713408
    %v750 = vunpack.c.0.s8 %v749
    %v751 = vperm.slane %v745, %v750
    %v753 = vunpack.c.l.s4 1934713408
    %v754 = vunpack.c.0.s8 %v753
    %v755 = vperm.slane %v747, %v754
    %v756 = vrot.slane %v727, 4
    %v757 = vsel %vm196, %v756, %v715
    %v758 = vrot.slane %v715, 4
    %v759 = vsel %vm196, %v727, %v758
    %v761 = vunpack.c.l.s4 1934713408
    %v762 = vunpack.c.0.s8 %v761
    %v763 = vperm.slane %v757, %v762
    %v765 = vunpack.c.l.s4 1934713408
    %v766 = vunpack.c.0.s8 %v765
    %v767 = vperm.slane %v759, %v766
    %v768 = vrot.slane %v731, 4
    %v769 = vsel %vm196, %v768, %v719
    %v770 = vrot.slane %v719, 4
    %v771 = vsel %vm196, %v731, %v770
    %v773 = vunpack.c.l.s4 1934713408
    %v774 = vunpack.c.0.s8 %v773
    %v775 = vperm.slane %v769, %v774
    %v777 = vunpack.c.l.s4 1934713408
    %v778 = vunpack.c.0.s8 %v777
    %v779 = vperm.slane %v771, %v778
    %v780 = vrot.slane %v763, 4
    %v781 = vsel %vm196, %v780, %v739
    %v782 = vrot.slane %v739, 4
    %v783 = vsel %vm196, %v763, %v782
    %v784 = vrot.slane %v767, 4
    %v785 = vsel %vm196, %v784, %v743
    %v786 = vrot.slane %v743, 4
    %v787 = vsel %vm196, %v767, %v786
    %v788 = vrot.slane %v775, 4
    %v789 = vsel %vm196, %v788, %v751
    %v790 = vrot.slane %v751, 4
    %v791 = vsel %vm196, %v775, %v790
    %v792 = vrot.slane %v779, 4
    %v793 = vsel %vm196, %v792, %v755
    %v794 = vrot.slane %v755, 4
    %v795 = vsel %vm196, %v779, %v794
    %v796 = vrot.slane %v673, 4
    %v797 = vsel %vm196, %v796, %v669
    %v798 = vrot.slane %v669, 4
    %v799 = vsel %vm196, %v673, %v798
    %v801 = vunpack.c.l.s4 1983009808
    %v802 = vunpack.c.0.s8 %v801
    %v803 = vperm.slane %v797, %v802
    %v805 = vunpack.c.l.s4 1983009808
    %v806 = vunpack.c.0.s8 %v805
    %v807 = vperm.slane %v799, %v806
    %v808 = vrot.slane %v675, 4
    %v809 = vsel %vm196, %v808, %v671
    %v810 = vrot.slane %v671, 4
    %v811 = vsel %vm196, %v675, %v810
    %v813 = vunpack.c.l.s4 1983009808
    %v814 = vunpack.c.0.s8 %v813
    %v815 = vperm.slane %v809, %v814
    %v817 = vunpack.c.l.s4 1983009808
    %v818 = vunpack.c.0.s8 %v817
    %v819 = vperm.slane %v811, %v818
    %v820 = vrot.slane %v681, 4
    %v821 = vsel %vm196, %v820, %v677
    %v822 = vrot.slane %v677, 4
    %v823 = vsel %vm196, %v681, %v822
    %v825 = vunpack.c.l.s4 1983009808
    %v826 = vunpack.c.0.s8 %v825
    %v827 = vperm.slane %v821, %v826
    %v829 = vunpack.c.l.s4 1983009808
    %v830 = vunpack.c.0.s8 %v829
    %v831 = vperm.slane %v823, %v830
    %v832 = vrot.slane %v683, 4
    %v833 = vsel %vm196, %v832, %v679
    %v834 = vrot.slane %v679, 4
    %v835 = vsel %vm196, %v683, %v834
    %v837 = vunpack.c.l.s4 1983009808
    %v838 = vunpack.c.0.s8 %v837
    %v839 = vperm.slane %v833, %v838
    %v841 = vunpack.c.l.s4 1983009808
    %v842 = vunpack.c.0.s8 %v841
    %v843 = vperm.slane %v835, %v842
    %v844 = vrot.slane %v815, 4
    %v845 = vsel %vm196, %v844, %v803
    %v846 = vrot.slane %v803, 4
    %v847 = vsel %vm196, %v815, %v846
    %v849 = vunpack.c.l.s4 1934713408
    %v850 = vunpack.c.0.s8 %v849
    %v851 = vperm.slane %v845, %v850
    %v853 = vunpack.c.l.s4 1934713408
    %v854 = vunpack.c.0.s8 %v853
    %v855 = vperm.slane %v847, %v854
    %v856 = vrot.slane %v819, 4
    %v857 = vsel %vm196, %v856, %v807
    %v858 = vrot.slane %v807, 4
    %v859 = vsel %vm196, %v819, %v858
    %v861 = vunpack.c.l.s4 1934713408
    %v862 = vunpack.c.0.s8 %v861
    %v863 = vperm.slane %v857, %v862
    %v865 = vunpack.c.l.s4 1934713408
    %v866 = vunpack.c.0.s8 %v865
    %v867 = vperm.slane %v859, %v866
    %v868 = vrot.slane %v839, 4
    %v869 = vsel %vm196, %v868, %v827
    %v870 = vrot.slane %v827, 4
    %v871 = vsel %vm196, %v839, %v870
    %v873 = vunpack.c.l.s4 1934713408
    %v874 = vunpack.c.0.s8 %v873
    %v875 = vperm.slane %v869, %v874
    %v877 = vunpack.c.l.s4 1934713408
    %v878 = vunpack.c.0.s8 %v877
    %v879 = vperm.slane %v871, %v878
    %v880 = vrot.slane %v843, 4
    %v881 = vsel %vm196, %v880, %v831
    %v882 = vrot.slane %v831, 4
    %v883 = vsel %vm196, %v843, %v882
    %v885 = vunpack.c.l.s4 1934713408
    %v886 = vunpack.c.0.s8 %v885
    %v887 = vperm.slane %v881, %v886
    %v889 = vunpack.c.l.s4 1934713408
    %v890 = vunpack.c.0.s8 %v889
    %v891 = vperm.slane %v883, %v890
    %v892 = vrot.slane %v875, 4
    %v893 = vsel %vm196, %v892, %v851
    %v894 = vrot.slane %v851, 4
    %v895 = vsel %vm196, %v875, %v894
    %v896 = vrot.slane %v879, 4
    %v897 = vsel %vm196, %v896, %v855
    %v898 = vrot.slane %v855, 4
    %v899 = vsel %vm196, %v879, %v898
    %v900 = vrot.slane %v887, 4
    %v901 = vsel %vm196, %v900, %v863
    %v902 = vrot.slane %v863, 4
    %v903 = vsel %vm196, %v887, %v902
    %v904 = vrot.slane %v891, 4
    %v905 = vsel %vm196, %v904, %v867
    %v906 = vrot.slane %v867, 4
    %v907 = vsel %vm196, %v891, %v906
    %vm908 = vcmask 64512
    %v910 = vsel %vm908, %v355, 0
    %v913 = vsel %vm908, %v781, 0
    %915 = vmatpush.xpose.msra.mxu0 0.0
    %916 = vmatpush.xpose.msra.mxu0 0.0
    %917 = vmatpush.xpose.msra.mxu0 0.0
    %918 = vmatpush.xpose.msra.mxu0 0.0
    %919 = vmatpush.xpose.msra.mxu0 0.0
    %920 = vmatpush.xpose.msra.mxu0 0.0
    %921 = vmatpush.xpose.msra.mxu0 0.0
    %922 = vmatpush.xpose.msra.mxu0 0.0
    %923 = vmatpush.xpose.msra.mxu0 0.0
    %924 = vmatpush.xpose.msra.mxu0 0.0
    %925 = vmatpush.xpose.msra.mxu0 0.0
    %926 = vmatpush.xpose.msra.mxu0 0.0
    %927 = vmatpush.xpose.msra.mxu0 0.0
    %928 = vmatpush.xpose.msra.mxu0 0.0
    %929 = vmatpush.xpose.msra.mxu0 0.0
    %930 = vmatpush.xpose.msra.mxu0 %v913
    %931 = vmatmul.f32.gmra.mxu0 %v910
    %v932 = vpop.f32.mrf.mxu0
    %v933 = vadd.f32 0.0, %v932
    %934 = vdwg.mxu0
    %v936 = vsel %vm908, %v409, 0
    %v939 = vsel %vm908, %v893, 0
    %941 = vmatpush.xpose.msra.mxu0 0.0
    %942 = vmatpush.xpose.msra.mxu0 0.0
    %943 = vmatpush.xpose.msra.mxu0 0.0
    %944 = vmatpush.xpose.msra.mxu0 0.0
    %945 = vmatpush.xpose.msra.mxu0 0.0
    %946 = vmatpush.xpose.msra.mxu0 0.0
    %947 = vmatpush.xpose.msra.mxu0 0.0
    %948 = vmatpush.xpose.msra.mxu0 0.0
    %949 = vmatpush.xpose.msra.mxu0 0.0
    %950 = vmatpush.xpose.msra.mxu0 0.0
    %951 = vmatpush.xpose.msra.mxu0 0.0
    %952 = vmatpush.xpose.msra.mxu0 0.0
    %953 = vmatpush.xpose.msra.mxu0 0.0
    %954 = vmatpush.xpose.msra.mxu0 0.0
    %955 = vmatpush.xpose.msra.mxu0 0.0
    %956 = vmatpush.xpose.msra.mxu0 %v939
    %957 = vmatmul.f32.gmra.mxu0 %v936
    %v958 = vpop.f32.mrf.mxu0
    %v959 = vadd.f32 0.0, %v958
    %960 = vdwg.mxu0
    %v962 = vsel %vm908, %v357, 0
    %v965 = vsel %vm908, %v783, 0
    %967 = vmatpush.xpose.msra.mxu0 0.0
    %968 = vmatpush.xpose.msra.mxu0 0.0
    %969 = vmatpush.xpose.msra.mxu0 0.0
    %970 = vmatpush.xpose.msra.mxu0 0.0
    %971 = vmatpush.xpose.msra.mxu0 0.0
    %972 = vmatpush.xpose.msra.mxu0 0.0
    %973 = vmatpush.xpose.msra.mxu0 0.0
    %974 = vmatpush.xpose.msra.mxu0 0.0
    %975 = vmatpush.xpose.msra.mxu0 0.0
    %976 = vmatpush.xpose.msra.mxu0 0.0
    %977 = vmatpush.xpose.msra.mxu0 0.0
    %978 = vmatpush.xpose.msra.mxu0 0.0
    %979 = vmatpush.xpose.msra.mxu0 0.0
    %980 = vmatpush.xpose.msra.mxu0 0.0
    %981 = vmatpush.xpose.msra.mxu0 0.0
    %982 = vmatpush.xpose.msra.mxu0 %v965
    %983 = vmatmul.f32.gmra.mxu0 %v962
    %v984 = vpop.f32.mrf.mxu0
    %v985 = vadd.f32 0.0, %v984
    %986 = vdwg.mxu0
    %v988 = vsel %vm908, %v411, 0
    %v991 = vsel %vm908, %v895, 0
    %993 = vmatpush.xpose.msra.mxu0 0.0
    %994 = vmatpush.xpose.msra.mxu0 0.0
    %995 = vmatpush.xpose.msra.mxu0 0.0
    %996 = vmatpush.xpose.msra.mxu0 0.0
    %997 = vmatpush.xpose.msra.mxu0 0.0
    %998 = vmatpush.xpose.msra.mxu0 0.0
    %999 = vmatpush.xpose.msra.mxu0 0.0
    %1000 = vmatpush.xpose.msra.mxu0 0.0
    %1001 = vmatpush.xpose.msra.mxu0 0.0
    %1002 = vmatpush.xpose.msra.mxu0 0.0
    %1003 = vmatpush.xpose.msra.mxu0 0.0
    %1004 = vmatpush.xpose.msra.mxu0 0.0
    %1005 = vmatpush.xpose.msra.mxu0 0.0
    %1006 = vmatpush.xpose.msra.mxu0 0.0
    %1007 = vmatpush.xpose.msra.mxu0 0.0
    %1008 = vmatpush.xpose.msra.mxu0 %v991
    %1009 = vmatmul.f32.gmra.mxu0 %v988
    %v1010 = vpop.f32.mrf.mxu0
    %v1011 = vadd.f32 0.0, %v1010
    %1012 = vdwg.mxu0
    %v1014 = vsel %vm908, %v359, 0
    %v1017 = vsel %vm908, %v785, 0
    %1019 = vmatpush.xpose.msra.mxu0 0.0
    %1020 = vmatpush.xpose.msra.mxu0 0.0
    %1021 = vmatpush.xpose.msra.mxu0 0.0
    %1022 = vmatpush.xpose.msra.mxu0 0.0
    %1023 = vmatpush.xpose.msra.mxu0 0.0
    %1024 = vmatpush.xpose.msra.mxu0 0.0
    %1025 = vmatpush.xpose.msra.mxu0 0.0
    %1026 = vmatpush.xpose.msra.mxu0 0.0
    %1027 = vmatpush.xpose.msra.mxu0 0.0
    %1028 = vmatpush.xpose.msra.mxu0 0.0
    %1029 = vmatpush.xpose.msra.mxu0 0.0
    %1030 = vmatpush.xpose.msra.mxu0 0.0
    %1031 = vmatpush.xpose.msra.mxu0 0.0
    %1032 = vmatpush.xpose.msra.mxu0 0.0
    %1033 = vmatpush.xpose.msra.mxu0 0.0
    %1034 = vmatpush.xpose.msra.mxu0 %v1017
    %1035 = vmatmul.f32.gmra.mxu0 %v1014
    %v1036 = vpop.f32.mrf.mxu0
    %v1037 = vadd.f32 0.0, %v1036
    %1038 = vdwg.mxu0
    %v1040 = vsel %vm908, %v413, 0
    %v1043 = vsel %vm908, %v897, 0
    %1045 = vmatpush.xpose.msra.mxu0 0.0
    %1046 = vmatpush.xpose.msra.mxu0 0.0
    %1047 = vmatpush.xpose.msra.mxu0 0.0
    %1048 = vmatpush.xpose.msra.mxu0 0.0
    %1049 = vmatpush.xpose.msra.mxu0 0.0
    %1050 = vmatpush.xpose.msra.mxu0 0.0
    %1051 = vmatpush.xpose.msra.mxu0 0.0
    %1052 = vmatpush.xpose.msra.mxu0 0.0
    %1053 = vmatpush.xpose.msra.mxu0 0.0
    %1054 = vmatpush.xpose.msra.mxu0 0.0
    %1055 = vmatpush.xpose.msra.mxu0 0.0
    %1056 = vmatpush.xpose.msra.mxu0 0.0
    %1057 = vmatpush.xpose.msra.mxu0 0.0
    %1058 = vmatpush.xpose.msra.mxu0 0.0
    %1059 = vmatpush.xpose.msra.mxu0 0.0
    %1060 = vmatpush.xpose.msra.mxu0 %v1043
    %1061 = vmatmul.f32.gmra.mxu0 %v1040
    %v1062 = vpop.f32.mrf.mxu0
    %v1063 = vadd.f32 0.0, %v1062
    %1064 = vdwg.mxu0
    %v1066 = vsel %vm908, %v361, 0
    %v1069 = vsel %vm908, %v787, 0
    %1071 = vmatpush.xpose.msra.mxu0 0.0
    %1072 = vmatpush.xpose.msra.mxu0 0.0
    %1073 = vmatpush.xpose.msra.mxu0 0.0
    %1074 = vmatpush.xpose.msra.mxu0 0.0
    %1075 = vmatpush.xpose.msra.mxu0 0.0
    %1076 = vmatpush.xpose.msra.mxu0 0.0
    %1077 = vmatpush.xpose.msra.mxu0 0.0
    %1078 = vmatpush.xpose.msra.mxu0 0.0
    %1079 = vmatpush.xpose.msra.mxu0 0.0
    %1080 = vmatpush.xpose.msra.mxu0 0.0
    %1081 = vmatpush.xpose.msra.mxu0 0.0
    %1082 = vmatpush.xpose.msra.mxu0 0.0
    %1083 = vmatpush.xpose.msra.mxu0 0.0
    %1084 = vmatpush.xpose.msra.mxu0 0.0
    %1085 = vmatpush.xpose.msra.mxu0 0.0
    %1086 = vmatpush.xpose.msra.mxu0 %v1069
    %1087 = vmatmul.f32.gmra.mxu0 %v1066
    %v1088 = vpop.f32.mrf.mxu0
    %v1089 = vadd.f32 0.0, %v1088
    %1090 = vdwg.mxu0
    %v1092 = vsel %vm908, %v415, 0
    %v1095 = vsel %vm908, %v899, 0
    %1097 = vmatpush.xpose.msra.mxu0 0.0
    %1098 = vmatpush.xpose.msra.mxu0 0.0
    %1099 = vmatpush.xpose.msra.mxu0 0.0
    %1100 = vmatpush.xpose.msra.mxu0 0.0
    %1101 = vmatpush.xpose.msra.mxu0 0.0
    %1102 = vmatpush.xpose.msra.mxu0 0.0
    %1103 = vmatpush.xpose.msra.mxu0 0.0
    %1104 = vmatpush.xpose.msra.mxu0 0.0
    %1105 = vmatpush.xpose.msra.mxu0 0.0
    %1106 = vmatpush.xpose.msra.mxu0 0.0
    %1107 = vmatpush.xpose.msra.mxu0 0.0
    %1108 = vmatpush.xpose.msra.mxu0 0.0
    %1109 = vmatpush.xpose.msra.mxu0 0.0
    %1110 = vmatpush.xpose.msra.mxu0 0.0
    %1111 = vmatpush.xpose.msra.mxu0 0.0
    %1112 = vmatpush.xpose.msra.mxu0 %v1095
    %1113 = vmatmul.f32.gmra.mxu0 %v1092
    %v1114 = vpop.f32.mrf.mxu0
    %v1115 = vadd.f32 0.0, %v1114
    %1116 = vdwg.mxu0
    %v1117 = vsel %vm908, %v933, -inf
    %1118 = vmax.xlane.f32.xlu0 %v1117
    %v1119 = vpop.xlane.xlu0 %1118
    %v1120 = vsel %vm908, %v959, -inf
    %1121 = vmax.xlane.f32.xlu0 %v1120
    %v1122 = vpop.xlane.xlu0 %1121
    %v1123 = vsel %vm908, %v985, -inf
    %1124 = vmax.xlane.f32.xlu0 %v1123
    %v1125 = vpop.xlane.xlu0 %1124
    %v1126 = vsel %vm908, %v1011, -inf
    %1127 = vmax.xlane.f32.xlu0 %v1126
    %v1128 = vpop.xlane.xlu0 %1127
    %v1129 = vsel %vm908, %v1037, -inf
    %1130 = vmax.xlane.f32.xlu0 %v1129
    %v1131 = vpop.xlane.xlu0 %1130
    %v1132 = vsel %vm908, %v1063, -inf
    %1133 = vmax.xlane.f32.xlu0 %v1132
    %v1134 = vpop.xlane.xlu0 %1133
    %v1135 = vsel %vm908, %v1089, -inf
    %1136 = vmax.xlane.f32.xlu0 %v1135
    %v1137 = vpop.xlane.xlu0 %1136
    %v1138 = vsel %vm908, %v1115, -inf
    %1139 = vmax.xlane.f32.xlu0 %v1138
    %v1140 = vpop.xlane.xlu0 %1139
    %v1141 = vsub.f32 %v933, %v1119
    %v1142 = vsub.f32 %v959, %v1122
    %v1143 = vsub.f32 %v985, %v1125
    %v1144 = vsub.f32 %v1011, %v1128
    %v1145 = vsub.f32 %v1037, %v1131
    %v1146 = vsub.f32 %v1063, %v1134
    %v1147 = vsub.f32 %v1089, %v1137
    %v1148 = vsub.f32 %v1115, %v1140
    %v1149 = vmul.f32 %v1141, 1.442695
    %v1150 = vpow.pop %v1149
    %v1151 = vmul.f32 %v1142, 1.442695
    %v1152 = vpow.pop %v1151
    %v1153 = vmul.f32 %v1143, 1.442695
    %v1154 = vpow.pop %v1153
    %v1155 = vmul.f32 %v1144, 1.442695
    %v1156 = vpow.pop %v1155
    %v1157 = vmul.f32 %v1145, 1.442695
    %v1158 = vpow.pop %v1157
    %v1159 = vmul.f32 %v1146, 1.442695
    %v1160 = vpow.pop %v1159
    %v1161 = vmul.f32 %v1147, 1.442695
    %v1162 = vpow.pop %v1161
    %v1163 = vmul.f32 %v1148, 1.442695
    %v1164 = vpow.pop %v1163
    %v1165 = vsel %vm908, %v1150, 0.0
    %1166 = vadd.xlane.f32.xlu0 %v1165
    %v1167 = vpop.xlane.xlu0 %1166
    %v1168 = vsel %vm908, %v1152, 0.0
    %1169 = vadd.xlane.f32.xlu0 %v1168
    %v1170 = vpop.xlane.xlu0 %1169
    %v1171 = vsel %vm908, %v1154, 0.0
    %1172 = vadd.xlane.f32.xlu0 %v1171
    %v1173 = vpop.xlane.xlu0 %1172
    %v1174 = vsel %vm908, %v1156, 0.0
    %1175 = vadd.xlane.f32.xlu0 %v1174
    %v1176 = vpop.xlane.xlu0 %1175
    %v1177 = vsel %vm908, %v1158, 0.0
    %1178 = vadd.xlane.f32.xlu0 %v1177
    %v1179 = vpop.xlane.xlu0 %1178
    %v1180 = vsel %vm908, %v1160, 0.0
    %1181 = vadd.xlane.f32.xlu0 %v1180
    %v1182 = vpop.xlane.xlu0 %1181
    %v1183 = vsel %vm908, %v1162, 0.0
    %1184 = vadd.xlane.f32.xlu0 %v1183
    %v1185 = vpop.xlane.xlu0 %1184
    %v1186 = vsel %vm908, %v1164, 0.0
    %1187 = vadd.xlane.f32.xlu0 %v1186
    %v1188 = vpop.xlane.xlu0 %1187
    %v1190 = vsel %vm908, %v1150, 0
    %1192 = vmatpush.msra.mxu0 0.0
    %1193 = vmatpush.msra.mxu0 0.0
    %1194 = vmatpush.msra.mxu0 0.0
    %1195 = vmatpush.msra.mxu0 0.0
    %1196 = vmatpush.msra.mxu0 0.0
    %1197 = vmatpush.msra.mxu0 0.0
    %1198 = vmatpush.msra.mxu0 0.0
    %1199 = vmatpush.msra.mxu0 0.0
    %1200 = vmatpush.msra.mxu0 0.0
    %1201 = vmatpush.msra.mxu0 0.0
    %1202 = vmatpush.msra.mxu0 0.0
    %1203 = vmatpush.msra.mxu0 0.0
    %1204 = vmatpush.msra.mxu0 0.0
    %1205 = vmatpush.msra.mxu0 0.0
    %1206 = vmatpush.msra.mxu0 0.0
    %1207 = vmatpush.msra.mxu0 %v789
    %1208 = vmatmul.f32.gmra.mxu0 %v1190
    %v1209 = vpop.f32.mrf.mxu0
    %v1210 = vadd.f32 0.0, %v1209
    %1211 = vdwg.mxu0
    %v1213 = vsel %vm908, %v1152, 0
    %1215 = vmatpush.msra.mxu0 0.0
    %1216 = vmatpush.msra.mxu0 0.0
    %1217 = vmatpush.msra.mxu0 0.0
    %1218 = vmatpush.msra.mxu0 0.0
    %1219 = vmatpush.msra.mxu0 0.0
    %1220 = vmatpush.msra.mxu0 0.0
    %1221 = vmatpush.msra.mxu0 0.0
    %1222 = vmatpush.msra.mxu0 0.0
    %1223 = vmatpush.msra.mxu0 0.0
    %1224 = vmatpush.msra.mxu0 0.0
    %1225 = vmatpush.msra.mxu0 0.0
    %1226 = vmatpush.msra.mxu0 0.0
    %1227 = vmatpush.msra.mxu0 0.0
    %1228 = vmatpush.msra.mxu0 0.0
    %1229 = vmatpush.msra.mxu0 0.0
    %1230 = vmatpush.msra.mxu0 %v901
    %1231 = vmatmul.f32.gmra.mxu0 %v1213
    %v1232 = vpop.f32.mrf.mxu0
    %v1233 = vadd.f32 0.0, %v1232
    %1234 = vdwg.mxu0
    %v1236 = vsel %vm908, %v1154, 0
    %1238 = vmatpush.msra.mxu0 0.0
    %1239 = vmatpush.msra.mxu0 0.0
    %1240 = vmatpush.msra.mxu0 0.0
    %1241 = vmatpush.msra.mxu0 0.0
    %1242 = vmatpush.msra.mxu0 0.0
    %1243 = vmatpush.msra.mxu0 0.0
    %1244 = vmatpush.msra.mxu0 0.0
    %1245 = vmatpush.msra.mxu0 0.0
    %1246 = vmatpush.msra.mxu0 0.0
    %1247 = vmatpush.msra.mxu0 0.0
    %1248 = vmatpush.msra.mxu0 0.0
    %1249 = vmatpush.msra.mxu0 0.0
    %1250 = vmatpush.msra.mxu0 0.0
    %1251 = vmatpush.msra.mxu0 0.0
    %1252 = vmatpush.msra.mxu0 0.0
    %1253 = vmatpush.msra.mxu0 %v791
    %1254 = vmatmul.f32.gmra.mxu0 %v1236
    %v1255 = vpop.f32.mrf.mxu0
    %v1256 = vadd.f32 0.0, %v1255
    %1257 = vdwg.mxu0
    %v1259 = vsel %vm908, %v1156, 0
    %1261 = vmatpush.msra.mxu0 0.0
    %1262 = vmatpush.msra.mxu0 0.0
    %1263 = vmatpush.msra.mxu0 0.0
    %1264 = vmatpush.msra.mxu0 0.0
    %1265 = vmatpush.msra.mxu0 0.0
    %1266 = vmatpush.msra.mxu0 0.0
    %1267 = vmatpush.msra.mxu0 0.0
    %1268 = vmatpush.msra.mxu0 0.0
    %1269 = vmatpush.msra.mxu0 0.0
    %1270 = vmatpush.msra.mxu0 0.0
    %1271 = vmatpush.msra.mxu0 0.0
    %1272 = vmatpush.msra.mxu0 0.0
    %1273 = vmatpush.msra.mxu0 0.0
    %1274 = vmatpush.msra.mxu0 0.0
    %1275 = vmatpush.msra.mxu0 0.0
    %1276 = vmatpush.msra.mxu0 %v903
    %1277 = vmatmul.f32.gmra.mxu0 %v1259
    %v1278 = vpop.f32.mrf.mxu0
    %v1279 = vadd.f32 0.0, %v1278
    %1280 = vdwg.mxu0
    %v1282 = vsel %vm908, %v1158, 0
    %1284 = vmatpush.msra.mxu0 0.0
    %1285 = vmatpush.msra.mxu0 0.0
    %1286 = vmatpush.msra.mxu0 0.0
    %1287 = vmatpush.msra.mxu0 0.0
    %1288 = vmatpush.msra.mxu0 0.0
    %1289 = vmatpush.msra.mxu0 0.0
    %1290 = vmatpush.msra.mxu0 0.0
    %1291 = vmatpush.msra.mxu0 0.0
    %1292 = vmatpush.msra.mxu0 0.0
    %1293 = vmatpush.msra.mxu0 0.0
    %1294 = vmatpush.msra.mxu0 0.0
    %1295 = vmatpush.msra.mxu0 0.0
    %1296 = vmatpush.msra.mxu0 0.0
    %1297 = vmatpush.msra.mxu0 0.0
    %1298 = vmatpush.msra.mxu0 0.0
    %1299 = vmatpush.msra.mxu0 %v793
    %1300 = vmatmul.f32.gmra.mxu0 %v1282
    %v1301 = vpop.f32.mrf.mxu0
    %v1302 = vadd.f32 0.0, %v1301
    %1303 = vdwg.mxu0
    %v1305 = vsel %vm908, %v1160, 0
    %1307 = vmatpush.msra.mxu0 0.0
    %1308 = vmatpush.msra.mxu0 0.0
    %1309 = vmatpush.msra.mxu0 0.0
    %1310 = vmatpush.msra.mxu0 0.0
    %1311 = vmatpush.msra.mxu0 0.0
    %1312 = vmatpush.msra.mxu0 0.0
    %1313 = vmatpush.msra.mxu0 0.0
    %1314 = vmatpush.msra.mxu0 0.0
    %1315 = vmatpush.msra.mxu0 0.0
    %1316 = vmatpush.msra.mxu0 0.0
    %1317 = vmatpush.msra.mxu0 0.0
    %1318 = vmatpush.msra.mxu0 0.0
    %1319 = vmatpush.msra.mxu0 0.0
    %1320 = vmatpush.msra.mxu0 0.0
    %1321 = vmatpush.msra.mxu0 0.0
    %1322 = vmatpush.msra.mxu0 %v905
    %1323 = vmatmul.f32.gmra.mxu0 %v1305
    %v1324 = vpop.f32.mrf.mxu0
    %v1325 = vadd.f32 0.0, %v1324
    %1326 = vdwg.mxu0
    %v1328 = vsel %vm908, %v1162, 0
    %1330 = vmatpush.msra.mxu0 0.0
    %1331 = vmatpush.msra.mxu0 0.0
    %1332 = vmatpush.msra.mxu0 0.0
    %1333 = vmatpush.msra.mxu0 0.0
    %1334 = vmatpush.msra.mxu0 0.0
    %1335 = vmatpush.msra.mxu0 0.0
    %1336 = vmatpush.msra.mxu0 0.0
    %1337 = vmatpush.msra.mxu0 0.0
    %1338 = vmatpush.msra.mxu0 0.0
    %1339 = vmatpush.msra.mxu0 0.0
    %1340 = vmatpush.msra.mxu0 0.0
    %1341 = vmatpush.msra.mxu0 0.0
    %1342 = vmatpush.msra.mxu0 0.0
    %1343 = vmatpush.msra.mxu0 0.0
    %1344 = vmatpush.msra.mxu0 0.0
    %1345 = vmatpush.msra.mxu0 %v795
    %1346 = vmatmul.f32.gmra.mxu0 %v1328
    %v1347 = vpop.f32.mrf.mxu0
    %v1348 = vadd.f32 0.0, %v1347
    %1349 = vdwg.mxu0
    %v1351 = vsel %vm908, %v1164, 0
    %1353 = vmatpush.msra.mxu0 0.0
    %1354 = vmatpush.msra.mxu0 0.0
    %1355 = vmatpush.msra.mxu0 0.0
    %1356 = vmatpush.msra.mxu0 0.0
    %1357 = vmatpush.msra.mxu0 0.0
    %1358 = vmatpush.msra.mxu0 0.0
    %1359 = vmatpush.msra.mxu0 0.0
    %1360 = vmatpush.msra.mxu0 0.0
    %1361 = vmatpush.msra.mxu0 0.0
    %1362 = vmatpush.msra.mxu0 0.0
    %1363 = vmatpush.msra.mxu0 0.0
    %1364 = vmatpush.msra.mxu0 0.0
    %1365 = vmatpush.msra.mxu0 0.0
    %1366 = vmatpush.msra.mxu0 0.0
    %1367 = vmatpush.msra.mxu0 0.0
    %1368 = vmatpush.msra.mxu0 %v907
    %1369 = vmatmul.f32.gmra.mxu0 %v1351
    %v1370 = vpop.f32.mrf.mxu0
    %v1371 = vadd.f32 0.0, %v1370
    %1372 = vdwg.mxu0
    %v1373 = vrcp.pop %v1167
    %v1374 = vrcp.pop %v1170
    %v1375 = vrcp.pop %v1173
    %v1376 = vrcp.pop %v1176
    %v1377 = vrcp.pop %v1179
    %v1378 = vrcp.pop %v1182
    %v1379 = vrcp.pop %v1185
    %v1380 = vrcp.pop %v1188
    %v1381 = vmul.f32 %v1210, %v1373
    %v1382 = vmul.f32 %v1233, %v1374
    %v1383 = vmul.f32 %v1256, %v1375
    %v1384 = vmul.f32 %v1279, %v1376
    %v1385 = vmul.f32 %v1302, %v1377
    %v1386 = vmul.f32 %v1325, %v1378
    %v1387 = vmul.f32 %v1348, %v1379
    %v1388 = vmul.f32 %v1371, %v1380
    %v1389 = vrot.slane %v1385, 4
    %v1390 = vsel %vm196, %v1389, %v1381
    %v1391 = vrot.slane %v1381, 4
    %v1392 = vsel %vm196, %v1385, %v1391
    %v1394 = vunpack.c.l.s4 1983009808
    %v1395 = vunpack.c.0.s8 %v1394
    %v1396 = vperm.slane %v1390, %v1395
    %v1398 = vunpack.c.l.s4 1983009808
    %v1399 = vunpack.c.0.s8 %v1398
    %v1400 = vperm.slane %v1392, %v1399
    %v1401 = vrot.slane %v1387, 4
    %v1402 = vsel %vm196, %v1401, %v1383
    %v1403 = vrot.slane %v1383, 4
    %v1404 = vsel %vm196, %v1387, %v1403
    %v1406 = vunpack.c.l.s4 1983009808
    %v1407 = vunpack.c.0.s8 %v1406
    %v1408 = vperm.slane %v1402, %v1407
    %v1410 = vunpack.c.l.s4 1983009808
    %v1411 = vunpack.c.0.s8 %v1410
    %v1412 = vperm.slane %v1404, %v1411
    %v1413 = vrot.slane %v1408, 4
    %v1414 = vsel %vm196, %v1413, %v1396
    %v1415 = vrot.slane %v1396, 4
    %v1416 = vsel %vm196, %v1408, %v1415
    %v1418 = vunpack.c.l.s4 1934713408
    %v1419 = vunpack.c.0.s8 %v1418
    %v1420 = vperm.slane %v1414, %v1419
    %v1422 = vunpack.c.l.s4 1934713408
    %v1423 = vunpack.c.0.s8 %v1422
    %v1424 = vperm.slane %v1416, %v1423
    %v1425 = vrot.slane %v1412, 4
    %v1426 = vsel %vm196, %v1425, %v1400
    %v1427 = vrot.slane %v1400, 4
    %v1428 = vsel %vm196, %v1412, %v1427
    %v1430 = vunpack.c.l.s4 1934713408
    %v1431 = vunpack.c.0.s8 %v1430
    %v1432 = vperm.slane %v1426, %v1431
    %v1434 = vunpack.c.l.s4 1934713408
    %v1435 = vunpack.c.0.s8 %v1434
    %v1436 = vperm.slane %v1428, %v1435
    %v1437 = vrot.slane %v1420, 4
    %v1438 = vsel %vm196, 0.0, %v1437
    %v1439 = vrot.slane %v1424, 4
    %v1440 = vsel %vm196, 0.0, %v1439
    %v1441 = vrot.slane %v1432, 4
    %v1442 = vsel %vm196, 0.0, %v1441
    %v1443 = vrot.slane %v1436, 4
    %v1444 = vsel %vm196, 0.0, %v1443
    %v1445 = vrot.slane %v1386, 4
    %v1446 = vsel %vm196, %v1445, %v1382
    %v1447 = vrot.slane %v1382, 4
    %v1448 = vsel %vm196, %v1386, %v1447
    %v1450 = vunpack.c.l.s4 1983009808
    %v1451 = vunpack.c.0.s8 %v1450
    %v1452 = vperm.slane %v1446, %v1451
    %v1454 = vunpack.c.l.s4 1983009808
    %v1455 = vunpack.c.0.s8 %v1454
    %v1456 = vperm.slane %v1448, %v1455
    %v1457 = vrot.slane %v1388, 4
    %v1458 = vsel %vm196, %v1457, %v1384
    %v1459 = vrot.slane %v1384, 4
    %v1460 = vsel %vm196, %v1388, %v1459
    %v1462 = vunpack.c.l.s4 1983009808
    %v1463 = vunpack.c.0.s8 %v1462
    %v1464 = vperm.slane %v1458, %v1463
    %v1466 = vunpack.c.l.s4 1983009808
    %v1467 = vunpack.c.0.s8 %v1466
    %v1468 = vperm.slane %v1460, %v1467
    %v1469 = vrot.slane %v1464, 4
    %v1470 = vsel %vm196, %v1469, %v1452
    %v1471 = vrot.slane %v1452, 4
    %v1472 = vsel %vm196, %v1464, %v1471
    %v1474 = vunpack.c.l.s4 1934713408
    %v1475 = vunpack.c.0.s8 %v1474
    %v1476 = vperm.slane %v1470, %v1475
    %v1478 = vunpack.c.l.s4 1934713408
    %v1479 = vunpack.c.0.s8 %v1478
    %v1480 = vperm.slane %v1472, %v1479
    %v1481 = vrot.slane %v1468, 4
    %v1482 = vsel %vm196, %v1481, %v1456
    %v1483 = vrot.slane %v1456, 4
    %v1484 = vsel %vm196, %v1468, %v1483
    %v1486 = vunpack.c.l.s4 1934713408
    %v1487 = vunpack.c.0.s8 %v1486
    %v1488 = vperm.slane %v1482, %v1487
    %v1490 = vunpack.c.l.s4 1934713408
    %v1491 = vunpack.c.0.s8 %v1490
    %v1492 = vperm.slane %v1484, %v1491
    %v1493 = vrot.slane %v1476, 4
    %v1494 = vsel %vm196, 0.0, %v1493
    %v1495 = vrot.slane %v1480, 4
    %v1496 = vsel %vm196, 0.0, %v1495
    %v1497 = vrot.slane %v1488, 4
    %v1498 = vsel %vm196, 0.0, %v1497
    %v1499 = vrot.slane %v1492, 4
    %v1500 = vsel %vm196, 0.0, %v1499
    %v1501 = vsel %vm196, %v1439, %v1420
    %v1503 = vunpack.c.l.s4 1983009808
    %v1504 = vunpack.c.0.s8 %v1503
    %v1505 = vperm.slane %v1501, %v1504
    %v1506 = vrot.slane %v1440, 4
    %v1507 = vsel %vm196, %v1506, %v1438
    %v1509 = vunpack.c.l.s4 1983009808
    %v1510 = vunpack.c.0.s8 %v1509
    %v1511 = vperm.slane %v1507, %v1510
    %v1512 = vsel %vm196, %v1443, %v1432
    %v1514 = vunpack.c.l.s4 1983009808
    %v1515 = vunpack.c.0.s8 %v1514
    %v1516 = vperm.slane %v1512, %v1515
    %v1517 = vrot.slane %v1444, 4
    %v1518 = vsel %vm196, %v1517, %v1442
    %v1520 = vunpack.c.l.s4 1983009808
    %v1521 = vunpack.c.0.s8 %v1520
    %v1522 = vperm.slane %v1518, %v1521
    %v1523 = vrot.slane %v1511, 4
    %v1524 = vsel %vm196, %v1523, %v1505
    %v1525 = vrot.slane %v1505, 4
    %v1526 = vsel %vm196, %v1511, %v1525
    %v1528 = vunpack.c.l.s4 1934713408
    %v1529 = vunpack.c.0.s8 %v1528
    %v1530 = vperm.slane %v1524, %v1529
    %v1532 = vunpack.c.l.s4 1934713408
    %v1533 = vunpack.c.0.s8 %v1532
    %v1534 = vperm.slane %v1526, %v1533
    %v1535 = vrot.slane %v1522, 4
    %v1536 = vsel %vm196, %v1535, %v1516
    %v1537 = vrot.slane %v1516, 4
    %v1538 = vsel %vm196, %v1522, %v1537
    %v1540 = vunpack.c.l.s4 1934713408
    %v1541 = vunpack.c.0.s8 %v1540
    %v1542 = vperm.slane %v1536, %v1541
    %v1544 = vunpack.c.l.s4 1934713408
    %v1545 = vunpack.c.0.s8 %v1544
    %v1546 = vperm.slane %v1538, %v1545
    %v1547 = vrot.slane %v1542, 4
    %v1548 = vsel %vm196, %v1547, %v1530
    %v1549 = vrot.slane %v1530, 4
    %v1550 = vsel %vm196, %v1542, %v1549
    %v1551 = vrot.slane %v1546, 4
    %v1552 = vsel %vm196, %v1551, %v1534
    %v1553 = vrot.slane %v1534, 4
    %v1554 = vsel %vm196, %v1546, %v1553
    %v1555 = vsel %vm196, %v1495, %v1476
    %v1557 = vunpack.c.l.s4 1983009808
    %v1558 = vunpack.c.0.s8 %v1557
    %v1559 = vperm.slane %v1555, %v1558
    %v1560 = vrot.slane %v1496, 4
    %v1561 = vsel %vm196, %v1560, %v1494
    %v1563 = vunpack.c.l.s4 1983009808
    %v1564 = vunpack.c.0.s8 %v1563
    %v1565 = vperm.slane %v1561, %v1564
    %v1566 = vsel %vm196, %v1499, %v1488
    %v1568 = vunpack.c.l.s4 1983009808
    %v1569 = vunpack.c.0.s8 %v1568
    %v1570 = vperm.slane %v1566, %v1569
    %v1571 = vrot.slane %v1500, 4
    %v1572 = vsel %vm196, %v1571, %v1498
    %v1574 = vunpack.c.l.s4 1983009808
    %v1575 = vunpack.c.0.s8 %v1574
    %v1576 = vperm.slane %v1572, %v1575
    %v1577 = vrot.slane %v1565, 4
    %v1578 = vsel %vm196, %v1577, %v1559
    %v1579 = vrot.slane %v1559, 4
    %v1580 = vsel %vm196, %v1565, %v1579
    %v1582 = vunpack.c.l.s4 1934713408
    %v1583 = vunpack.c.0.s8 %v1582
    %v1584 = vperm.slane %v1578, %v1583
    %v1586 = vunpack.c.l.s4 1934713408
    %v1587 = vunpack.c.0.s8 %v1586
    %v1588 = vperm.slane %v1580, %v1587
    %v1589 = vrot.slane %v1576, 4
    %v1590 = vsel %vm196, %v1589, %v1570
    %v1591 = vrot.slane %v1570, 4
    %v1592 = vsel %vm196, %v1576, %v1591
    %v1594 = vunpack.c.l.s4 1934713408
    %v1595 = vunpack.c.0.s8 %v1594
    %v1596 = vperm.slane %v1590, %v1595
    %v1598 = vunpack.c.l.s4 1934713408
    %v1599 = vunpack.c.0.s8 %v1598
    %v1600 = vperm.slane %v1592, %v1599
    %v1601 = vrot.slane %v1596, 4
    %v1602 = vsel %vm196, %v1601, %v1584
    %v1603 = vrot.slane %v1584, 4
    %v1604 = vsel %vm196, %v1596, %v1603
    %v1605 = vrot.slane %v1600, 4
    %v1606 = vsel %vm196, %v1605, %v1588
    %v1607 = vrot.slane %v1588, 4
    %v1608 = vsel %vm196, %v1600, %v1607
    %1611 = vrot.lane.b32.xlu0 %v1550, 8
    %v1612 = vpop.permute.xlu0 %1611
    %1613 = vrot.lane.b32.xlu0 %v1604, 8
    %v1614 = vpop.permute.xlu0 %1613
    %1619 = vrot.lane.b32.xlu0 %v1552, 16
    %v1620 = vpop.permute.xlu0 %1619
    %1621 = vrot.lane.b32.xlu0 %v1606, 16
    %v1622 = vpop.permute.xlu0 %1621
    %1627 = vrot.lane.b32.xlu0 %v1554, 24
    %v1628 = vpop.permute.xlu0 %1627
    %1629 = vrot.lane.b32.xlu0 %v1608, 24
    %v1630 = vpop.permute.xlu0 %1629
    %v1633 = vsel %vm908, %v1548, %v1612
    %v1634 = vsel %vm908, %v1602, %v1614
    %vm1635 = vcmask 130048
    %v1636 = vsel %vm1635, %v1633, %v1620
    %v1637 = vsel %vm1635, %v1634, %v1622
    %vm1638 = vcmask 195584
    %v1639 = vsel %vm1638, %v1636, %v1628
    %v1640 = vsel %vm1638, %v1637, %v1630
    %v1641 = vld [vmem:[#allocation10] sm:$0xff]
    %v1642 = vld [vmem:[#allocation10 + $0x8] sm:$0xff]
    %v1643 = vld [vmem:[#allocation10 + $0x10] sm:$0xff]
    %v1644 = vld [vmem:[#allocation10 + $0x18] sm:$0xff]
    %v1645 = vld [vmem:[%s5] sm:$0x1]
    %v1647 = vperm.slane %v1645, 0
    %v1650 = vsel %vm110, %v1639, 0
    %v1653 = vsel %vm110, %v1640, 0
    %1655 = vmatpush.msra.mxu0 0.0
    %1656 = vmatpush.msra.mxu0 0.0
    %1657 = vmatpush.msra.mxu0 0.0
    %1658 = vmatpush.msra.mxu0 0.0
    %1659 = vmatpush.msra.mxu0 0.0
    %1660 = vmatpush.msra.mxu0 0.0
    %1661 = vmatpush.msra.mxu0 0.0
    %1662 = vmatpush.msra.mxu0 0.0
    %1663 = vmatpush.msra.mxu0 0.0
    %1664 = vmatpush.msra.mxu0 0.0
    %1665 = vmatpush.msra.mxu0 0.0
    %1666 = vmatpush.msra.mxu0 0.0
    %1667 = vmatpush.msra.mxu0 %v1644
    %1668 = vmatpush.msra.mxu0 %v1643
    %1669 = vmatpush.msra.mxu0 %v1642
    %1670 = vmatpush.msra.mxu0 %v1641
    %1671 = vmatmul.f32.gmra.mxu0 %v1650
    %v1672 = vpop.f32.mrf.mxu0
    %v1673 = vadd.f32 %v1647, %v1672
    %1674 = vmatmul.f32.gmra.mxu0 %v1653
    %v1675 = vpop.f32.mrf.mxu0
    %v1676 = vadd.f32 %v1647, %v1675
    %1677 = vdwg.mxu0
    %1678 = vst.msk [vmem:[#allocation11] sm:$0xff] %vm110, %v1673
    %1679 = vst.msk [vmem:[#allocation11 + $0x8] sm:$0xff] %vm110, %v1676
    // Predicated region
    $region46: #{tpu_custom_call.1} parent=1 // pred_check
      _
    $region47: #{tpu_custom_call.1} parent=1 // pred_check_branch
      %1681 = sbr.rel (0) target = $region49
    $region48: #{tpu_custom_call.1} parent=1 // pred_region
      %1683 = vsyncadd [#allocation4], 0
      %s1684 = sshll.u32 [#allocation11], 4
      %s1685 = int_to_ptr.vmem [resolvable:$true] %s1684
      %s1686 = sshll.u32 %s6, 4
      %s1687 = int_to_ptr.hbm [resolvable:$true] %s1686
      %1692 = dma.vmem_to_hbm [thread:$0]  %s1685, 256, %s1687, [#allocation4], 128, 128, 8
    $region49: #{tpu_custom_call.1} parent=1 // pred_fallthru
      _
    // Predicated region
    $region50: #{tpu_custom_call.1} parent=1 // pred_check
      _
    $region51: #{tpu_custom_call.1} parent=1 // pred_check_branch
      %1694 = sbr.rel (0) target = $region53
    $region52: #{tpu_custom_call.1} parent=1 // pred_region
      %1696 = dma.done [#allocation4], 256
    $region53: #{tpu_custom_call.1} parent=1 // pred_fallthru
      _
    %1697 = vsyncpa [#allocation3], 1
    %1698 = vsyncpa [#allocation6], 1
    %1699 = vsyncpa [#allocation9], 1
    %1700 = vsyncpa [#allocation4], 1

</llo_original>
